<compile_context>
chip_gen: v7x
topology: tpu7x:2x2x1
jax: 0.10.0
libtpu: 0.0.40
codegen_flags: <defaults>
</compile_context>

<pallas_src>
import math
import numpy as np

import jax
import jax.numpy as jnp
from jax import lax
from jax.experimental import pallas as pl
from jax.experimental.pallas import tpu as pltpu


def _round_up(x, m):
    return (x + m - 1) // m * m


def _resident_vmem_bytes(Tc, Bb, Hp):
    """Rough per-core VMEM residency for one (batch-tile, time-chunk) step."""
    gi_chunks = 2 * 2 * (Tc * Bb * 3 * Hp) * 2      # fwd+bwd bf16 gi, double-buffered
    out_chunks = 2 * 2 * (Tc * Bb * Hp) * 4         # fwd+bwd f32 out, double-buffered
    weights = 2 * (Hp * 6 * Hp) * 2 + 2 * (6 * Hp) * 4
    state = (2 * Bb * Hp) * 4 + 2 * (Bb * 2 * Hp) * 4 + 4 * Bb
    return gi_chunks + out_chunks + weights + state


def _pick_time_chunk(T, Bb, Hp, budget_bytes):
    Tc = max(1, min(T, 128))
    while Tc > 16 and _resident_vmem_bytes(Tc, Bb, Hp) > budget_bytes:
        Tc = max(16, Tc // 2)
    return Tc


def bigru_chunk_kernel(len_ref, gi_f_ref, gi_b_ref, whh_ref, bhh_ref,
                       out_f_ref, out_b_ref, fin_ref, h_scr):
    """One (batch-tile, time-chunk) grid step of the bidirectional GRU recurrence.

    len_ref  : [Bb, 1]  int32   per-row sequence lengths (padded rows = 0)
    gi_f_ref : [Tc, Bb, 3Hp] bf16  input projection, fwd gates, chunk tc (forward order)
    gi_b_ref : [Tc, Bb, 3Hp] bf16  input projection, bwd gates, chunk NC-1-tc
    whh_ref  : [Hp, 6Hp] bf16   recurrent weights, cols [f_r,f_z,f_n,b_r,b_z,b_n]
    bhh_ref  : [1, 6Hp]  f32
    out_f_ref: [Tc, Bb, Hp] f32 forward outputs (chunk tc)
    out_b_ref: [Tc, Bb, Hp] f32 backward outputs (chunk NC-1-tc)
    fin_ref  : [Bb, 2Hp] f32    final hidden (cols 0:Hp fwd, Hp:2Hp bwd)
    h_scr    : VMEM [2*Bb, Hp] f32  hidden state carried across time chunks
                                    (rows 0:Bb fwd, Bb:2Bb bwd)
    """
    tc = pl.program_id(1)
    nc = pl.num_programs(1)
    Tc, Bb, H3 = gi_f_ref.shape
    Hp = H3 // 3

    # PyTorch default h0 = 0; re-zero at the start of each batch tile's time sweep.
    @pl.when(tc == 0)
    def _():
        h_scr[...] = jnp.zeros_like(h_scr)

    # loop-invariant loads hoisted out of the time loop.
    whh = whh_ref[...]            # [Hp, 6Hp] bf16
    bhh = bhh_ref[...]            # [1, 6Hp]  f32
    lens = len_ref[...]           # [Bb, 1]   int32

    t0_f = tc * Tc                # global start time of this fwd chunk
    t0_b = (nc - 1 - tc) * Tc     # global start time of this bwd chunk

    def cell(gi3, gh3, h_prev, t):
        # PyTorch GRU cell, f32 gate math (slices are 128-lane aligned, Hp % 128 == 0):
        #   r = sig(gi_r + gh_r); z = sig(gi_z + gh_z); n = tanh(gi_n + r*gh_n)
        #   h' = n + z*(h_prev - n)          (== (1-z)*n + z*h_prev)
        # packed-sequence mask folded into z: rows past their length keep h_prev.
        gi3 = gi3.astype(jnp.float32)
        r = jax.nn.sigmoid(gi3[:, 0:Hp] + gh3[:, 0:Hp])
        z = jax.nn.sigmoid(gi3[:, Hp:2 * Hp] + gh3[:, Hp:2 * Hp])
        n = jnp.tanh(gi3[:, 2 * Hp:H3] + r * gh3[:, 2 * Hp:H3])
        valid = lens > t                       # [Bb, 1]
        z_eff = jnp.where(valid, z, 1.0)
        h_new = n + z_eff * (h_prev - n)
        out = jnp.where(valid, h_new, 0.0)     # padded output positions -> 0 (off-path)
        return h_new, out

    def step(s, h):
        tf = t0_f + s                          # forward global time
        tb = t0_b + (Tc - 1 - s)               # backward global time
        # single MXU issue per step: directions stacked on sublanes, k = Hp.
        gh = jnp.dot(h.astype(jnp.bfloat16), whh,
                     preferred_element_type=jnp.float32) + bhh   # [2Bb, 6Hp] f32
        h_f, o_f = cell(gi_f_ref[s], gh[0:Bb, 0:H3], h[0:Bb], tf)
        h_b, o_b = cell(gi_b_ref[Tc - 1 - s], gh[Bb:, H3:], h[Bb:], tb)
        out_f_ref[s] = o_f.astype(out_f_ref.dtype)
        out_b_ref[Tc - 1 - s] = o_b.astype(out_b_ref.dtype)
        return jnp.concatenate([h_f, h_b], axis=0)

    h = h_scr[...]
    if Tc <= 16:                               # small chunks: full unroll
        for s in range(Tc):
            h = step(s, h)
    else:                                      # long chunks: bounded unroll
        h = lax.fori_loop(0, Tc, step, h, unroll=8)
    h_scr[...] = h

    @pl.when(tc == nc - 1)
    def _():
        fin_ref[...] = jnp.concatenate([h[0:Bb], h[Bb:]], axis=1).astype(fin_ref.dtype)


def _pad_gates(w, H, Hp):
    """[..., 3H] -> [..., 3Hp]: each gate block zero-padded to Hp lanes."""
    return jnp.concatenate(
        [jnp.pad(w[:, g * H:(g + 1) * H], ((0, 0), (0, Hp - H))) for g in range(3)],
        axis=1)


def encoder_forward(x, lengths, params):
    """Pallas bidirectional-GRU encoder.  x: [B, T, D] f32, lengths: [B] int32.
    Assumes max(lengths) == T (pad_packed_sequence would otherwise shorten T)."""
    B, T, D = x.shape
    H = params["whh_f"].shape[0]
    f32, bf16 = jnp.float32, jnp.bfloat16

    Bb = 8                                   # batch tile (sublane aligned)
    Bp = _round_up(max(B, Bb), Bb)
    NB = Bp // Bb                            # "parallel" grid axis (2nd TC on v7x)
    Hp = _round_up(H, 128)                   # lane-tile aligned hidden
    H3 = 3 * Hp

    budget = 48 * 1024 * 1024                # fits v7x's 64 MiB VMEM with headroom
    Tc = _pick_time_chunk(T, Bb, Hp, budget)
    Tp = _round_up(T, Tc)
    NC = Tp // Tc
    vmem_limit = int(min(56 * 2**20, max(32 * 2**20,
                                         2 * _resident_vmem_bytes(Tc, Bb, Hp))))

    # ---- hoisted input projection: plain XLA bf16 MXU matmul (to HBM, streamed). ----
    wih = jnp.concatenate([_pad_gates(params["wih_f"], H, Hp),
                           _pad_gates(params["wih_b"], H, Hp)], axis=1).astype(bf16)
    bih = jnp.concatenate([_pad_gates(params["bih_f"], H, Hp),
                           _pad_gates(params["bih_b"], H, Hp)], axis=1).astype(f32)

    x_tm = jnp.transpose(x, (1, 0, 2))                              # [T, B, D]
    x_tm = jnp.pad(x_tm, ((0, Tp - T), (0, Bp - B), (0, 0))).astype(bf16)
    gi = jnp.dot(x_tm.reshape(Tp * Bp, D), wih,
                 preferred_element_type=f32) + bih                  # [Tp*Bp, 6Hp] f32
    gi = gi.reshape(Tp, Bp, 6 * Hp).astype(bf16)                    # streamed as bf16

    # ---- recurrent weights: fwd/bwd side by side on the lane axis (k = Hp). ----
    whh = jnp.concatenate(
        [jnp.pad(_pad_gates(params["whh_f"], H, Hp), ((0, Hp - H), (0, 0))),
         jnp.pad(_pad_gates(params["whh_b"], H, Hp), ((0, Hp - H), (0, 0)))],
        axis=1).astype(bf16)                                        # [Hp, 6Hp]
    bhh = jnp.concatenate([_pad_gates(params["bhh_f"], H, Hp),
                           _pad_gates(params["bhh_b"], H, Hp)], axis=1).astype(f32)

    len_vec = jnp.pad(lengths.astype(jnp.int32), (0, Bp - B)).reshape(Bp, 1)

    out_f, out_b, fin = pl.pallas_call(
        bigru_chunk_kernel,
        out_shape=(jax.ShapeDtypeStruct((Tp, Bp, Hp), f32),
                   jax.ShapeDtypeStruct((Tp, Bp, Hp), f32),
                   jax.ShapeDtypeStruct((Bp, 2 * Hp), f32)),
        grid=(NB, NC),
        in_specs=[
            pl.BlockSpec((Bb, 1), lambda b, tc: (b, 0)),                      # lengths
            pl.BlockSpec((Tc, Bb, H3), lambda b, tc: (tc, b, 0)),             # gi fwd cols
            pl.BlockSpec((Tc, Bb, H3), lambda b, tc: (NC - 1 - tc, b, 1)),    # gi bwd cols (reversed time)
            pl.BlockSpec((Hp, 6 * Hp), lambda b, tc: (0, 0)),                 # whh (untiled)
            pl.BlockSpec((1, 6 * Hp), lambda b, tc: (0, 0)),                  # bhh (untiled)
        ],
        out_specs=(
            pl.BlockSpec((Tc, Bb, Hp), lambda b, tc: (tc, b, 0)),             # fwd outputs
            pl.BlockSpec((Tc, Bb, Hp), lambda b, tc: (NC - 1 - tc, b, 0)),    # bwd outputs
            pl.BlockSpec((Bb, 2 * Hp), lambda b, tc: (b, 0)),                 # final hidden
        ),
        scratch_shapes=[pltpu.VMEM((2 * Bb, Hp), jnp.float32)],               # h carry
        compiler_params=pltpu.CompilerParams(
            dimension_semantics=("parallel", "arbitrary"),
            vmem_limit_bytes=vmem_limit),
    )(len_vec, gi, gi, whh, bhh)

    # ---- unpack: strip time/batch/lane padding, restore batch-first layout. ----
    out = jnp.concatenate([out_f[:T, :B, :H], out_b[:T, :B, :H]], axis=-1)   # [T, B, 2H]
    output = jnp.transpose(out, (1, 0, 2)).astype(x.dtype)                   # [B, T, 2H]
    final = jnp.concatenate([fin[:B, :H], fin[:B, Hp:Hp + H]],
                            axis=-1)[None].astype(x.dtype)                   # [1, B, 2H]
    return output, final


def encoder_reference(x, lengths, params):
    """Pure-JAX f32 reference matching packed bidirectional GRU semantics."""
    B, T, D = x.shape
    H = params["whh_f"].shape[0]
    mask = (jnp.arange(T)[None, :] < lengths[:, None]).astype(x.dtype)

    def cell(x_t, h, wih, whh, bih, bhh):
        gi = x_t @ wih + bih
        gh = h @ whh + bhh
        r = jax.nn.sigmoid(gi[:, :H] + gh[:, :H])
        z = jax.nn.sigmoid(gi[:, H:2 * H] + gh[:, H:2 * H])
        n = jnp.tanh(gi[:, 2 * H:] + r * gh[:, 2 * H:])
        return (1.0 - z) * n + z * h

    def scan_dir(wih, whh, bih, bhh, reverse):
        def step(h, inp):
            x_t, m_t = inp
            h_new = cell(x_t, h, wih, whh, bih, bhh)
            h = m_t[:, None] * h_new + (1.0 - m_t[:, None]) * h
            return h, m_t[:, None] * h
        xs = (jnp.swapaxes(x, 0, 1), jnp.swapaxes(mask, 0, 1))
        h0 = jnp.zeros((B, H), x.dtype)
        h_fin, outs = lax.scan(step, h0, xs, reverse=reverse)
        return jnp.swapaxes(outs, 0, 1), h_fin

    out_f, fin_f = scan_dir(params["wih_f"], params["whh_f"],
                            params["bih_f"][0], params["bhh_f"][0], False)
    out_b, fin_b = scan_dir(params["wih_b"], params["whh_b"],
                            params["bih_b"][0], params["bhh_b"][0], True)
    output = jnp.concatenate([out_f, out_b], axis=-1)
    final = jnp.concatenate([fin_f, fin_b], axis=-1)[None]
    return output, final


def init_params(key, input_size, hidden_size):
    """Deterministic GRU params (uniform +-1/sqrt(H), like PyTorch).
    Weights stored pre-transposed: wih [D, 3H], whh [H, 3H]; biases [1, 3H]."""
    D, H = input_size, hidden_size
    k = 1.0 / math.sqrt(H)
    keys = jax.random.split(key, 8)
    u = lambda kk, shape: jax.random.uniform(kk, shape, jnp.float32, -k, k)
    return {
        "wih_f": u(keys[0], (D, 3 * H)), "whh_f": u(keys[1], (H, 3 * H)),
        "bih_f": u(keys[2], (1, 3 * H)), "bhh_f": u(keys[3], (1, 3 * H)),
        "wih_b": u(keys[4], (D, 3 * H)), "whh_b": u(keys[5], (H, 3 * H)),
        "bih_b": u(keys[6], (1, 3 * H)), "bhh_b": u(keys[7], (1, 3 * H)),
    }


if __name__ == "__main__":
    B, T, D, H = 2, 8, 16, 32
    key = jax.random.PRNGKey(0)
    kx, kp = jax.random.split(key)

    x = jax.random.normal(kx, (B, T, D), jnp.float32)
    # lengths sorted descending (pack_padded_sequence requirement); max == T
    lengths = jnp.array([8, 5], dtype=jnp.int32)
    params = init_params(kp, D, H)

    fwd = jax.jit(encoder_forward)
    output, final = fwd(x, lengths, params)
    jax.block_until_ready((output, final))

    ref_output, ref_final = encoder_reference(x, lengths, params)
    # bf16 MXU data path (f32 accumulation / gate math) -> relaxed tolerance.
    np.testing.assert_allclose(np.asarray(output), np.asarray(ref_output),
                               rtol=3e-2, atol=3e-2)
    np.testing.assert_allclose(np.asarray(final), np.asarray(ref_final),
                               rtol=3e-2, atol=3e-2)

    assert output.shape == (B, T, 2 * H)
    assert final.shape == (1, B, 2 * H)
    print("KERNEL_OK")
</pallas_src>

<mosaic_0001>
module attributes {stable_mosaic.version = 11 : i64} {
  func.func @bigru_chunk_kernel(%arg0: i32, %arg1: i32, %arg2: memref<8x1xi32, #tpu.memory_space<vmem>>, %arg3: memref<8x8x384xbf16, #tpu.memory_space<vmem>>, %arg4: memref<8x8x384xbf16, #tpu.memory_space<vmem>>, %arg5: memref<128x768xbf16, #tpu.memory_space<vmem>>, %arg6: memref<1x768xf32, #tpu.memory_space<vmem>>, %arg7: memref<8x8x128xf32, #tpu.memory_space<vmem>>, %arg8: memref<8x8x128xf32, #tpu.memory_space<vmem>>, %arg9: memref<8x256xf32, #tpu.memory_space<vmem>>, %arg10: memref<16x128xf32, #tpu.memory_space<vmem>>) attributes {dimension_semantics = [#tpu.dimension_semantics<parallel>, #tpu.dimension_semantics<arbitrary>], iteration_bounds = array<i64: 1, 1>, scalar_prefetch = 0 : i64, scratch_operands = 1 : i64, tpu.core_type = #tpu.core_type<tc>, window_params = [{transform_indices = @transform_0, window_bounds = array<i64: 8, 1>}, {transform_indices = @transform_1, window_bounds = array<i64: 8, 8, 384>}, {transform_indices = @transform_2, window_bounds = array<i64: 8, 8, 384>}, {pipeline_mode = #tpu.pipeline_mode<synchronous>, transform_indices = @transform_3, window_bounds = array<i64: 128, 768>}, {pipeline_mode = #tpu.pipeline_mode<synchronous>, transform_indices = @transform_4, window_bounds = array<i64: 1, 768>}, {transform_indices = @transform_5, window_bounds = array<i64: 8, 8, 128>}, {transform_indices = @transform_6, window_bounds = array<i64: 8, 8, 128>}, {transform_indices = @transform_7, window_bounds = array<i64: 8, 256>}]} {
    %c0_i32 = arith.constant 0 : i32
    %0 = arith.cmpi eq, %arg1, %c0_i32 : i32
    %1 = arith.extui %0 : i1 to i32
    %c0_i32_0 = arith.constant 0 : i32
    %2 = arith.cmpi ne, %1, %c0_i32_0 : i32
    scf.if %2 {
      %cst_183 = arith.constant 0.000000e+00 : f32
      %742 = vector.broadcast %cst_183 : f32 to vector<16x128xf32>
      %c0_184 = arith.constant 0 : index
      %c0_185 = arith.constant 0 : index
      %743 = vector.load %arg10[%c0_184, %c0_185] : memref<16x128xf32, #tpu.memory_space<vmem>>, vector<16x128xf32>
      tpu.vector_store %arg10[%c0_184, %c0_185], %742 {strides = array<i32>} : memref<16x128xf32, #tpu.memory_space<vmem>>, vector<16x128xf32>,
    } else {
    }
    %c0 = arith.constant 0 : index
    %c0_1 = arith.constant 0 : index
    %3 = vector.load %arg5[%c0, %c0_1] : memref<128x768xbf16, #tpu.memory_space<vmem>>, vector<128x768xbf16>
    %c0_2 = arith.constant 0 : index
    %c0_3 = arith.constant 0 : index
    %4 = vector.load %arg6[%c0_2, %c0_3] : memref<1x768xf32, #tpu.memory_space<vmem>>, vector<1x768xf32>
    %c0_4 = arith.constant 0 : index
    %c0_5 = arith.constant 0 : index
    %5 = vector.load %arg2[%c0_4, %c0_5] : memref<8x1xi32, #tpu.memory_space<vmem>>, vector<8x1xi32>
    %c8_i32 = arith.constant 8 : i32
    %6 = arith.muli %arg1, %c8_i32 : i32
    %c0_i32_6 = arith.constant 0 : i32
    %7 = arith.subi %c0_i32_6, %arg1 : i32
    %c8_i32_7 = arith.constant 8 : i32
    %8 = arith.muli %7, %c8_i32_7 : i32
    %c0_8 = arith.constant 0 : index
    %c0_9 = arith.constant 0 : index
    %9 = vector.load %arg10[%c0_8, %c0_9] : memref<16x128xf32, #tpu.memory_space<vmem>>, vector<16x128xf32>
    %c0_i32_10 = arith.constant 0 : i32
    %10 = arith.addi %6, %c0_i32_10 : i32
    %c7_i32 = arith.constant 7 : i32
    %11 = arith.addi %8, %c7_i32 : i32
    %12 = arith.truncf %9 : vector<16x128xf32> to vector<16x128xbf16>
    %cst = arith.constant dense<0.000000e+00> : vector<16x768xf32>
    %13 = tpu.matmul %12, %3, %cst {dimension_numbers = #tpu.dot_dimension_numbers<[1], [0], [0], [1], [0, 0, 1, 1], [], []>} : vector<16x128xbf16>, vector<128x768xbf16>, vector<16x768xf32> -> vector<16x768xf32>
    %14 = vector.broadcast %4 : vector<1x768xf32> to vector<16x768xf32>
    %15 = arith.addf %13, %14 : vector<16x768xf32>
    %c0_11 = arith.constant 0 : index
    %c0_12 = arith.constant 0 : index
    %c0_13 = arith.constant 0 : index
    %16 = vector.load %arg3[%c0_11, %c0_12, %c0_13] : memref<8x8x384xbf16, #tpu.memory_space<vmem>>, vector<1x8x384xbf16>
    %17 = vector.shape_cast %16 : vector<1x8x384xbf16> to vector<8x384xbf16>
    %18 = vector.extract_strided_slice %15 {offsets = [0, 0], sizes = [8, 384], strides = [1, 1]} : vector<16x768xf32> to vector<8x384xf32>
    %19 = vector.extract_strided_slice %9 {offsets = [0, 0], sizes = [8, 128], strides = [1, 1]} : vector<16x128xf32> to vector<8x128xf32>
    %20 = arith.extf %17 : vector<8x384xbf16> to vector<8x384xf32>
    %21 = vector.extract_strided_slice %20 {offsets = [0, 0], sizes = [8, 128], strides = [1, 1]} : vector<8x384xf32> to vector<8x128xf32>
    %22 = vector.extract_strided_slice %18 {offsets = [0, 0], sizes = [8, 128], strides = [1, 1]} : vector<8x384xf32> to vector<8x128xf32>
    %23 = arith.addf %21, %22 : vector<8x128xf32>
    %24 = arith.negf %23 : vector<8x128xf32>
    %25 = math.exp %24 : vector<8x128xf32>
    %cst_14 = arith.constant 1.000000e+00 : f32
    %26 = vector.broadcast %cst_14 : f32 to vector<8x128xf32>
    %27 = arith.addf %26, %25 : vector<8x128xf32>
    %28 = arith.divf %26, %27 : vector<8x128xf32>
    %29 = vector.extract_strided_slice %20 {offsets = [0, 128], sizes = [8, 128], strides = [1, 1]} : vector<8x384xf32> to vector<8x128xf32>
    %30 = vector.extract_strided_slice %18 {offsets = [0, 128], sizes = [8, 128], strides = [1, 1]} : vector<8x384xf32> to vector<8x128xf32>
    %31 = arith.addf %29, %30 : vector<8x128xf32>
    %32 = arith.negf %31 : vector<8x128xf32>
    %33 = math.exp %32 : vector<8x128xf32>
    %cst_15 = arith.constant 1.000000e+00 : f32
    %34 = vector.broadcast %cst_15 : f32 to vector<8x128xf32>
    %35 = arith.addf %34, %33 : vector<8x128xf32>
    %36 = arith.divf %34, %35 : vector<8x128xf32>
    %37 = vector.extract_strided_slice %20 {offsets = [0, 256], sizes = [8, 128], strides = [1, 1]} : vector<8x384xf32> to vector<8x128xf32>
    %38 = vector.extract_strided_slice %18 {offsets = [0, 256], sizes = [8, 128], strides = [1, 1]} : vector<8x384xf32> to vector<8x128xf32>
    %39 = arith.mulf %28, %38 : vector<8x128xf32>
    %40 = arith.addf %37, %39 : vector<8x128xf32>
    %41 = math.tanh %40 : vector<8x128xf32>
    %42 = vector.broadcast %10 : i32 to vector<8x1xi32>
    %43 = arith.cmpi sgt, %5, %42 : vector<8x1xi32>
    %cst_16 = arith.constant 1.000000e+00 : f32
    %44 = vector.shape_cast %43 : vector<8x1xi1> to vector<8x1xi1>
    %45 = vector.broadcast %44 : vector<8x1xi1> to vector<8x128xi1>
    %46 = vector.broadcast %cst_16 : f32 to vector<8x128xf32>
    %47 = arith.select %45, %36, %46 : vector<8x128xi1>, vector<8x128xf32>
    %48 = arith.subf %19, %41 : vector<8x128xf32>
    %49 = arith.mulf %47, %48 : vector<8x128xf32>
    %50 = arith.addf %41, %49 : vector<8x128xf32>
    %cst_17 = arith.constant 0.000000e+00 : f32
    %51 = vector.shape_cast %43 : vector<8x1xi1> to vector<8x1xi1>
    %52 = vector.broadcast %51 : vector<8x1xi1> to vector<8x128xi1>
    %53 = vector.broadcast %cst_17 : f32 to vector<8x128xf32>
    %54 = arith.select %52, %50, %53 : vector<8x128xi1>, vector<8x128xf32>
    %c7 = arith.constant 7 : index
    %c0_18 = arith.constant 0 : index
    %c0_19 = arith.constant 0 : index
    %55 = vector.load %arg4[%c7, %c0_18, %c0_19] : memref<8x8x384xbf16, #tpu.memory_space<vmem>>, vector<1x8x384xbf16>
    %56 = vector.shape_cast %55 : vector<1x8x384xbf16> to vector<8x384xbf16>
    %57 = vector.extract_strided_slice %15 {offsets = [8, 384], sizes = [8, 384], strides = [1, 1]} : vector<16x768xf32> to vector<8x384xf32>
    %58 = vector.extract_strided_slice %9 {offsets = [8, 0], sizes = [8, 128], strides = [1, 1]} : vector<16x128xf32> to vector<8x128xf32>
    %59 = arith.extf %56 : vector<8x384xbf16> to vector<8x384xf32>
    %60 = vector.extract_strided_slice %59 {offsets = [0, 0], sizes = [8, 128], strides = [1, 1]} : vector<8x384xf32> to vector<8x128xf32>
    %61 = vector.extract_strided_slice %57 {offsets = [0, 0], sizes = [8, 128], strides = [1, 1]} : vector<8x384xf32> to vector<8x128xf32>
    %62 = arith.addf %60, %61 : vector<8x128xf32>
    %63 = arith.negf %62 : vector<8x128xf32>
    %64 = math.exp %63 : vector<8x128xf32>
    %cst_20 = arith.constant 1.000000e+00 : f32
    %65 = vector.broadcast %cst_20 : f32 to vector<8x128xf32>
    %66 = arith.addf %65, %64 : vector<8x128xf32>
    %67 = arith.divf %65, %66 : vector<8x128xf32>
    %68 = vector.extract_strided_slice %59 {offsets = [0, 128], sizes = [8, 128], strides = [1, 1]} : vector<8x384xf32> to vector<8x128xf32>
    %69 = vector.extract_strided_slice %57 {offsets = [0, 128], sizes = [8, 128], strides = [1, 1]} : vector<8x384xf32> to vector<8x128xf32>
    %70 = arith.addf %68, %69 : vector<8x128xf32>
    %71 = arith.negf %70 : vector<8x128xf32>
    %72 = math.exp %71 : vector<8x128xf32>
    %cst_21 = arith.constant 1.000000e+00 : f32
    %73 = vector.broadcast %cst_21 : f32 to vector<8x128xf32>
    %74 = arith.addf %73, %72 : vector<8x128xf32>
    %75 = arith.divf %73, %74 : vector<8x128xf32>
    %76 = vector.extract_strided_slice %59 {offsets = [0, 256], sizes = [8, 128], strides = [1, 1]} : vector<8x384xf32> to vector<8x128xf32>
    %77 = vector.extract_strided_slice %57 {offsets = [0, 256], sizes = [8, 128], strides = [1, 1]} : vector<8x384xf32> to vector<8x128xf32>
    %78 = arith.mulf %67, %77 : vector<8x128xf32>
    %79 = arith.addf %76, %78 : vector<8x128xf32>
    %80 = math.tanh %79 : vector<8x128xf32>
    %81 = vector.broadcast %11 : i32 to vector<8x1xi32>
    %82 = arith.cmpi sgt, %5, %81 : vector<8x1xi32>
    %cst_22 = arith.constant 1.000000e+00 : f32
    %83 = vector.shape_cast %82 : vector<8x1xi1> to vector<8x1xi1>
    %84 = vector.broadcast %83 : vector<8x1xi1> to vector<8x128xi1>
    %85 = vector.broadcast %cst_22 : f32 to vector<8x128xf32>
    %86 = arith.select %84, %75, %85 : vector<8x128xi1>, vector<8x128xf32>
    %87 = arith.subf %58, %80 : vector<8x128xf32>
    %88 = arith.mulf %86, %87 : vector<8x128xf32>
    %89 = arith.addf %80, %88 : vector<8x128xf32>
    %cst_23 = arith.constant 0.000000e+00 : f32
    %90 = vector.shape_cast %82 : vector<8x1xi1> to vector<8x1xi1>
    %91 = vector.broadcast %90 : vector<8x1xi1> to vector<8x128xi1>
    %92 = vector.broadcast %cst_23 : f32 to vector<8x128xf32>
    %93 = arith.select %91, %89, %92 : vector<8x128xi1>, vector<8x128xf32>
    %c0_24 = arith.constant 0 : index
    %c0_25 = arith.constant 0 : index
    %c0_26 = arith.constant 0 : index
    %94 = vector.load %arg7[%c0_24, %c0_25, %c0_26] : memref<8x8x128xf32, #tpu.memory_space<vmem>>, vector<1x8x128xf32>
    %95 = vector.shape_cast %94 : vector<1x8x128xf32> to vector<8x128xf32>
    %96 = vector.shape_cast %54 : vector<8x128xf32> to vector<1x8x128xf32>
    tpu.vector_store %arg7[%c0_24, %c0_25, %c0_26], %96 {strides = array<i32>} : memref<8x8x128xf32, #tpu.memory_space<vmem>>, vector<1x8x128xf32>,
    %c7_27 = arith.constant 7 : index
    %c0_28 = arith.constant 0 : index
    %c0_29 = arith.constant 0 : index
    %97 = vector.load %arg8[%c7_27, %c0_28, %c0_29] : memref<8x8x128xf32, #tpu.memory_space<vmem>>, vector<1x8x128xf32>
    %98 = vector.shape_cast %97 : vector<1x8x128xf32> to vector<8x128xf32>
    %99 = vector.shape_cast %93 : vector<8x128xf32> to vector<1x8x128xf32>
    tpu.vector_store %arg8[%c7_27, %c0_28, %c0_29], %99 {strides = array<i32>} : memref<8x8x128xf32, #tpu.memory_space<vmem>>, vector<1x8x128xf32>,
    %100 = tpu.concatenate %50, %89 in 0 : vector<8x128xf32>, vector<8x128xf32> -> vector<16x128xf32>
    %c1_i32 = arith.constant 1 : i32
    %101 = arith.addi %6, %c1_i32 : i32
    %c6_i32 = arith.constant 6 : i32
    %102 = arith.addi %8, %c6_i32 : i32
    %103 = arith.truncf %100 : vector<16x128xf32> to vector<16x128xbf16>
    %cst_30 = arith.constant dense<0.000000e+00> : vector<16x768xf32>
    %104 = tpu.matmul %103, %3, %cst_30 {dimension_numbers = #tpu.dot_dimension_numbers<[1], [0], [0], [1], [0, 0, 1, 1], [], []>} : vector<16x128xbf16>, vector<128x768xbf16>, vector<16x768xf32> -> vector<16x768xf32>
    %105 = vector.broadcast %4 : vector<1x768xf32> to vector<16x768xf32>
    %106 = arith.addf %104, %105 : vector<16x768xf32>
    %c1 = arith.constant 1 : index
    %c0_31 = arith.constant 0 : index
    %c0_32 = arith.constant 0 : index
    %107 = vector.load %arg3[%c1, %c0_31, %c0_32] : memref<8x8x384xbf16, #tpu.memory_space<vmem>>, vector<1x8x384xbf16>
    %108 = vector.shape_cast %107 : vector<1x8x384xbf16> to vector<8x384xbf16>
    %109 = vector.extract_strided_slice %106 {offsets = [0, 0], sizes = [8, 384], strides = [1, 1]} : vector<16x768xf32> to vector<8x384xf32>
    %110 = vector.extract_strided_slice %100 {offsets = [0, 0], sizes = [8, 128], strides = [1, 1]} : vector<16x128xf32> to vector<8x128xf32>
    %111 = arith.extf %108 : vector<8x384xbf16> to vector<8x384xf32>
    %112 = vector.extract_strided_slice %111 {offsets = [0, 0], sizes = [8, 128], strides = [1, 1]} : vector<8x384xf32> to vector<8x128xf32>
    %113 = vector.extract_strided_slice %109 {offsets = [0, 0], sizes = [8, 128], strides = [1, 1]} : vector<8x384xf32> to vector<8x128xf32>
    %114 = arith.addf %112, %113 : vector<8x128xf32>
    %115 = arith.negf %114 : vector<8x128xf32>
    %116 = math.exp %115 : vector<8x128xf32>
    %cst_33 = arith.constant 1.000000e+00 : f32
    %117 = vector.broadcast %cst_33 : f32 to vector<8x128xf32>
    %118 = arith.addf %117, %116 : vector<8x128xf32>
    %119 = arith.divf %117, %118 : vector<8x128xf32>
    %120 = vector.extract_strided_slice %111 {offsets = [0, 128], sizes = [8, 128], strides = [1, 1]} : vector<8x384xf32> to vector<8x128xf32>
    %121 = vector.extract_strided_slice %109 {offsets = [0, 128], sizes = [8, 128], strides = [1, 1]} : vector<8x384xf32> to vector<8x128xf32>
    %122 = arith.addf %120, %121 : vector<8x128xf32>
    %123 = arith.negf %122 : vector<8x128xf32>
    %124 = math.exp %123 : vector<8x128xf32>
    %cst_34 = arith.constant 1.000000e+00 : f32
    %125 = vector.broadcast %cst_34 : f32 to vector<8x128xf32>
    %126 = arith.addf %125, %124 : vector<8x128xf32>
    %127 = arith.divf %125, %126 : vector<8x128xf32>
    %128 = vector.extract_strided_slice %111 {offsets = [0, 256], sizes = [8, 128], strides = [1, 1]} : vector<8x384xf32> to vector<8x128xf32>
    %129 = vector.extract_strided_slice %109 {offsets = [0, 256], sizes = [8, 128], strides = [1, 1]} : vector<8x384xf32> to vector<8x128xf32>
    %130 = arith.mulf %119, %129 : vector<8x128xf32>
    %131 = arith.addf %128, %130 : vector<8x128xf32>
    %132 = math.tanh %131 : vector<8x128xf32>
    %133 = vector.broadcast %101 : i32 to vector<8x1xi32>
    %134 = arith.cmpi sgt, %5, %133 : vector<8x1xi32>
    %cst_35 = arith.constant 1.000000e+00 : f32
    %135 = vector.shape_cast %134 : vector<8x1xi1> to vector<8x1xi1>
    %136 = vector.broadcast %135 : vector<8x1xi1> to vector<8x128xi1>
    %137 = vector.broadcast %cst_35 : f32 to vector<8x128xf32>
    %138 = arith.select %136, %127, %137 : vector<8x128xi1>, vector<8x128xf32>
    %139 = arith.subf %110, %132 : vector<8x128xf32>
    %140 = arith.mulf %138, %139 : vector<8x128xf32>
    %141 = arith.addf %132, %140 : vector<8x128xf32>
    %cst_36 = arith.constant 0.000000e+00 : f32
    %142 = vector.shape_cast %134 : vector<8x1xi1> to vector<8x1xi1>
    %143 = vector.broadcast %142 : vector<8x1xi1> to vector<8x128xi1>
    %144 = vector.broadcast %cst_36 : f32 to vector<8x128xf32>
    %145 = arith.select %143, %141, %144 : vector<8x128xi1>, vector<8x128xf32>
    %c6 = arith.constant 6 : index
    %c0_37 = arith.constant 0 : index
    %c0_38 = arith.constant 0 : index
    %146 = vector.load %arg4[%c6, %c0_37, %c0_38] : memref<8x8x384xbf16, #tpu.memory_space<vmem>>, vector<1x8x384xbf16>
    %147 = vector.shape_cast %146 : vector<1x8x384xbf16> to vector<8x384xbf16>
    %148 = vector.extract_strided_slice %106 {offsets = [8, 384], sizes = [8, 384], strides = [1, 1]} : vector<16x768xf32> to vector<8x384xf32>
    %149 = vector.extract_strided_slice %100 {offsets = [8, 0], sizes = [8, 128], strides = [1, 1]} : vector<16x128xf32> to vector<8x128xf32>
    %150 = arith.extf %147 : vector<8x384xbf16> to vector<8x384xf32>
    %151 = vector.extract_strided_slice %150 {offsets = [0, 0], sizes = [8, 128], strides = [1, 1]} : vector<8x384xf32> to vector<8x128xf32>
    %152 = vector.extract_strided_slice %148 {offsets = [0, 0], sizes = [8, 128], strides = [1, 1]} : vector<8x384xf32> to vector<8x128xf32>
    %153 = arith.addf %151, %152 : vector<8x128xf32>
    %154 = arith.negf %153 : vector<8x128xf32>
    %155 = math.exp %154 : vector<8x128xf32>
    %cst_39 = arith.constant 1.000000e+00 : f32
    %156 = vector.broadcast %cst_39 : f32 to vector<8x128xf32>
    %157 = arith.addf %156, %155 : vector<8x128xf32>
    %158 = arith.divf %156, %157 : vector<8x128xf32>
    %159 = vector.extract_strided_slice %150 {offsets = [0, 128], sizes = [8, 128], strides = [1, 1]} : vector<8x384xf32> to vector<8x128xf32>
    %160 = vector.extract_strided_slice %148 {offsets = [0, 128], sizes = [8, 128], strides = [1, 1]} : vector<8x384xf32> to vector<8x128xf32>
    %161 = arith.addf %159, %160 : vector<8x128xf32>
    %162 = arith.negf %161 : vector<8x128xf32>
    %163 = math.exp %162 : vector<8x128xf32>
    %cst_40 = arith.constant 1.000000e+00 : f32
    %164 = vector.broadcast %cst_40 : f32 to vector<8x128xf32>
    %165 = arith.addf %164, %163 : vector<8x128xf32>
    %166 = arith.divf %164, %165 : vector<8x128xf32>
    %167 = vector.extract_strided_slice %150 {offsets = [0, 256], sizes = [8, 128], strides = [1, 1]} : vector<8x384xf32> to vector<8x128xf32>
    %168 = vector.extract_strided_slice %148 {offsets = [0, 256], sizes = [8, 128], strides = [1, 1]} : vector<8x384xf32> to vector<8x128xf32>
    %169 = arith.mulf %158, %168 : vector<8x128xf32>
    %170 = arith.addf %167, %169 : vector<8x128xf32>
    %171 = math.tanh %170 : vector<8x128xf32>
    %172 = vector.broadcast %102 : i32 to vector<8x1xi32>
    %173 = arith.cmpi sgt, %5, %172 : vector<8x1xi32>
    %cst_41 = arith.constant 1.000000e+00 : f32
    %174 = vector.shape_cast %173 : vector<8x1xi1> to vector<8x1xi1>
    %175 = vector.broadcast %174 : vector<8x1xi1> to vector<8x128xi1>
    %176 = vector.broadcast %cst_41 : f32 to vector<8x128xf32>
    %177 = arith.select %175, %166, %176 : vector<8x128xi1>, vector<8x128xf32>
    %178 = arith.subf %149, %171 : vector<8x128xf32>
    %179 = arith.mulf %177, %178 : vector<8x128xf32>
    %180 = arith.addf %171, %179 : vector<8x128xf32>
    %cst_42 = arith.constant 0.000000e+00 : f32
    %181 = vector.shape_cast %173 : vector<8x1xi1> to vector<8x1xi1>
    %182 = vector.broadcast %181 : vector<8x1xi1> to vector<8x128xi1>
    %183 = vector.broadcast %cst_42 : f32 to vector<8x128xf32>
    %184 = arith.select %182, %180, %183 : vector<8x128xi1>, vector<8x128xf32>
    %c1_43 = arith.constant 1 : index
    %c0_44 = arith.constant 0 : index
    %c0_45 = arith.constant 0 : index
    %185 = vector.load %arg7[%c1_43, %c0_44, %c0_45] : memref<8x8x128xf32, #tpu.memory_space<vmem>>, vector<1x8x128xf32>
    %186 = vector.shape_cast %185 : vector<1x8x128xf32> to vector<8x128xf32>
    %187 = vector.shape_cast %145 : vector<8x128xf32> to vector<1x8x128xf32>
    tpu.vector_store %arg7[%c1_43, %c0_44, %c0_45], %187 {strides = array<i32>} : memref<8x8x128xf32, #tpu.memory_space<vmem>>, vector<1x8x128xf32>,
    %c6_46 = arith.constant 6 : index
    %c0_47 = arith.constant 0 : index
    %c0_48 = arith.constant 0 : index
    %188 = vector.load %arg8[%c6_46, %c0_47, %c0_48] : memref<8x8x128xf32, #tpu.memory_space<vmem>>, vector<1x8x128xf32>
    %189 = vector.shape_cast %188 : vector<1x8x128xf32> to vector<8x128xf32>
    %190 = vector.shape_cast %184 : vector<8x128xf32> to vector<1x8x128xf32>
    tpu.vector_store %arg8[%c6_46, %c0_47, %c0_48], %190 {strides = array<i32>} : memref<8x8x128xf32, #tpu.memory_space<vmem>>, vector<1x8x128xf32>,
    %191 = tpu.concatenate %141, %180 in 0 : vector<8x128xf32>, vector<8x128xf32> -> vector<16x128xf32>
    %c2_i32 = arith.constant 2 : i32
    %192 = arith.addi %6, %c2_i32 : i32
    %c5_i32 = arith.constant 5 : i32
    %193 = arith.addi %8, %c5_i32 : i32
    %194 = arith.truncf %191 : vector<16x128xf32> to vector<16x128xbf16>
    %cst_49 = arith.constant dense<0.000000e+00> : vector<16x768xf32>
    %195 = tpu.matmul %194, %3, %cst_49 {dimension_numbers = #tpu.dot_dimension_numbers<[1], [0], [0], [1], [0, 0, 1, 1], [], []>} : vector<16x128xbf16>, vector<128x768xbf16>, vector<16x768xf32> -> vector<16x768xf32>
    %196 = vector.broadcast %4 : vector<1x768xf32> to vector<16x768xf32>
    %197 = arith.addf %195, %196 : vector<16x768xf32>
    %c2 = arith.constant 2 : index
    %c0_50 = arith.constant 0 : index
    %c0_51 = arith.constant 0 : index
    %198 = vector.load %arg3[%c2, %c0_50, %c0_51] : memref<8x8x384xbf16, #tpu.memory_space<vmem>>, vector<1x8x384xbf16>
    %199 = vector.shape_cast %198 : vector<1x8x384xbf16> to vector<8x384xbf16>
    %200 = vector.extract_strided_slice %197 {offsets = [0, 0], sizes = [8, 384], strides = [1, 1]} : vector<16x768xf32> to vector<8x384xf32>
    %201 = vector.extract_strided_slice %191 {offsets = [0, 0], sizes = [8, 128], strides = [1, 1]} : vector<16x128xf32> to vector<8x128xf32>
    %202 = arith.extf %199 : vector<8x384xbf16> to vector<8x384xf32>
    %203 = vector.extract_strided_slice %202 {offsets = [0, 0], sizes = [8, 128], strides = [1, 1]} : vector<8x384xf32> to vector<8x128xf32>
    %204 = vector.extract_strided_slice %200 {offsets = [0, 0], sizes = [8, 128], strides = [1, 1]} : vector<8x384xf32> to vector<8x128xf32>
    %205 = arith.addf %203, %204 : vector<8x128xf32>
    %206 = arith.negf %205 : vector<8x128xf32>
    %207 = math.exp %206 : vector<8x128xf32>
    %cst_52 = arith.constant 1.000000e+00 : f32
    %208 = vector.broadcast %cst_52 : f32 to vector<8x128xf32>
    %209 = arith.addf %208, %207 : vector<8x128xf32>
    %210 = arith.divf %208, %209 : vector<8x128xf32>
    %211 = vector.extract_strided_slice %202 {offsets = [0, 128], sizes = [8, 128], strides = [1, 1]} : vector<8x384xf32> to vector<8x128xf32>
    %212 = vector.extract_strided_slice %200 {offsets = [0, 128], sizes = [8, 128], strides = [1, 1]} : vector<8x384xf32> to vector<8x128xf32>
    %213 = arith.addf %211, %212 : vector<8x128xf32>
    %214 = arith.negf %213 : vector<8x128xf32>
    %215 = math.exp %214 : vector<8x128xf32>
    %cst_53 = arith.constant 1.000000e+00 : f32
    %216 = vector.broadcast %cst_53 : f32 to vector<8x128xf32>
    %217 = arith.addf %216, %215 : vector<8x128xf32>
    %218 = arith.divf %216, %217 : vector<8x128xf32>
    %219 = vector.extract_strided_slice %202 {offsets = [0, 256], sizes = [8, 128], strides = [1, 1]} : vector<8x384xf32> to vector<8x128xf32>
    %220 = vector.extract_strided_slice %200 {offsets = [0, 256], sizes = [8, 128], strides = [1, 1]} : vector<8x384xf32> to vector<8x128xf32>
    %221 = arith.mulf %210, %220 : vector<8x128xf32>
    %222 = arith.addf %219, %221 : vector<8x128xf32>
    %223 = math.tanh %222 : vector<8x128xf32>
    %224 = vector.broadcast %192 : i32 to vector<8x1xi32>
    %225 = arith.cmpi sgt, %5, %224 : vector<8x1xi32>
    %cst_54 = arith.constant 1.000000e+00 : f32
    %226 = vector.shape_cast %225 : vector<8x1xi1> to vector<8x1xi1>
    %227 = vector.broadcast %226 : vector<8x1xi1> to vector<8x128xi1>
    %228 = vector.broadcast %cst_54 : f32 to vector<8x128xf32>
    %229 = arith.select %227, %218, %228 : vector<8x128xi1>, vector<8x128xf32>
    %230 = arith.subf %201, %223 : vector<8x128xf32>
    %231 = arith.mulf %229, %230 : vector<8x128xf32>
    %232 = arith.addf %223, %231 : vector<8x128xf32>
    %cst_55 = arith.constant 0.000000e+00 : f32
    %233 = vector.shape_cast %225 : vector<8x1xi1> to vector<8x1xi1>
    %234 = vector.broadcast %233 : vector<8x1xi1> to vector<8x128xi1>
    %235 = vector.broadcast %cst_55 : f32 to vector<8x128xf32>
    %236 = arith.select %234, %232, %235 : vector<8x128xi1>, vector<8x128xf32>
    %c5 = arith.constant 5 : index
    %c0_56 = arith.constant 0 : index
    %c0_57 = arith.constant 0 : index
    %237 = vector.load %arg4[%c5, %c0_56, %c0_57] : memref<8x8x384xbf16, #tpu.memory_space<vmem>>, vector<1x8x384xbf16>
    %238 = vector.shape_cast %237 : vector<1x8x384xbf16> to vector<8x384xbf16>
    %239 = vector.extract_strided_slice %197 {offsets = [8, 384], sizes = [8, 384], strides = [1, 1]} : vector<16x768xf32> to vector<8x384xf32>
    %240 = vector.extract_strided_slice %191 {offsets = [8, 0], sizes = [8, 128], strides = [1, 1]} : vector<16x128xf32> to vector<8x128xf32>
    %241 = arith.extf %238 : vector<8x384xbf16> to vector<8x384xf32>
    %242 = vector.extract_strided_slice %241 {offsets = [0, 0], sizes = [8, 128], strides = [1, 1]} : vector<8x384xf32> to vector<8x128xf32>
    %243 = vector.extract_strided_slice %239 {offsets = [0, 0], sizes = [8, 128], strides = [1, 1]} : vector<8x384xf32> to vector<8x128xf32>
    %244 = arith.addf %242, %243 : vector<8x128xf32>
    %245 = arith.negf %244 : vector<8x128xf32>
    %246 = math.exp %245 : vector<8x128xf32>
    %cst_58 = arith.constant 1.000000e+00 : f32
    %247 = vector.broadcast %cst_58 : f32 to vector<8x128xf32>
    %248 = arith.addf %247, %246 : vector<8x128xf32>
    %249 = arith.divf %247, %248 : vector<8x128xf32>
    %250 = vector.extract_strided_slice %241 {offsets = [0, 128], sizes = [8, 128], strides = [1, 1]} : vector<8x384xf32> to vector<8x128xf32>
    %251 = vector.extract_strided_slice %239 {offsets = [0, 128], sizes = [8, 128], strides = [1, 1]} : vector<8x384xf32> to vector<8x128xf32>
    %252 = arith.addf %250, %251 : vector<8x128xf32>
    %253 = arith.negf %252 : vector<8x128xf32>
    %254 = math.exp %253 : vector<8x128xf32>
    %cst_59 = arith.constant 1.000000e+00 : f32
    %255 = vector.broadcast %cst_59 : f32 to vector<8x128xf32>
    %256 = arith.addf %255, %254 : vector<8x128xf32>
    %257 = arith.divf %255, %256 : vector<8x128xf32>
    %258 = vector.extract_strided_slice %241 {offsets = [0, 256], sizes = [8, 128], strides = [1, 1]} : vector<8x384xf32> to vector<8x128xf32>
    %259 = vector.extract_strided_slice %239 {offsets = [0, 256], sizes = [8, 128], strides = [1, 1]} : vector<8x384xf32> to vector<8x128xf32>
    %260 = arith.mulf %249, %259 : vector<8x128xf32>
    %261 = arith.addf %258, %260 : vector<8x128xf32>
    %262 = math.tanh %261 : vector<8x128xf32>
    %263 = vector.broadcast %193 : i32 to vector<8x1xi32>
    %264 = arith.cmpi sgt, %5, %263 : vector<8x1xi32>
    %cst_60 = arith.constant 1.000000e+00 : f32
    %265 = vector.shape_cast %264 : vector<8x1xi1> to vector<8x1xi1>
    %266 = vector.broadcast %265 : vector<8x1xi1> to vector<8x128xi1>
    %267 = vector.broadcast %cst_60 : f32 to vector<8x128xf32>
    %268 = arith.select %266, %257, %267 : vector<8x128xi1>, vector<8x128xf32>
    %269 = arith.subf %240, %262 : vector<8x128xf32>
    %270 = arith.mulf %268, %269 : vector<8x128xf32>
    %271 = arith.addf %262, %270 : vector<8x128xf32>
    %cst_61 = arith.constant 0.000000e+00 : f32
    %272 = vector.shape_cast %264 : vector<8x1xi1> to vector<8x1xi1>
    %273 = vector.broadcast %272 : vector<8x1xi1> to vector<8x128xi1>
    %274 = vector.broadcast %cst_61 : f32 to vector<8x128xf32>
    %275 = arith.select %273, %271, %274 : vector<8x128xi1>, vector<8x128xf32>
    %c2_62 = arith.constant 2 : index
    %c0_63 = arith.constant 0 : index
    %c0_64 = arith.constant 0 : index
    %276 = vector.load %arg7[%c2_62, %c0_63, %c0_64] : memref<8x8x128xf32, #tpu.memory_space<vmem>>, vector<1x8x128xf32>
    %277 = vector.shape_cast %276 : vector<1x8x128xf32> to vector<8x128xf32>
    %278 = vector.shape_cast %236 : vector<8x128xf32> to vector<1x8x128xf32>
    tpu.vector_store %arg7[%c2_62, %c0_63, %c0_64], %278 {strides = array<i32>} : memref<8x8x128xf32, #tpu.memory_space<vmem>>, vector<1x8x128xf32>,
    %c5_65 = arith.constant 5 : index
    %c0_66 = arith.constant 0 : index
    %c0_67 = arith.constant 0 : index
    %279 = vector.load %arg8[%c5_65, %c0_66, %c0_67] : memref<8x8x128xf32, #tpu.memory_space<vmem>>, vector<1x8x128xf32>
    %280 = vector.shape_cast %279 : vector<1x8x128xf32> to vector<8x128xf32>
    %281 = vector.shape_cast %275 : vector<8x128xf32> to vector<1x8x128xf32>
    tpu.vector_store %arg8[%c5_65, %c0_66, %c0_67], %281 {strides = array<i32>} : memref<8x8x128xf32, #tpu.memory_space<vmem>>, vector<1x8x128xf32>,
    %282 = tpu.concatenate %232, %271 in 0 : vector<8x128xf32>, vector<8x128xf32> -> vector<16x128xf32>
    %c3_i32 = arith.constant 3 : i32
    %283 = arith.addi %6, %c3_i32 : i32
    %c4_i32 = arith.constant 4 : i32
    %284 = arith.addi %8, %c4_i32 : i32
    %285 = arith.truncf %282 : vector<16x128xf32> to vector<16x128xbf16>
    %cst_68 = arith.constant dense<0.000000e+00> : vector<16x768xf32>
    %286 = tpu.matmul %285, %3, %cst_68 {dimension_numbers = #tpu.dot_dimension_numbers<[1], [0], [0], [1], [0, 0, 1, 1], [], []>} : vector<16x128xbf16>, vector<128x768xbf16>, vector<16x768xf32> -> vector<16x768xf32>
    %287 = vector.broadcast %4 : vector<1x768xf32> to vector<16x768xf32>
    %288 = arith.addf %286, %287 : vector<16x768xf32>
    %c3 = arith.constant 3 : index
    %c0_69 = arith.constant 0 : index
    %c0_70 = arith.constant 0 : index
    %289 = vector.load %arg3[%c3, %c0_69, %c0_70] : memref<8x8x384xbf16, #tpu.memory_space<vmem>>, vector<1x8x384xbf16>
    %290 = vector.shape_cast %289 : vector<1x8x384xbf16> to vector<8x384xbf16>
    %291 = vector.extract_strided_slice %288 {offsets = [0, 0], sizes = [8, 384], strides = [1, 1]} : vector<16x768xf32> to vector<8x384xf32>
    %292 = vector.extract_strided_slice %282 {offsets = [0, 0], sizes = [8, 128], strides = [1, 1]} : vector<16x128xf32> to vector<8x128xf32>
    %293 = arith.extf %290 : vector<8x384xbf16> to vector<8x384xf32>
    %294 = vector.extract_strided_slice %293 {offsets = [0, 0], sizes = [8, 128], strides = [1, 1]} : vector<8x384xf32> to vector<8x128xf32>
    %295 = vector.extract_strided_slice %291 {offsets = [0, 0], sizes = [8, 128], strides = [1, 1]} : vector<8x384xf32> to vector<8x128xf32>
    %296 = arith.addf %294, %295 : vector<8x128xf32>
    %297 = arith.negf %296 : vector<8x128xf32>
    %298 = math.exp %297 : vector<8x128xf32>
    %cst_71 = arith.constant 1.000000e+00 : f32
    %299 = vector.broadcast %cst_71 : f32 to vector<8x128xf32>
    %300 = arith.addf %299, %298 : vector<8x128xf32>
    %301 = arith.divf %299, %300 : vector<8x128xf32>
    %302 = vector.extract_strided_slice %293 {offsets = [0, 128], sizes = [8, 128], strides = [1, 1]} : vector<8x384xf32> to vector<8x128xf32>
    %303 = vector.extract_strided_slice %291 {offsets = [0, 128], sizes = [8, 128], strides = [1, 1]} : vector<8x384xf32> to vector<8x128xf32>
    %304 = arith.addf %302, %303 : vector<8x128xf32>
    %305 = arith.negf %304 : vector<8x128xf32>
    %306 = math.exp %305 : vector<8x128xf32>
    %cst_72 = arith.constant 1.000000e+00 : f32
    %307 = vector.broadcast %cst_72 : f32 to vector<8x128xf32>
    %308 = arith.addf %307, %306 : vector<8x128xf32>
    %309 = arith.divf %307, %308 : vector<8x128xf32>
    %310 = vector.extract_strided_slice %293 {offsets = [0, 256], sizes = [8, 128], strides = [1, 1]} : vector<8x384xf32> to vector<8x128xf32>
    %311 = vector.extract_strided_slice %291 {offsets = [0, 256], sizes = [8, 128], strides = [1, 1]} : vector<8x384xf32> to vector<8x128xf32>
    %312 = arith.mulf %301, %311 : vector<8x128xf32>
    %313 = arith.addf %310, %312 : vector<8x128xf32>
    %314 = math.tanh %313 : vector<8x128xf32>
    %315 = vector.broadcast %283 : i32 to vector<8x1xi32>
    %316 = arith.cmpi sgt, %5, %315 : vector<8x1xi32>
    %cst_73 = arith.constant 1.000000e+00 : f32
    %317 = vector.shape_cast %316 : vector<8x1xi1> to vector<8x1xi1>
    %318 = vector.broadcast %317 : vector<8x1xi1> to vector<8x128xi1>
    %319 = vector.broadcast %cst_73 : f32 to vector<8x128xf32>
    %320 = arith.select %318, %309, %319 : vector<8x128xi1>, vector<8x128xf32>
    %321 = arith.subf %292, %314 : vector<8x128xf32>
    %322 = arith.mulf %320, %321 : vector<8x128xf32>
    %323 = arith.addf %314, %322 : vector<8x128xf32>
    %cst_74 = arith.constant 0.000000e+00 : f32
    %324 = vector.shape_cast %316 : vector<8x1xi1> to vector<8x1xi1>
    %325 = vector.broadcast %324 : vector<8x1xi1> to vector<8x128xi1>
    %326 = vector.broadcast %cst_74 : f32 to vector<8x128xf32>
    %327 = arith.select %325, %323, %326 : vector<8x128xi1>, vector<8x128xf32>
    %c4 = arith.constant 4 : index
    %c0_75 = arith.constant 0 : index
    %c0_76 = arith.constant 0 : index
    %328 = vector.load %arg4[%c4, %c0_75, %c0_76] : memref<8x8x384xbf16, #tpu.memory_space<vmem>>, vector<1x8x384xbf16>
    %329 = vector.shape_cast %328 : vector<1x8x384xbf16> to vector<8x384xbf16>
    %330 = vector.extract_strided_slice %288 {offsets = [8, 384], sizes = [8, 384], strides = [1, 1]} : vector<16x768xf32> to vector<8x384xf32>
    %331 = vector.extract_strided_slice %282 {offsets = [8, 0], sizes = [8, 128], strides = [1, 1]} : vector<16x128xf32> to vector<8x128xf32>
    %332 = arith.extf %329 : vector<8x384xbf16> to vector<8x384xf32>
    %333 = vector.extract_strided_slice %332 {offsets = [0, 0], sizes = [8, 128], strides = [1, 1]} : vector<8x384xf32> to vector<8x128xf32>
    %334 = vector.extract_strided_slice %330 {offsets = [0, 0], sizes = [8, 128], strides = [1, 1]} : vector<8x384xf32> to vector<8x128xf32>
    %335 = arith.addf %333, %334 : vector<8x128xf32>
    %336 = arith.negf %335 : vector<8x128xf32>
    %337 = math.exp %336 : vector<8x128xf32>
    %cst_77 = arith.constant 1.000000e+00 : f32
    %338 = vector.broadcast %cst_77 : f32 to vector<8x128xf32>
    %339 = arith.addf %338, %337 : vector<8x128xf32>
    %340 = arith.divf %338, %339 : vector<8x128xf32>
    %341 = vector.extract_strided_slice %332 {offsets = [0, 128], sizes = [8, 128], strides = [1, 1]} : vector<8x384xf32> to vector<8x128xf32>
    %342 = vector.extract_strided_slice %330 {offsets = [0, 128], sizes = [8, 128], strides = [1, 1]} : vector<8x384xf32> to vector<8x128xf32>
    %343 = arith.addf %341, %342 : vector<8x128xf32>
    %344 = arith.negf %343 : vector<8x128xf32>
    %345 = math.exp %344 : vector<8x128xf32>
    %cst_78 = arith.constant 1.000000e+00 : f32
    %346 = vector.broadcast %cst_78 : f32 to vector<8x128xf32>
    %347 = arith.addf %346, %345 : vector<8x128xf32>
    %348 = arith.divf %346, %347 : vector<8x128xf32>
    %349 = vector.extract_strided_slice %332 {offsets = [0, 256], sizes = [8, 128], strides = [1, 1]} : vector<8x384xf32> to vector<8x128xf32>
    %350 = vector.extract_strided_slice %330 {offsets = [0, 256], sizes = [8, 128], strides = [1, 1]} : vector<8x384xf32> to vector<8x128xf32>
    %351 = arith.mulf %340, %350 : vector<8x128xf32>
    %352 = arith.addf %349, %351 : vector<8x128xf32>
    %353 = math.tanh %352 : vector<8x128xf32>
    %354 = vector.broadcast %284 : i32 to vector<8x1xi32>
    %355 = arith.cmpi sgt, %5, %354 : vector<8x1xi32>
    %cst_79 = arith.constant 1.000000e+00 : f32
    %356 = vector.shape_cast %355 : vector<8x1xi1> to vector<8x1xi1>
    %357 = vector.broadcast %356 : vector<8x1xi1> to vector<8x128xi1>
    %358 = vector.broadcast %cst_79 : f32 to vector<8x128xf32>
    %359 = arith.select %357, %348, %358 : vector<8x128xi1>, vector<8x128xf32>
    %360 = arith.subf %331, %353 : vector<8x128xf32>
    %361 = arith.mulf %359, %360 : vector<8x128xf32>
    %362 = arith.addf %353, %361 : vector<8x128xf32>
    %cst_80 = arith.constant 0.000000e+00 : f32
    %363 = vector.shape_cast %355 : vector<8x1xi1> to vector<8x1xi1>
    %364 = vector.broadcast %363 : vector<8x1xi1> to vector<8x128xi1>
    %365 = vector.broadcast %cst_80 : f32 to vector<8x128xf32>
    %366 = arith.select %364, %362, %365 : vector<8x128xi1>, vector<8x128xf32>
    %c3_81 = arith.constant 3 : index
    %c0_82 = arith.constant 0 : index
    %c0_83 = arith.constant 0 : index
    %367 = vector.load %arg7[%c3_81, %c0_82, %c0_83] : memref<8x8x128xf32, #tpu.memory_space<vmem>>, vector<1x8x128xf32>
    %368 = vector.shape_cast %367 : vector<1x8x128xf32> to vector<8x128xf32>
    %369 = vector.shape_cast %327 : vector<8x128xf32> to vector<1x8x128xf32>
    tpu.vector_store %arg7[%c3_81, %c0_82, %c0_83], %369 {strides = array<i32>} : memref<8x8x128xf32, #tpu.memory_space<vmem>>, vector<1x8x128xf32>,
    %c4_84 = arith.constant 4 : index
    %c0_85 = arith.constant 0 : index
    %c0_86 = arith.constant 0 : index
    %370 = vector.load %arg8[%c4_84, %c0_85, %c0_86] : memref<8x8x128xf32, #tpu.memory_space<vmem>>, vector<1x8x128xf32>
    %371 = vector.shape_cast %370 : vector<1x8x128xf32> to vector<8x128xf32>
    %372 = vector.shape_cast %366 : vector<8x128xf32> to vector<1x8x128xf32>
    tpu.vector_store %arg8[%c4_84, %c0_85, %c0_86], %372 {strides = array<i32>} : memref<8x8x128xf32, #tpu.memory_space<vmem>>, vector<1x8x128xf32>,
    %373 = tpu.concatenate %323, %362 in 0 : vector<8x128xf32>, vector<8x128xf32> -> vector<16x128xf32>
    %c4_i32_87 = arith.constant 4 : i32
    %374 = arith.addi %6, %c4_i32_87 : i32
    %c3_i32_88 = arith.constant 3 : i32
    %375 = arith.addi %8, %c3_i32_88 : i32
    %376 = arith.truncf %373 : vector<16x128xf32> to vector<16x128xbf16>
    %cst_89 = arith.constant dense<0.000000e+00> : vector<16x768xf32>
    %377 = tpu.matmul %376, %3, %cst_89 {dimension_numbers = #tpu.dot_dimension_numbers<[1], [0], [0], [1], [0, 0, 1, 1], [], []>} : vector<16x128xbf16>, vector<128x768xbf16>, vector<16x768xf32> -> vector<16x768xf32>
    %378 = vector.broadcast %4 : vector<1x768xf32> to vector<16x768xf32>
    %379 = arith.addf %377, %378 : vector<16x768xf32>
    %c4_90 = arith.constant 4 : index
    %c0_91 = arith.constant 0 : index
    %c0_92 = arith.constant 0 : index
    %380 = vector.load %arg3[%c4_90, %c0_91, %c0_92] : memref<8x8x384xbf16, #tpu.memory_space<vmem>>, vector<1x8x384xbf16>
    %381 = vector.shape_cast %380 : vector<1x8x384xbf16> to vector<8x384xbf16>
    %382 = vector.extract_strided_slice %379 {offsets = [0, 0], sizes = [8, 384], strides = [1, 1]} : vector<16x768xf32> to vector<8x384xf32>
    %383 = vector.extract_strided_slice %373 {offsets = [0, 0], sizes = [8, 128], strides = [1, 1]} : vector<16x128xf32> to vector<8x128xf32>
    %384 = arith.extf %381 : vector<8x384xbf16> to vector<8x384xf32>
    %385 = vector.extract_strided_slice %384 {offsets = [0, 0], sizes = [8, 128], strides = [1, 1]} : vector<8x384xf32> to vector<8x128xf32>
    %386 = vector.extract_strided_slice %382 {offsets = [0, 0], sizes = [8, 128], strides = [1, 1]} : vector<8x384xf32> to vector<8x128xf32>
    %387 = arith.addf %385, %386 : vector<8x128xf32>
    %388 = arith.negf %387 : vector<8x128xf32>
    %389 = math.exp %388 : vector<8x128xf32>
    %cst_93 = arith.constant 1.000000e+00 : f32
    %390 = vector.broadcast %cst_93 : f32 to vector<8x128xf32>
    %391 = arith.addf %390, %389 : vector<8x128xf32>
    %392 = arith.divf %390, %391 : vector<8x128xf32>
    %393 = vector.extract_strided_slice %384 {offsets = [0, 128], sizes = [8, 128], strides = [1, 1]} : vector<8x384xf32> to vector<8x128xf32>
    %394 = vector.extract_strided_slice %382 {offsets = [0, 128], sizes = [8, 128], strides = [1, 1]} : vector<8x384xf32> to vector<8x128xf32>
    %395 = arith.addf %393, %394 : vector<8x128xf32>
    %396 = arith.negf %395 : vector<8x128xf32>
    %397 = math.exp %396 : vector<8x128xf32>
    %cst_94 = arith.constant 1.000000e+00 : f32
    %398 = vector.broadcast %cst_94 : f32 to vector<8x128xf32>
    %399 = arith.addf %398, %397 : vector<8x128xf32>
    %400 = arith.divf %398, %399 : vector<8x128xf32>
    %401 = vector.extract_strided_slice %384 {offsets = [0, 256], sizes = [8, 128], strides = [1, 1]} : vector<8x384xf32> to vector<8x128xf32>
    %402 = vector.extract_strided_slice %382 {offsets = [0, 256], sizes = [8, 128], strides = [1, 1]} : vector<8x384xf32> to vector<8x128xf32>
    %403 = arith.mulf %392, %402 : vector<8x128xf32>
    %404 = arith.addf %401, %403 : vector<8x128xf32>
    %405 = math.tanh %404 : vector<8x128xf32>
    %406 = vector.broadcast %374 : i32 to vector<8x1xi32>
    %407 = arith.cmpi sgt, %5, %406 : vector<8x1xi32>
    %cst_95 = arith.constant 1.000000e+00 : f32
    %408 = vector.shape_cast %407 : vector<8x1xi1> to vector<8x1xi1>
    %409 = vector.broadcast %408 : vector<8x1xi1> to vector<8x128xi1>
    %410 = vector.broadcast %cst_95 : f32 to vector<8x128xf32>
    %411 = arith.select %409, %400, %410 : vector<8x128xi1>, vector<8x128xf32>
    %412 = arith.subf %383, %405 : vector<8x128xf32>
    %413 = arith.mulf %411, %412 : vector<8x128xf32>
    %414 = arith.addf %405, %413 : vector<8x128xf32>
    %cst_96 = arith.constant 0.000000e+00 : f32
    %415 = vector.shape_cast %407 : vector<8x1xi1> to vector<8x1xi1>
    %416 = vector.broadcast %415 : vector<8x1xi1> to vector<8x128xi1>
    %417 = vector.broadcast %cst_96 : f32 to vector<8x128xf32>
    %418 = arith.select %416, %414, %417 : vector<8x128xi1>, vector<8x128xf32>
    %c3_97 = arith.constant 3 : index
    %c0_98 = arith.constant 0 : index
    %c0_99 = arith.constant 0 : index
    %419 = vector.load %arg4[%c3_97, %c0_98, %c0_99] : memref<8x8x384xbf16, #tpu.memory_space<vmem>>, vector<1x8x384xbf16>
    %420 = vector.shape_cast %419 : vector<1x8x384xbf16> to vector<8x384xbf16>
    %421 = vector.extract_strided_slice %379 {offsets = [8, 384], sizes = [8, 384], strides = [1, 1]} : vector<16x768xf32> to vector<8x384xf32>
    %422 = vector.extract_strided_slice %373 {offsets = [8, 0], sizes = [8, 128], strides = [1, 1]} : vector<16x128xf32> to vector<8x128xf32>
    %423 = arith.extf %420 : vector<8x384xbf16> to vector<8x384xf32>
    %424 = vector.extract_strided_slice %423 {offsets = [0, 0], sizes = [8, 128], strides = [1, 1]} : vector<8x384xf32> to vector<8x128xf32>
    %425 = vector.extract_strided_slice %421 {offsets = [0, 0], sizes = [8, 128], strides = [1, 1]} : vector<8x384xf32> to vector<8x128xf32>
    %426 = arith.addf %424, %425 : vector<8x128xf32>
    %427 = arith.negf %426 : vector<8x128xf32>
    %428 = math.exp %427 : vector<8x128xf32>
    %cst_100 = arith.constant 1.000000e+00 : f32
    %429 = vector.broadcast %cst_100 : f32 to vector<8x128xf32>
    %430 = arith.addf %429, %428 : vector<8x128xf32>
    %431 = arith.divf %429, %430 : vector<8x128xf32>
    %432 = vector.extract_strided_slice %423 {offsets = [0, 128], sizes = [8, 128], strides = [1, 1]} : vector<8x384xf32> to vector<8x128xf32>
    %433 = vector.extract_strided_slice %421 {offsets = [0, 128], sizes = [8, 128], strides = [1, 1]} : vector<8x384xf32> to vector<8x128xf32>
    %434 = arith.addf %432, %433 : vector<8x128xf32>
    %435 = arith.negf %434 : vector<8x128xf32>
    %436 = math.exp %435 : vector<8x128xf32>
    %cst_101 = arith.constant 1.000000e+00 : f32
    %437 = vector.broadcast %cst_101 : f32 to vector<8x128xf32>
    %438 = arith.addf %437, %436 : vector<8x128xf32>
    %439 = arith.divf %437, %438 : vector<8x128xf32>
    %440 = vector.extract_strided_slice %423 {offsets = [0, 256], sizes = [8, 128], strides = [1, 1]} : vector<8x384xf32> to vector<8x128xf32>
    %441 = vector.extract_strided_slice %421 {offsets = [0, 256], sizes = [8, 128], strides = [1, 1]} : vector<8x384xf32> to vector<8x128xf32>
    %442 = arith.mulf %431, %441 : vector<8x128xf32>
    %443 = arith.addf %440, %442 : vector<8x128xf32>
    %444 = math.tanh %443 : vector<8x128xf32>
    %445 = vector.broadcast %375 : i32 to vector<8x1xi32>
    %446 = arith.cmpi sgt, %5, %445 : vector<8x1xi32>
    %cst_102 = arith.constant 1.000000e+00 : f32
    %447 = vector.shape_cast %446 : vector<8x1xi1> to vector<8x1xi1>
    %448 = vector.broadcast %447 : vector<8x1xi1> to vector<8x128xi1>
    %449 = vector.broadcast %cst_102 : f32 to vector<8x128xf32>
    %450 = arith.select %448, %439, %449 : vector<8x128xi1>, vector<8x128xf32>
    %451 = arith.subf %422, %444 : vector<8x128xf32>
    %452 = arith.mulf %450, %451 : vector<8x128xf32>
    %453 = arith.addf %444, %452 : vector<8x128xf32>
    %cst_103 = arith.constant 0.000000e+00 : f32
    %454 = vector.shape_cast %446 : vector<8x1xi1> to vector<8x1xi1>
    %455 = vector.broadcast %454 : vector<8x1xi1> to vector<8x128xi1>
    %456 = vector.broadcast %cst_103 : f32 to vector<8x128xf32>
    %457 = arith.select %455, %453, %456 : vector<8x128xi1>, vector<8x128xf32>
    %c4_104 = arith.constant 4 : index
    %c0_105 = arith.constant 0 : index
    %c0_106 = arith.constant 0 : index
    %458 = vector.load %arg7[%c4_104, %c0_105, %c0_106] : memref<8x8x128xf32, #tpu.memory_space<vmem>>, vector<1x8x128xf32>
    %459 = vector.shape_cast %458 : vector<1x8x128xf32> to vector<8x128xf32>
    %460 = vector.shape_cast %418 : vector<8x128xf32> to vector<1x8x128xf32>
    tpu.vector_store %arg7[%c4_104, %c0_105, %c0_106], %460 {strides = array<i32>} : memref<8x8x128xf32, #tpu.memory_space<vmem>>, vector<1x8x128xf32>,
    %c3_107 = arith.constant 3 : index
    %c0_108 = arith.constant 0 : index
    %c0_109 = arith.constant 0 : index
    %461 = vector.load %arg8[%c3_107, %c0_108, %c0_109] : memref<8x8x128xf32, #tpu.memory_space<vmem>>, vector<1x8x128xf32>
    %462 = vector.shape_cast %461 : vector<1x8x128xf32> to vector<8x128xf32>
    %463 = vector.shape_cast %457 : vector<8x128xf32> to vector<1x8x128xf32>
    tpu.vector_store %arg8[%c3_107, %c0_108, %c0_109], %463 {strides = array<i32>} : memref<8x8x128xf32, #tpu.memory_space<vmem>>, vector<1x8x128xf32>,
    %464 = tpu.concatenate %414, %453 in 0 : vector<8x128xf32>, vector<8x128xf32> -> vector<16x128xf32>
    %c5_i32_110 = arith.constant 5 : i32
    %465 = arith.addi %6, %c5_i32_110 : i32
    %c2_i32_111 = arith.constant 2 : i32
    %466 = arith.addi %8, %c2_i32_111 : i32
    %467 = arith.truncf %464 : vector<16x128xf32> to vector<16x128xbf16>
    %cst_112 = arith.constant dense<0.000000e+00> : vector<16x768xf32>
    %468 = tpu.matmul %467, %3, %cst_112 {dimension_numbers = #tpu.dot_dimension_numbers<[1], [0], [0], [1], [0, 0, 1, 1], [], []>} : vector<16x128xbf16>, vector<128x768xbf16>, vector<16x768xf32> -> vector<16x768xf32>
    %469 = vector.broadcast %4 : vector<1x768xf32> to vector<16x768xf32>
    %470 = arith.addf %468, %469 : vector<16x768xf32>
    %c5_113 = arith.constant 5 : index
    %c0_114 = arith.constant 0 : index
    %c0_115 = arith.constant 0 : index
    %471 = vector.load %arg3[%c5_113, %c0_114, %c0_115] : memref<8x8x384xbf16, #tpu.memory_space<vmem>>, vector<1x8x384xbf16>
    %472 = vector.shape_cast %471 : vector<1x8x384xbf16> to vector<8x384xbf16>
    %473 = vector.extract_strided_slice %470 {offsets = [0, 0], sizes = [8, 384], strides = [1, 1]} : vector<16x768xf32> to vector<8x384xf32>
    %474 = vector.extract_strided_slice %464 {offsets = [0, 0], sizes = [8, 128], strides = [1, 1]} : vector<16x128xf32> to vector<8x128xf32>
    %475 = arith.extf %472 : vector<8x384xbf16> to vector<8x384xf32>
    %476 = vector.extract_strided_slice %475 {offsets = [0, 0], sizes = [8, 128], strides = [1, 1]} : vector<8x384xf32> to vector<8x128xf32>
    %477 = vector.extract_strided_slice %473 {offsets = [0, 0], sizes = [8, 128], strides = [1, 1]} : vector<8x384xf32> to vector<8x128xf32>
    %478 = arith.addf %476, %477 : vector<8x128xf32>
    %479 = arith.negf %478 : vector<8x128xf32>
    %480 = math.exp %479 : vector<8x128xf32>
    %cst_116 = arith.constant 1.000000e+00 : f32
    %481 = vector.broadcast %cst_116 : f32 to vector<8x128xf32>
    %482 = arith.addf %481, %480 : vector<8x128xf32>
    %483 = arith.divf %481, %482 : vector<8x128xf32>
    %484 = vector.extract_strided_slice %475 {offsets = [0, 128], sizes = [8, 128], strides = [1, 1]} : vector<8x384xf32> to vector<8x128xf32>
    %485 = vector.extract_strided_slice %473 {offsets = [0, 128], sizes = [8, 128], strides = [1, 1]} : vector<8x384xf32> to vector<8x128xf32>
    %486 = arith.addf %484, %485 : vector<8x128xf32>
    %487 = arith.negf %486 : vector<8x128xf32>
    %488 = math.exp %487 : vector<8x128xf32>
    %cst_117 = arith.constant 1.000000e+00 : f32
    %489 = vector.broadcast %cst_117 : f32 to vector<8x128xf32>
    %490 = arith.addf %489, %488 : vector<8x128xf32>
    %491 = arith.divf %489, %490 : vector<8x128xf32>
    %492 = vector.extract_strided_slice %475 {offsets = [0, 256], sizes = [8, 128], strides = [1, 1]} : vector<8x384xf32> to vector<8x128xf32>
    %493 = vector.extract_strided_slice %473 {offsets = [0, 256], sizes = [8, 128], strides = [1, 1]} : vector<8x384xf32> to vector<8x128xf32>
    %494 = arith.mulf %483, %493 : vector<8x128xf32>
    %495 = arith.addf %492, %494 : vector<8x128xf32>
    %496 = math.tanh %495 : vector<8x128xf32>
    %497 = vector.broadcast %465 : i32 to vector<8x1xi32>
    %498 = arith.cmpi sgt, %5, %497 : vector<8x1xi32>
    %cst_118 = arith.constant 1.000000e+00 : f32
    %499 = vector.shape_cast %498 : vector<8x1xi1> to vector<8x1xi1>
    %500 = vector.broadcast %499 : vector<8x1xi1> to vector<8x128xi1>
    %501 = vector.broadcast %cst_118 : f32 to vector<8x128xf32>
    %502 = arith.select %500, %491, %501 : vector<8x128xi1>, vector<8x128xf32>
    %503 = arith.subf %474, %496 : vector<8x128xf32>
    %504 = arith.mulf %502, %503 : vector<8x128xf32>
    %505 = arith.addf %496, %504 : vector<8x128xf32>
    %cst_119 = arith.constant 0.000000e+00 : f32
    %506 = vector.shape_cast %498 : vector<8x1xi1> to vector<8x1xi1>
    %507 = vector.broadcast %506 : vector<8x1xi1> to vector<8x128xi1>
    %508 = vector.broadcast %cst_119 : f32 to vector<8x128xf32>
    %509 = arith.select %507, %505, %508 : vector<8x128xi1>, vector<8x128xf32>
    %c2_120 = arith.constant 2 : index
    %c0_121 = arith.constant 0 : index
    %c0_122 = arith.constant 0 : index
    %510 = vector.load %arg4[%c2_120, %c0_121, %c0_122] : memref<8x8x384xbf16, #tpu.memory_space<vmem>>, vector<1x8x384xbf16>
    %511 = vector.shape_cast %510 : vector<1x8x384xbf16> to vector<8x384xbf16>
    %512 = vector.extract_strided_slice %470 {offsets = [8, 384], sizes = [8, 384], strides = [1, 1]} : vector<16x768xf32> to vector<8x384xf32>
    %513 = vector.extract_strided_slice %464 {offsets = [8, 0], sizes = [8, 128], strides = [1, 1]} : vector<16x128xf32> to vector<8x128xf32>
    %514 = arith.extf %511 : vector<8x384xbf16> to vector<8x384xf32>
    %515 = vector.extract_strided_slice %514 {offsets = [0, 0], sizes = [8, 128], strides = [1, 1]} : vector<8x384xf32> to vector<8x128xf32>
    %516 = vector.extract_strided_slice %512 {offsets = [0, 0], sizes = [8, 128], strides = [1, 1]} : vector<8x384xf32> to vector<8x128xf32>
    %517 = arith.addf %515, %516 : vector<8x128xf32>
    %518 = arith.negf %517 : vector<8x128xf32>
    %519 = math.exp %518 : vector<8x128xf32>
    %cst_123 = arith.constant 1.000000e+00 : f32
    %520 = vector.broadcast %cst_123 : f32 to vector<8x128xf32>
    %521 = arith.addf %520, %519 : vector<8x128xf32>
    %522 = arith.divf %520, %521 : vector<8x128xf32>
    %523 = vector.extract_strided_slice %514 {offsets = [0, 128], sizes = [8, 128], strides = [1, 1]} : vector<8x384xf32> to vector<8x128xf32>
    %524 = vector.extract_strided_slice %512 {offsets = [0, 128], sizes = [8, 128], strides = [1, 1]} : vector<8x384xf32> to vector<8x128xf32>
    %525 = arith.addf %523, %524 : vector<8x128xf32>
    %526 = arith.negf %525 : vector<8x128xf32>
    %527 = math.exp %526 : vector<8x128xf32>
    %cst_124 = arith.constant 1.000000e+00 : f32
    %528 = vector.broadcast %cst_124 : f32 to vector<8x128xf32>
    %529 = arith.addf %528, %527 : vector<8x128xf32>
    %530 = arith.divf %528, %529 : vector<8x128xf32>
    %531 = vector.extract_strided_slice %514 {offsets = [0, 256], sizes = [8, 128], strides = [1, 1]} : vector<8x384xf32> to vector<8x128xf32>
    %532 = vector.extract_strided_slice %512 {offsets = [0, 256], sizes = [8, 128], strides = [1, 1]} : vector<8x384xf32> to vector<8x128xf32>
    %533 = arith.mulf %522, %532 : vector<8x128xf32>
    %534 = arith.addf %531, %533 : vector<8x128xf32>
    %535 = math.tanh %534 : vector<8x128xf32>
    %536 = vector.broadcast %466 : i32 to vector<8x1xi32>
    %537 = arith.cmpi sgt, %5, %536 : vector<8x1xi32>
    %cst_125 = arith.constant 1.000000e+00 : f32
    %538 = vector.shape_cast %537 : vector<8x1xi1> to vector<8x1xi1>
    %539 = vector.broadcast %538 : vector<8x1xi1> to vector<8x128xi1>
    %540 = vector.broadcast %cst_125 : f32 to vector<8x128xf32>
    %541 = arith.select %539, %530, %540 : vector<8x128xi1>, vector<8x128xf32>
    %542 = arith.subf %513, %535 : vector<8x128xf32>
    %543 = arith.mulf %541, %542 : vector<8x128xf32>
    %544 = arith.addf %535, %543 : vector<8x128xf32>
    %cst_126 = arith.constant 0.000000e+00 : f32
    %545 = vector.shape_cast %537 : vector<8x1xi1> to vector<8x1xi1>
    %546 = vector.broadcast %545 : vector<8x1xi1> to vector<8x128xi1>
    %547 = vector.broadcast %cst_126 : f32 to vector<8x128xf32>
    %548 = arith.select %546, %544, %547 : vector<8x128xi1>, vector<8x128xf32>
    %c5_127 = arith.constant 5 : index
    %c0_128 = arith.constant 0 : index
    %c0_129 = arith.constant 0 : index
    %549 = vector.load %arg7[%c5_127, %c0_128, %c0_129] : memref<8x8x128xf32, #tpu.memory_space<vmem>>, vector<1x8x128xf32>
    %550 = vector.shape_cast %549 : vector<1x8x128xf32> to vector<8x128xf32>
    %551 = vector.shape_cast %509 : vector<8x128xf32> to vector<1x8x128xf32>
    tpu.vector_store %arg7[%c5_127, %c0_128, %c0_129], %551 {strides = array<i32>} : memref<8x8x128xf32, #tpu.memory_space<vmem>>, vector<1x8x128xf32>,
    %c2_130 = arith.constant 2 : index
    %c0_131 = arith.constant 0 : index
    %c0_132 = arith.constant 0 : index
    %552 = vector.load %arg8[%c2_130, %c0_131, %c0_132] : memref<8x8x128xf32, #tpu.memory_space<vmem>>, vector<1x8x128xf32>
    %553 = vector.shape_cast %552 : vector<1x8x128xf32> to vector<8x128xf32>
    %554 = vector.shape_cast %548 : vector<8x128xf32> to vector<1x8x128xf32>
    tpu.vector_store %arg8[%c2_130, %c0_131, %c0_132], %554 {strides = array<i32>} : memref<8x8x128xf32, #tpu.memory_space<vmem>>, vector<1x8x128xf32>,
    %555 = tpu.concatenate %505, %544 in 0 : vector<8x128xf32>, vector<8x128xf32> -> vector<16x128xf32>
    %c6_i32_133 = arith.constant 6 : i32
    %556 = arith.addi %6, %c6_i32_133 : i32
    %c1_i32_134 = arith.constant 1 : i32
    %557 = arith.addi %8, %c1_i32_134 : i32
    %558 = arith.truncf %555 : vector<16x128xf32> to vector<16x128xbf16>
    %cst_135 = arith.constant dense<0.000000e+00> : vector<16x768xf32>
    %559 = tpu.matmul %558, %3, %cst_135 {dimension_numbers = #tpu.dot_dimension_numbers<[1], [0], [0], [1], [0, 0, 1, 1], [], []>} : vector<16x128xbf16>, vector<128x768xbf16>, vector<16x768xf32> -> vector<16x768xf32>
    %560 = vector.broadcast %4 : vector<1x768xf32> to vector<16x768xf32>
    %561 = arith.addf %559, %560 : vector<16x768xf32>
    %c6_136 = arith.constant 6 : index
    %c0_137 = arith.constant 0 : index
    %c0_138 = arith.constant 0 : index
    %562 = vector.load %arg3[%c6_136, %c0_137, %c0_138] : memref<8x8x384xbf16, #tpu.memory_space<vmem>>, vector<1x8x384xbf16>
    %563 = vector.shape_cast %562 : vector<1x8x384xbf16> to vector<8x384xbf16>
    %564 = vector.extract_strided_slice %561 {offsets = [0, 0], sizes = [8, 384], strides = [1, 1]} : vector<16x768xf32> to vector<8x384xf32>
    %565 = vector.extract_strided_slice %555 {offsets = [0, 0], sizes = [8, 128], strides = [1, 1]} : vector<16x128xf32> to vector<8x128xf32>
    %566 = arith.extf %563 : vector<8x384xbf16> to vector<8x384xf32>
    %567 = vector.extract_strided_slice %566 {offsets = [0, 0], sizes = [8, 128], strides = [1, 1]} : vector<8x384xf32> to vector<8x128xf32>
    %568 = vector.extract_strided_slice %564 {offsets = [0, 0], sizes = [8, 128], strides = [1, 1]} : vector<8x384xf32> to vector<8x128xf32>
    %569 = arith.addf %567, %568 : vector<8x128xf32>
    %570 = arith.negf %569 : vector<8x128xf32>
    %571 = math.exp %570 : vector<8x128xf32>
    %cst_139 = arith.constant 1.000000e+00 : f32
    %572 = vector.broadcast %cst_139 : f32 to vector<8x128xf32>
    %573 = arith.addf %572, %571 : vector<8x128xf32>
    %574 = arith.divf %572, %573 : vector<8x128xf32>
    %575 = vector.extract_strided_slice %566 {offsets = [0, 128], sizes = [8, 128], strides = [1, 1]} : vector<8x384xf32> to vector<8x128xf32>
    %576 = vector.extract_strided_slice %564 {offsets = [0, 128], sizes = [8, 128], strides = [1, 1]} : vector<8x384xf32> to vector<8x128xf32>
    %577 = arith.addf %575, %576 : vector<8x128xf32>
    %578 = arith.negf %577 : vector<8x128xf32>
    %579 = math.exp %578 : vector<8x128xf32>
    %cst_140 = arith.constant 1.000000e+00 : f32
    %580 = vector.broadcast %cst_140 : f32 to vector<8x128xf32>
    %581 = arith.addf %580, %579 : vector<8x128xf32>
    %582 = arith.divf %580, %581 : vector<8x128xf32>
    %583 = vector.extract_strided_slice %566 {offsets = [0, 256], sizes = [8, 128], strides = [1, 1]} : vector<8x384xf32> to vector<8x128xf32>
    %584 = vector.extract_strided_slice %564 {offsets = [0, 256], sizes = [8, 128], strides = [1, 1]} : vector<8x384xf32> to vector<8x128xf32>
    %585 = arith.mulf %574, %584 : vector<8x128xf32>
    %586 = arith.addf %583, %585 : vector<8x128xf32>
    %587 = math.tanh %586 : vector<8x128xf32>
    %588 = vector.broadcast %556 : i32 to vector<8x1xi32>
    %589 = arith.cmpi sgt, %5, %588 : vector<8x1xi32>
    %cst_141 = arith.constant 1.000000e+00 : f32
    %590 = vector.shape_cast %589 : vector<8x1xi1> to vector<8x1xi1>
    %591 = vector.broadcast %590 : vector<8x1xi1> to vector<8x128xi1>
    %592 = vector.broadcast %cst_141 : f32 to vector<8x128xf32>
    %593 = arith.select %591, %582, %592 : vector<8x128xi1>, vector<8x128xf32>
    %594 = arith.subf %565, %587 : vector<8x128xf32>
    %595 = arith.mulf %593, %594 : vector<8x128xf32>
    %596 = arith.addf %587, %595 : vector<8x128xf32>
    %cst_142 = arith.constant 0.000000e+00 : f32
    %597 = vector.shape_cast %589 : vector<8x1xi1> to vector<8x1xi1>
    %598 = vector.broadcast %597 : vector<8x1xi1> to vector<8x128xi1>
    %599 = vector.broadcast %cst_142 : f32 to vector<8x128xf32>
    %600 = arith.select %598, %596, %599 : vector<8x128xi1>, vector<8x128xf32>
    %c1_143 = arith.constant 1 : index
    %c0_144 = arith.constant 0 : index
    %c0_145 = arith.constant 0 : index
    %601 = vector.load %arg4[%c1_143, %c0_144, %c0_145] : memref<8x8x384xbf16, #tpu.memory_space<vmem>>, vector<1x8x384xbf16>
    %602 = vector.shape_cast %601 : vector<1x8x384xbf16> to vector<8x384xbf16>
    %603 = vector.extract_strided_slice %561 {offsets = [8, 384], sizes = [8, 384], strides = [1, 1]} : vector<16x768xf32> to vector<8x384xf32>
    %604 = vector.extract_strided_slice %555 {offsets = [8, 0], sizes = [8, 128], strides = [1, 1]} : vector<16x128xf32> to vector<8x128xf32>
    %605 = arith.extf %602 : vector<8x384xbf16> to vector<8x384xf32>
    %606 = vector.extract_strided_slice %605 {offsets = [0, 0], sizes = [8, 128], strides = [1, 1]} : vector<8x384xf32> to vector<8x128xf32>
    %607 = vector.extract_strided_slice %603 {offsets = [0, 0], sizes = [8, 128], strides = [1, 1]} : vector<8x384xf32> to vector<8x128xf32>
    %608 = arith.addf %606, %607 : vector<8x128xf32>
    %609 = arith.negf %608 : vector<8x128xf32>
    %610 = math.exp %609 : vector<8x128xf32>
    %cst_146 = arith.constant 1.000000e+00 : f32
    %611 = vector.broadcast %cst_146 : f32 to vector<8x128xf32>
    %612 = arith.addf %611, %610 : vector<8x128xf32>
    %613 = arith.divf %611, %612 : vector<8x128xf32>
    %614 = vector.extract_strided_slice %605 {offsets = [0, 128], sizes = [8, 128], strides = [1, 1]} : vector<8x384xf32> to vector<8x128xf32>
    %615 = vector.extract_strided_slice %603 {offsets = [0, 128], sizes = [8, 128], strides = [1, 1]} : vector<8x384xf32> to vector<8x128xf32>
    %616 = arith.addf %614, %615 : vector<8x128xf32>
    %617 = arith.negf %616 : vector<8x128xf32>
    %618 = math.exp %617 : vector<8x128xf32>
    %cst_147 = arith.constant 1.000000e+00 : f32
    %619 = vector.broadcast %cst_147 : f32 to vector<8x128xf32>
    %620 = arith.addf %619, %618 : vector<8x128xf32>
    %621 = arith.divf %619, %620 : vector<8x128xf32>
    %622 = vector.extract_strided_slice %605 {offsets = [0, 256], sizes = [8, 128], strides = [1, 1]} : vector<8x384xf32> to vector<8x128xf32>
    %623 = vector.extract_strided_slice %603 {offsets = [0, 256], sizes = [8, 128], strides = [1, 1]} : vector<8x384xf32> to vector<8x128xf32>
    %624 = arith.mulf %613, %623 : vector<8x128xf32>
    %625 = arith.addf %622, %624 : vector<8x128xf32>
    %626 = math.tanh %625 : vector<8x128xf32>
    %627 = vector.broadcast %557 : i32 to vector<8x1xi32>
    %628 = arith.cmpi sgt, %5, %627 : vector<8x1xi32>
    %cst_148 = arith.constant 1.000000e+00 : f32
    %629 = vector.shape_cast %628 : vector<8x1xi1> to vector<8x1xi1>
    %630 = vector.broadcast %629 : vector<8x1xi1> to vector<8x128xi1>
    %631 = vector.broadcast %cst_148 : f32 to vector<8x128xf32>
    %632 = arith.select %630, %621, %631 : vector<8x128xi1>, vector<8x128xf32>
    %633 = arith.subf %604, %626 : vector<8x128xf32>
    %634 = arith.mulf %632, %633 : vector<8x128xf32>
    %635 = arith.addf %626, %634 : vector<8x128xf32>
    %cst_149 = arith.constant 0.000000e+00 : f32
    %636 = vector.shape_cast %628 : vector<8x1xi1> to vector<8x1xi1>
    %637 = vector.broadcast %636 : vector<8x1xi1> to vector<8x128xi1>
    %638 = vector.broadcast %cst_149 : f32 to vector<8x128xf32>
    %639 = arith.select %637, %635, %638 : vector<8x128xi1>, vector<8x128xf32>
    %c6_150 = arith.constant 6 : index
    %c0_151 = arith.constant 0 : index
    %c0_152 = arith.constant 0 : index
    %640 = vector.load %arg7[%c6_150, %c0_151, %c0_152] : memref<8x8x128xf32, #tpu.memory_space<vmem>>, vector<1x8x128xf32>
    %641 = vector.shape_cast %640 : vector<1x8x128xf32> to vector<8x128xf32>
    %642 = vector.shape_cast %600 : vector<8x128xf32> to vector<1x8x128xf32>
    tpu.vector_store %arg7[%c6_150, %c0_151, %c0_152], %642 {strides = array<i32>} : memref<8x8x128xf32, #tpu.memory_space<vmem>>, vector<1x8x128xf32>,
    %c1_153 = arith.constant 1 : index
    %c0_154 = arith.constant 0 : index
    %c0_155 = arith.constant 0 : index
    %643 = vector.load %arg8[%c1_153, %c0_154, %c0_155] : memref<8x8x128xf32, #tpu.memory_space<vmem>>, vector<1x8x128xf32>
    %644 = vector.shape_cast %643 : vector<1x8x128xf32> to vector<8x128xf32>
    %645 = vector.shape_cast %639 : vector<8x128xf32> to vector<1x8x128xf32>
    tpu.vector_store %arg8[%c1_153, %c0_154, %c0_155], %645 {strides = array<i32>} : memref<8x8x128xf32, #tpu.memory_space<vmem>>, vector<1x8x128xf32>,
    %646 = tpu.concatenate %596, %635 in 0 : vector<8x128xf32>, vector<8x128xf32> -> vector<16x128xf32>
    %c7_i32_156 = arith.constant 7 : i32
    %647 = arith.addi %6, %c7_i32_156 : i32
    %c0_i32_157 = arith.constant 0 : i32
    %648 = arith.addi %8, %c0_i32_157 : i32
    %649 = arith.truncf %646 : vector<16x128xf32> to vector<16x128xbf16>
    %cst_158 = arith.constant dense<0.000000e+00> : vector<16x768xf32>
    %650 = tpu.matmul %649, %3, %cst_158 {dimension_numbers = #tpu.dot_dimension_numbers<[1], [0], [0], [1], [0, 0, 1, 1], [], []>} : vector<16x128xbf16>, vector<128x768xbf16>, vector<16x768xf32> -> vector<16x768xf32>
    %651 = vector.broadcast %4 : vector<1x768xf32> to vector<16x768xf32>
    %652 = arith.addf %650, %651 : vector<16x768xf32>
    %c7_159 = arith.constant 7 : index
    %c0_160 = arith.constant 0 : index
    %c0_161 = arith.constant 0 : index
    %653 = vector.load %arg3[%c7_159, %c0_160, %c0_161] : memref<8x8x384xbf16, #tpu.memory_space<vmem>>, vector<1x8x384xbf16>
    %654 = vector.shape_cast %653 : vector<1x8x384xbf16> to vector<8x384xbf16>
    %655 = vector.extract_strided_slice %652 {offsets = [0, 0], sizes = [8, 384], strides = [1, 1]} : vector<16x768xf32> to vector<8x384xf32>
    %656 = vector.extract_strided_slice %646 {offsets = [0, 0], sizes = [8, 128], strides = [1, 1]} : vector<16x128xf32> to vector<8x128xf32>
    %657 = arith.extf %654 : vector<8x384xbf16> to vector<8x384xf32>
    %658 = vector.extract_strided_slice %657 {offsets = [0, 0], sizes = [8, 128], strides = [1, 1]} : vector<8x384xf32> to vector<8x128xf32>
    %659 = vector.extract_strided_slice %655 {offsets = [0, 0], sizes = [8, 128], strides = [1, 1]} : vector<8x384xf32> to vector<8x128xf32>
    %660 = arith.addf %658, %659 : vector<8x128xf32>
    %661 = arith.negf %660 : vector<8x128xf32>
    %662 = math.exp %661 : vector<8x128xf32>
    %cst_162 = arith.constant 1.000000e+00 : f32
    %663 = vector.broadcast %cst_162 : f32 to vector<8x128xf32>
    %664 = arith.addf %663, %662 : vector<8x128xf32>
    %665 = arith.divf %663, %664 : vector<8x128xf32>
    %666 = vector.extract_strided_slice %657 {offsets = [0, 128], sizes = [8, 128], strides = [1, 1]} : vector<8x384xf32> to vector<8x128xf32>
    %667 = vector.extract_strided_slice %655 {offsets = [0, 128], sizes = [8, 128], strides = [1, 1]} : vector<8x384xf32> to vector<8x128xf32>
    %668 = arith.addf %666, %667 : vector<8x128xf32>
    %669 = arith.negf %668 : vector<8x128xf32>
    %670 = math.exp %669 : vector<8x128xf32>
    %cst_163 = arith.constant 1.000000e+00 : f32
    %671 = vector.broadcast %cst_163 : f32 to vector<8x128xf32>
    %672 = arith.addf %671, %670 : vector<8x128xf32>
    %673 = arith.divf %671, %672 : vector<8x128xf32>
    %674 = vector.extract_strided_slice %657 {offsets = [0, 256], sizes = [8, 128], strides = [1, 1]} : vector<8x384xf32> to vector<8x128xf32>
    %675 = vector.extract_strided_slice %655 {offsets = [0, 256], sizes = [8, 128], strides = [1, 1]} : vector<8x384xf32> to vector<8x128xf32>
    %676 = arith.mulf %665, %675 : vector<8x128xf32>
    %677 = arith.addf %674, %676 : vector<8x128xf32>
    %678 = math.tanh %677 : vector<8x128xf32>
    %679 = vector.broadcast %647 : i32 to vector<8x1xi32>
    %680 = arith.cmpi sgt, %5, %679 : vector<8x1xi32>
    %cst_164 = arith.constant 1.000000e+00 : f32
    %681 = vector.shape_cast %680 : vector<8x1xi1> to vector<8x1xi1>
    %682 = vector.broadcast %681 : vector<8x1xi1> to vector<8x128xi1>
    %683 = vector.broadcast %cst_164 : f32 to vector<8x128xf32>
    %684 = arith.select %682, %673, %683 : vector<8x128xi1>, vector<8x128xf32>
    %685 = arith.subf %656, %678 : vector<8x128xf32>
    %686 = arith.mulf %684, %685 : vector<8x128xf32>
    %687 = arith.addf %678, %686 : vector<8x128xf32>
    %cst_165 = arith.constant 0.000000e+00 : f32
    %688 = vector.shape_cast %680 : vector<8x1xi1> to vector<8x1xi1>
    %689 = vector.broadcast %688 : vector<8x1xi1> to vector<8x128xi1>
    %690 = vector.broadcast %cst_165 : f32 to vector<8x128xf32>
    %691 = arith.select %689, %687, %690 : vector<8x128xi1>, vector<8x128xf32>
    %c0_166 = arith.constant 0 : index
    %c0_167 = arith.constant 0 : index
    %c0_168 = arith.constant 0 : index
    %692 = vector.load %arg4[%c0_166, %c0_167, %c0_168] : memref<8x8x384xbf16, #tpu.memory_space<vmem>>, vector<1x8x384xbf16>
    %693 = vector.shape_cast %692 : vector<1x8x384xbf16> to vector<8x384xbf16>
    %694 = vector.extract_strided_slice %652 {offsets = [8, 384], sizes = [8, 384], strides = [1, 1]} : vector<16x768xf32> to vector<8x384xf32>
    %695 = vector.extract_strided_slice %646 {offsets = [8, 0], sizes = [8, 128], strides = [1, 1]} : vector<16x128xf32> to vector<8x128xf32>
    %696 = arith.extf %693 : vector<8x384xbf16> to vector<8x384xf32>
    %697 = vector.extract_strided_slice %696 {offsets = [0, 0], sizes = [8, 128], strides = [1, 1]} : vector<8x384xf32> to vector<8x128xf32>
    %698 = vector.extract_strided_slice %694 {offsets = [0, 0], sizes = [8, 128], strides = [1, 1]} : vector<8x384xf32> to vector<8x128xf32>
    %699 = arith.addf %697, %698 : vector<8x128xf32>
    %700 = arith.negf %699 : vector<8x128xf32>
    %701 = math.exp %700 : vector<8x128xf32>
    %cst_169 = arith.constant 1.000000e+00 : f32
    %702 = vector.broadcast %cst_169 : f32 to vector<8x128xf32>
    %703 = arith.addf %702, %701 : vector<8x128xf32>
    %704 = arith.divf %702, %703 : vector<8x128xf32>
    %705 = vector.extract_strided_slice %696 {offsets = [0, 128], sizes = [8, 128], strides = [1, 1]} : vector<8x384xf32> to vector<8x128xf32>
    %706 = vector.extract_strided_slice %694 {offsets = [0, 128], sizes = [8, 128], strides = [1, 1]} : vector<8x384xf32> to vector<8x128xf32>
    %707 = arith.addf %705, %706 : vector<8x128xf32>
    %708 = arith.negf %707 : vector<8x128xf32>
    %709 = math.exp %708 : vector<8x128xf32>
    %cst_170 = arith.constant 1.000000e+00 : f32
    %710 = vector.broadcast %cst_170 : f32 to vector<8x128xf32>
    %711 = arith.addf %710, %709 : vector<8x128xf32>
    %712 = arith.divf %710, %711 : vector<8x128xf32>
    %713 = vector.extract_strided_slice %696 {offsets = [0, 256], sizes = [8, 128], strides = [1, 1]} : vector<8x384xf32> to vector<8x128xf32>
    %714 = vector.extract_strided_slice %694 {offsets = [0, 256], sizes = [8, 128], strides = [1, 1]} : vector<8x384xf32> to vector<8x128xf32>
    %715 = arith.mulf %704, %714 : vector<8x128xf32>
    %716 = arith.addf %713, %715 : vector<8x128xf32>
    %717 = math.tanh %716 : vector<8x128xf32>
    %718 = vector.broadcast %648 : i32 to vector<8x1xi32>
    %719 = arith.cmpi sgt, %5, %718 : vector<8x1xi32>
    %cst_171 = arith.constant 1.000000e+00 : f32
    %720 = vector.shape_cast %719 : vector<8x1xi1> to vector<8x1xi1>
    %721 = vector.broadcast %720 : vector<8x1xi1> to vector<8x128xi1>
    %722 = vector.broadcast %cst_171 : f32 to vector<8x128xf32>
    %723 = arith.select %721, %712, %722 : vector<8x128xi1>, vector<8x128xf32>
    %724 = arith.subf %695, %717 : vector<8x128xf32>
    %725 = arith.mulf %723, %724 : vector<8x128xf32>
    %726 = arith.addf %717, %725 : vector<8x128xf32>
    %cst_172 = arith.constant 0.000000e+00 : f32
    %727 = vector.shape_cast %719 : vector<8x1xi1> to vector<8x1xi1>
    %728 = vector.broadcast %727 : vector<8x1xi1> to vector<8x128xi1>
    %729 = vector.broadcast %cst_172 : f32 to vector<8x128xf32>
    %730 = arith.select %728, %726, %729 : vector<8x128xi1>, vector<8x128xf32>
    %c7_173 = arith.constant 7 : index
    %c0_174 = arith.constant 0 : index
    %c0_175 = arith.constant 0 : index
    %731 = vector.load %arg7[%c7_173, %c0_174, %c0_175] : memref<8x8x128xf32, #tpu.memory_space<vmem>>, vector<1x8x128xf32>
    %732 = vector.shape_cast %731 : vector<1x8x128xf32> to vector<8x128xf32>
    %733 = vector.shape_cast %691 : vector<8x128xf32> to vector<1x8x128xf32>
    tpu.vector_store %arg7[%c7_173, %c0_174, %c0_175], %733 {strides = array<i32>} : memref<8x8x128xf32, #tpu.memory_space<vmem>>, vector<1x8x128xf32>,
    %c0_176 = arith.constant 0 : index
    %c0_177 = arith.constant 0 : index
    %c0_178 = arith.constant 0 : index
    %734 = vector.load %arg8[%c0_176, %c0_177, %c0_178] : memref<8x8x128xf32, #tpu.memory_space<vmem>>, vector<1x8x128xf32>
    %735 = vector.shape_cast %734 : vector<1x8x128xf32> to vector<8x128xf32>
    %736 = vector.shape_cast %730 : vector<8x128xf32> to vector<1x8x128xf32>
    tpu.vector_store %arg8[%c0_176, %c0_177, %c0_178], %736 {strides = array<i32>} : memref<8x8x128xf32, #tpu.memory_space<vmem>>, vector<1x8x128xf32>,
    %737 = tpu.concatenate %687, %726 in 0 : vector<8x128xf32>, vector<8x128xf32> -> vector<16x128xf32>
    %c0_179 = arith.constant 0 : index
    %c0_180 = arith.constant 0 : index
    %738 = vector.load %arg10[%c0_179, %c0_180] : memref<16x128xf32, #tpu.memory_space<vmem>>, vector<16x128xf32>
    tpu.vector_store %arg10[%c0_179, %c0_180], %737 {strides = array<i32>} : memref<16x128xf32, #tpu.memory_space<vmem>>, vector<16x128xf32>,
    %c0_i32_181 = arith.constant 0 : i32
    %739 = arith.cmpi eq, %arg1, %c0_i32_181 : i32
    %740 = arith.extui %739 : i1 to i32
    %c0_i32_182 = arith.constant 0 : i32
    %741 = arith.cmpi ne, %740, %c0_i32_182 : i32
    scf.if %741 {
      %742 = vector.extract_strided_slice %737 {offsets = [0, 0], sizes = [8, 128], strides = [1, 1]} : vector<16x128xf32> to vector<8x128xf32>
      %743 = vector.extract_strided_slice %737 {offsets = [8, 0], sizes = [8, 128], strides = [1, 1]} : vector<16x128xf32> to vector<8x128xf32>
      %744 = tpu.concatenate %742, %743 in 1 : vector<8x128xf32>, vector<8x128xf32> -> vector<8x256xf32>
      %c0_183 = arith.constant 0 : index
      %c0_184 = arith.constant 0 : index
      %745 = vector.load %arg9[%c0_183, %c0_184] : memref<8x256xf32, #tpu.memory_space<vmem>>, vector<8x256xf32>
      tpu.vector_store %arg9[%c0_183, %c0_184], %744 {strides = array<i32>} : memref<8x256xf32, #tpu.memory_space<vmem>>, vector<8x256xf32>,
    } else {
    }
    return
  }
  func.func @transform_0(%arg0: i32, %arg1: i32) -> (i32, i32) {
    %c0_i32 = arith.constant 0 : i32
    %c0_i32_0 = arith.constant 0 : i32
    return %arg0, %c0_i32 : i32, i32
  }
  func.func @transform_1(%arg0: i32, %arg1: i32) -> (i32, i32, i32) {
    %c0_i32 = arith.constant 0 : i32
    %c0_i32_0 = arith.constant 0 : i32
    return %arg1, %arg0, %c0_i32 : i32, i32, i32
  }
  func.func @transform_2(%arg0: i32, %arg1: i32) -> (i32, i32, i32) {
    %c0_i32 = arith.constant 0 : i32
    %0 = arith.subi %c0_i32, %arg1 : i32
    %c1_i32 = arith.constant 1 : i32
    %c0_i32_0 = arith.constant 0 : i32
    return %0, %arg0, %c1_i32 : i32, i32, i32
  }
  func.func @transform_3(%arg0: i32, %arg1: i32) -> (i32, i32) {
    %c0_i32 = arith.constant 0 : i32
    %c0_i32_0 = arith.constant 0 : i32
    %c0_i32_1 = arith.constant 0 : i32
    return %c0_i32, %c0_i32_0 : i32, i32
  }
  func.func @transform_4(%arg0: i32, %arg1: i32) -> (i32, i32) {
    %c0_i32 = arith.constant 0 : i32
    %c0_i32_0 = arith.constant 0 : i32
    %c0_i32_1 = arith.constant 0 : i32
    return %c0_i32, %c0_i32_0 : i32, i32
  }
  func.func @transform_5(%arg0: i32, %arg1: i32) -> (i32, i32, i32) {
    %c0_i32 = arith.constant 0 : i32
    %c0_i32_0 = arith.constant 0 : i32
    return %arg1, %arg0, %c0_i32 : i32, i32, i32
  }
  func.func @transform_6(%arg0: i32, %arg1: i32) -> (i32, i32, i32) {
    %c0_i32 = arith.constant 0 : i32
    %0 = arith.subi %c0_i32, %arg1 : i32
    %c0_i32_0 = arith.constant 0 : i32
    %c0_i32_1 = arith.constant 0 : i32
    return %0, %arg0, %c0_i32_0 : i32, i32, i32
  }
  func.func @transform_7(%arg0: i32, %arg1: i32) -> (i32, i32) {
    %c0_i32 = arith.constant 0 : i32
    %c0_i32_0 = arith.constant 0 : i32
    return %arg0, %c0_i32 : i32, i32
  }
}

</mosaic_0001>

<llo_original>
// kernel: encoder_forward.1
$region0: #{encoder_forward.1}
  #allocation0 [shape = 'u32[]', space=smem, size = 0x4, offset = 0x4, fixed_abs, tag = 'smem constant byte address 0x4 - core index']
  #allocation1 [shape = 'u32[144,128]{1,0:T(1,128)}', space=vmem, size = 0x12000, scoped, tag = 'internal scratch']
  #allocation2 [shape = 'f32[16,128]{1,0:T(8,128)}', space=vmem, size = 0x2000, scoped, tag = 'scratch operand']
  %s0 = inlined_call_operand.vmem [shape: s32[8,1], index: 0, kind: input, shape index: {}]
  %s1 = inlined_call_operand.vmem [shape: bf16[8,8,768], index: 1, kind: input, shape index: {}, may-alias: {1,2}]
  %s2 = inlined_call_operand.vmem [shape: bf16[8,8,768], index: 2, kind: input, shape index: {}, may-alias: {1,2}]
  %s3 = inlined_call_operand.vmem [shape: bf16[128,768], index: 3, kind: input, shape index: {}]
  %s4 = inlined_call_operand.vmem [shape: f32[1,768], index: 4, kind: input, shape index: {}]
  %s5 = inlined_call_operand.vmem [shape: f32[8,8,128], index: 5, kind: output, shape index: {0}]
  %s6 = inlined_call_operand.vmem [shape: f32[8,8,128], index: 6, kind: output, shape index: {1}]
  %s7 = inlined_call_operand.vmem [shape: f32[8,256], index: 7, kind: output, shape index: {2}]
  %8 = xla_tuple %s5, %s6, %s7
  %s9 = sld [smem:[#allocation0]]
  $region106: #{encoder_forward.1} parent=0
    _
  %s11 = ssub.s32 1, %s9
  %s12 = scalar_select 0, %s11, %s9
  $region1: #{encoder_forward.1} parent=0
    #allocation3 [shape = 'u8[49152]{0}', space=vmem, size = 0xc000, scoped, tag = 'input window, operand 1, single buffered']
    #allocation4 [shape = 'u8[49152]{0}', space=vmem, size = 0xc000, scoped, tag = 'input window, operand 2, single buffered']
    // Predicated region
    $region2: #{encoder_forward.1} parent=1 // pred_check
      _
    $region3: #{encoder_forward.1} parent=1 // pred_check_branch
      %14 = sbr.rel (0) target = $region5
    $region4: #{encoder_forward.1} parent=1 // pred_region
      _
    $region5: #{encoder_forward.1} parent=1 // pred_fallthru
      _
    // Predicated region
    $region6: #{encoder_forward.1} parent=1 // pred_check
      _
    $region7: #{encoder_forward.1} parent=1 // pred_check_branch
      %16 = sbr.rel (0) target = $region9
    $region8: #{encoder_forward.1} parent=1 // pred_region
      // Predicated region
      $region10: #{encoder_forward.1} parent=8 // pred_check
        _
      $region11: #{encoder_forward.1} parent=8 // pred_check_branch
        %18 = sbr.rel (0) target = $region13
      $region12: #{encoder_forward.1} parent=8 // pred_region
        // Predicated region
        $region14: #{encoder_forward.1} parent=12 // pred_check
          _
        $region15: #{encoder_forward.1} parent=12 // pred_check_branch
          %20 = sbr.rel (0) target = $region17
        $region16: #{encoder_forward.1} parent=12 // pred_region
          %s21 = scalar_lea.vmem %s1, 8
          %s22 = scalar_lea.vmem [#allocation3], 8
          loop: start=0, step=1, limit=1
          $region18: #{encoder_forward.1} parent=16 // loop_pre_header
            _
          $region19: #{encoder_forward.1} parent=16 // loop_header
            %s24 = sphi 0, %s28
            %p25 = scmp.ge.s32.totalorder %s24, 1
            %s29 = sphi %s1, %s1
            %s30 = sphi [#allocation3], [#allocation3]
          $region20: #{encoder_forward.1} parent=16 // loop_header_branch
            %27 = sbr.rel (%p25) target = $region24
          $region21: #{encoder_forward.1} parent=16 // loop_body
            %v31 = vld [vmem:[%s29] sm:$0xff]
            %32 = vst [vmem:[%s30] sm:$0xff] %v31
            %v33 = vld [vmem:[%s29 + $0x18] sm:$0xff]
            %34 = vst [vmem:[%s30 + $0xc] sm:$0xff] %v33
            %v35 = vld [vmem:[%s29 + $0x30] sm:$0xff]
            %36 = vst [vmem:[%s30 + $0x18] sm:$0xff] %v35
            %v37 = vld [vmem:[%s29 + $0x48] sm:$0xff]
            %38 = vst [vmem:[%s30 + $0x24] sm:$0xff] %v37
            %v39 = vld [vmem:[%s29 + $0x60] sm:$0xff]
            %40 = vst [vmem:[%s30 + $0x30] sm:$0xff] %v39
            %v41 = vld [vmem:[%s29 + $0x78] sm:$0xff]
            %42 = vst [vmem:[%s30 + $0x3c] sm:$0xff] %v41
            %v43 = vld [vmem:[%s29 + $0x90] sm:$0xff]
            %44 = vst [vmem:[%s30 + $0x48] sm:$0xff] %v43
            %v45 = vld [vmem:[%s29 + $0xa8] sm:$0xff]
            %46 = vst [vmem:[%s30 + $0x54] sm:$0xff] %v45
          $region22: #{encoder_forward.1} parent=16 // loop_footer
            %s28 = sadd.s32 1, %s24
          $region23: #{encoder_forward.1} parent=16 // loop_footer_branch
            %23 = sbr.rel target = $region19
          $region24: #{encoder_forward.1} parent=16 // loop_exit
            _
          loop: start=0, step=1, limit=1
          $region25: #{encoder_forward.1} parent=16 // loop_pre_header
            _
          $region26: #{encoder_forward.1} parent=16 // loop_header
            %s49 = sphi 0, %s53
            %p50 = scmp.ge.s32.totalorder %s49, 1
            %s54 = sphi %s21, %s21
            %s55 = sphi %s22, %s22
          $region27: #{encoder_forward.1} parent=16 // loop_header_branch
            %52 = sbr.rel (%p50) target = $region31
          $region28: #{encoder_forward.1} parent=16 // loop_body
            %v56 = vld [vmem:[%s54] sm:$0xf]
            %57 = vst [vmem:[%s55] sm:$0xf] %v56
            %v58 = vld [vmem:[%s54 + $0x18] sm:$0xf]
            %59 = vst [vmem:[%s55 + $0xc] sm:$0xf] %v58
            %v60 = vld [vmem:[%s54 + $0x30] sm:$0xf]
            %61 = vst [vmem:[%s55 + $0x18] sm:$0xf] %v60
            %v62 = vld [vmem:[%s54 + $0x48] sm:$0xf]
            %63 = vst [vmem:[%s55 + $0x24] sm:$0xf] %v62
            %v64 = vld [vmem:[%s54 + $0x60] sm:$0xf]
            %65 = vst [vmem:[%s55 + $0x30] sm:$0xf] %v64
            %v66 = vld [vmem:[%s54 + $0x78] sm:$0xf]
            %67 = vst [vmem:[%s55 + $0x3c] sm:$0xf] %v66
            %v68 = vld [vmem:[%s54 + $0x90] sm:$0xf]
            %69 = vst [vmem:[%s55 + $0x48] sm:$0xf] %v68
            %v70 = vld [vmem:[%s54 + $0xa8] sm:$0xf]
            %71 = vst [vmem:[%s55 + $0x54] sm:$0xf] %v70
          $region29: #{encoder_forward.1} parent=16 // loop_footer
            %s53 = sadd.s32 1, %s49
          $region30: #{encoder_forward.1} parent=16 // loop_footer_branch
            %48 = sbr.rel target = $region26
          $region31: #{encoder_forward.1} parent=16 // loop_exit
            _
        $region17: #{encoder_forward.1} parent=12 // pred_fallthru
          _
      $region13: #{encoder_forward.1} parent=8 // pred_fallthru
        _
      %72 = vnop
    $region9: #{encoder_forward.1} parent=1 // pred_fallthru
      _
    // Predicated region
    $region32: #{encoder_forward.1} parent=1 // pred_check
      _
    $region33: #{encoder_forward.1} parent=1 // pred_check_branch
      %74 = sbr.rel (0) target = $region35
    $region34: #{encoder_forward.1} parent=1 // pred_region
      %s75 = ssub.s32 0, 0
      %s76 = smul.u32 8, %s75
      %s77 = smul.addr %s76, 6
      %s78 = sadd.s32 3, %s77
      %s79 = smul.addr %s78, 4
      %s80 = scalar_lea.vmem %s2, %s79
      // Predicated region
      $region36: #{encoder_forward.1} parent=34 // pred_check
        _
      $region37: #{encoder_forward.1} parent=34 // pred_check_branch
        %82 = sbr.rel (0) target = $region39
      $region38: #{encoder_forward.1} parent=34 // pred_region
        // Predicated region
        $region40: #{encoder_forward.1} parent=38 // pred_check
          _
        $region41: #{encoder_forward.1} parent=38 // pred_check_branch
          %84 = sbr.rel (0) target = $region43
        $region42: #{encoder_forward.1} parent=38 // pred_region
          %s85 = scalar_lea.vmem %s80, 8
          %s86 = scalar_lea.vmem [#allocation4], 8
          loop: start=0, step=1, limit=1
          $region44: #{encoder_forward.1} parent=42 // loop_pre_header
            _
          $region45: #{encoder_forward.1} parent=42 // loop_header
            %s88 = sphi 0, %s92
            %p89 = scmp.ge.s32.totalorder %s88, 1
            %s93 = sphi %s80, %s80
            %s94 = sphi [#allocation4], [#allocation4]
          $region46: #{encoder_forward.1} parent=42 // loop_header_branch
            %91 = sbr.rel (%p89) target = $region50
          $region47: #{encoder_forward.1} parent=42 // loop_body
            %v95 = vld [vmem:[%s93] sm:$0xff]
            %96 = vst [vmem:[%s94] sm:$0xff] %v95
            %v97 = vld [vmem:[%s93 + $0x18] sm:$0xff]
            %98 = vst [vmem:[%s94 + $0xc] sm:$0xff] %v97
            %v99 = vld [vmem:[%s93 + $0x30] sm:$0xff]
            %100 = vst [vmem:[%s94 + $0x18] sm:$0xff] %v99
            %v101 = vld [vmem:[%s93 + $0x48] sm:$0xff]
            %102 = vst [vmem:[%s94 + $0x24] sm:$0xff] %v101
            %v103 = vld [vmem:[%s93 + $0x60] sm:$0xff]
            %104 = vst [vmem:[%s94 + $0x30] sm:$0xff] %v103
            %v105 = vld [vmem:[%s93 + $0x78] sm:$0xff]
            %106 = vst [vmem:[%s94 + $0x3c] sm:$0xff] %v105
            %v107 = vld [vmem:[%s93 + $0x90] sm:$0xff]
            %108 = vst [vmem:[%s94 + $0x48] sm:$0xff] %v107
            %v109 = vld [vmem:[%s93 + $0xa8] sm:$0xff]
            %110 = vst [vmem:[%s94 + $0x54] sm:$0xff] %v109
          $region48: #{encoder_forward.1} parent=42 // loop_footer
            %s92 = sadd.s32 1, %s88
          $region49: #{encoder_forward.1} parent=42 // loop_footer_branch
            %87 = sbr.rel target = $region45
          $region50: #{encoder_forward.1} parent=42 // loop_exit
            _
          loop: start=0, step=1, limit=1
          $region51: #{encoder_forward.1} parent=42 // loop_pre_header
            _
          $region52: #{encoder_forward.1} parent=42 // loop_header
            %s113 = sphi 0, %s117
            %p114 = scmp.ge.s32.totalorder %s113, 1
            %s118 = sphi %s85, %s85
            %s119 = sphi %s86, %s86
          $region53: #{encoder_forward.1} parent=42 // loop_header_branch
            %116 = sbr.rel (%p114) target = $region57
          $region54: #{encoder_forward.1} parent=42 // loop_body
            %v120 = vld [vmem:[%s118] sm:$0xf]
            %121 = vst [vmem:[%s119] sm:$0xf] %v120
            %v122 = vld [vmem:[%s118 + $0x18] sm:$0xf]
            %123 = vst [vmem:[%s119 + $0xc] sm:$0xf] %v122
            %v124 = vld [vmem:[%s118 + $0x30] sm:$0xf]
            %125 = vst [vmem:[%s119 + $0x18] sm:$0xf] %v124
            %v126 = vld [vmem:[%s118 + $0x48] sm:$0xf]
            %127 = vst [vmem:[%s119 + $0x24] sm:$0xf] %v126
            %v128 = vld [vmem:[%s118 + $0x60] sm:$0xf]
            %129 = vst [vmem:[%s119 + $0x30] sm:$0xf] %v128
            %v130 = vld [vmem:[%s118 + $0x78] sm:$0xf]
            %131 = vst [vmem:[%s119 + $0x3c] sm:$0xf] %v130
            %v132 = vld [vmem:[%s118 + $0x90] sm:$0xf]
            %133 = vst [vmem:[%s119 + $0x48] sm:$0xf] %v132
            %v134 = vld [vmem:[%s118 + $0xa8] sm:$0xf]
            %135 = vst [vmem:[%s119 + $0x54] sm:$0xf] %v134
          $region55: #{encoder_forward.1} parent=42 // loop_footer
            %s117 = sadd.s32 1, %s113
          $region56: #{encoder_forward.1} parent=42 // loop_footer_branch
            %112 = sbr.rel target = $region52
          $region57: #{encoder_forward.1} parent=42 // loop_exit
            _
        $region43: #{encoder_forward.1} parent=38 // pred_fallthru
          _
      $region39: #{encoder_forward.1} parent=34 // pred_fallthru
        _
      %136 = vnop
    $region35: #{encoder_forward.1} parent=1 // pred_fallthru
      _
    // Predicated region
    $region58: #{encoder_forward.1} parent=1 // pred_check
      _
    $region59: #{encoder_forward.1} parent=1 // pred_check_branch
      %138 = sbr.rel (0) target = $region61
    $region60: #{encoder_forward.1} parent=1 // pred_region
      _
    $region61: #{encoder_forward.1} parent=1 // pred_fallthru
      _
    // Predicated region
    $region62: #{encoder_forward.1} parent=1 // pred_check
      _
    $region63: #{encoder_forward.1} parent=1 // pred_check_branch
      %140 = sbr.rel (0) target = $region65
    $region64: #{encoder_forward.1} parent=1 // pred_region
      _
    $region65: #{encoder_forward.1} parent=1 // pred_fallthru
      _
    // Predicated region
    $region66: #{encoder_forward.1} parent=1 // pred_check
      _
    $region67: #{encoder_forward.1} parent=1 // pred_check_branch
      %142 = sbr.rel (0) target = $region69
    $region68: #{encoder_forward.1} parent=1 // pred_region
      _
    $region69: #{encoder_forward.1} parent=1 // pred_fallthru
      _
    // Predicated region
    $region70: #{encoder_forward.1} parent=1 // pred_check
      _
    $region71: #{encoder_forward.1} parent=1 // pred_check_branch
      %144 = sbr.rel (0) target = $region73
    $region72: #{encoder_forward.1} parent=1 // pred_region
      _
    $region73: #{encoder_forward.1} parent=1 // pred_fallthru
      _
    %s145 = ssub.s32 0, 0
    %s146 = smul.u32 8, %s145
    %p147 = scmp.lt.s32.totalorder %s146, 7
    %s148 = scalar_select %p147, %s146, 7
    %s149 = smul.addr %s148, 8
    %s150 = scalar_lea.vmem %s6, %s149
    %s151 = ssub.s32 0, 0
    %s152 = smul.u32 8, %s151
    %s153 = ssub.s32 0, 0
    %s154 = smul.u32 8, %s153
    %p155 = scmp.lt.s32.totalorder %s154, 7
    %s156 = scalar_select %p155, %s154, 7
    %s157 = smul.addr %s156, 8
    %s158 = scalar_lea.vmem %s6, %s157
    %s159 = ssub.s32 0, 0
    %s160 = smul.u32 8, %s159
    %p162 = scmp.eq.s32.totalorder 0, 0
    // Predicated region
    $region74: #{encoder_forward.1} parent=1 // pred_check
      %p163 = pneg %p162
    $region75: #{encoder_forward.1} parent=1 // pred_check_branch
      %165 = sbr.rel (%p163) target = $region77
    $region76: #{encoder_forward.1} parent=1 // pred_region
      %166 = vst [vmem:[#allocation2] sm:$0xff] 0.0
      %167 = vst [vmem:[#allocation2 + $0x8] sm:$0xff] 0.0
    $region77: #{encoder_forward.1} parent=1 // pred_fallthru
      _
    %v168 = vld [vmem:[%s3] sm:$0xff]
    %v169 = vld [vmem:[%s3 + $0x8] sm:$0xff]
    %v170 = vld [vmem:[%s3 + $0x10] sm:$0xff]
    %v171 = vld [vmem:[%s3 + $0x18] sm:$0xff]
    %v172 = vld [vmem:[%s3 + $0x20] sm:$0xff]
    %v173 = vld [vmem:[%s3 + $0x28] sm:$0xff]
    %v174 = vld [vmem:[%s3 + $0x30] sm:$0xff]
    %v175 = vld [vmem:[%s3 + $0x38] sm:$0xff]
    %v176 = vld [vmem:[%s3 + $0x40] sm:$0xff]
    %v177 = vld [vmem:[%s3 + $0x48] sm:$0xff]
    %v178 = vld [vmem:[%s3 + $0x50] sm:$0xff]
    %v179 = vld [vmem:[%s3 + $0x58] sm:$0xff]
    %v180 = vld [vmem:[%s3 + $0x60] sm:$0xff]
    %v181 = vld [vmem:[%s3 + $0x68] sm:$0xff]
    %v182 = vld [vmem:[%s3 + $0x70] sm:$0xff]
    %v183 = vld [vmem:[%s3 + $0x78] sm:$0xff]
    %v184 = vld [vmem:[%s3 + $0x80] sm:$0xff]
    %v185 = vld [vmem:[%s3 + $0x88] sm:$0xff]
    %v186 = vld [vmem:[%s3 + $0x90] sm:$0xff]
    %v187 = vld [vmem:[%s3 + $0x98] sm:$0xff]
    %v188 = vld [vmem:[%s3 + $0xa0] sm:$0xff]
    %v189 = vld [vmem:[%s3 + $0xa8] sm:$0xff]
    %v190 = vld [vmem:[%s3 + $0xb0] sm:$0xff]
    %v191 = vld [vmem:[%s3 + $0xb8] sm:$0xff]
    %v192 = vld [vmem:[%s3 + $0xc0] sm:$0xff]
    %v193 = vld [vmem:[%s3 + $0xc8] sm:$0xff]
    %v194 = vld [vmem:[%s3 + $0xd0] sm:$0xff]
    %v195 = vld [vmem:[%s3 + $0xd8] sm:$0xff]
    %v196 = vld [vmem:[%s3 + $0xe0] sm:$0xff]
    %v197 = vld [vmem:[%s3 + $0xe8] sm:$0xff]
    %v198 = vld [vmem:[%s3 + $0xf0] sm:$0xff]
    %v199 = vld [vmem:[%s3 + $0xf8] sm:$0xff]
    %v200 = vld [vmem:[%s3 + $0x100] sm:$0xff]
    %v201 = vld [vmem:[%s3 + $0x108] sm:$0xff]
    %v202 = vld [vmem:[%s3 + $0x110] sm:$0xff]
    %v203 = vld [vmem:[%s3 + $0x118] sm:$0xff]
    %v204 = vld [vmem:[%s3 + $0x120] sm:$0xff]
    %v205 = vld [vmem:[%s3 + $0x128] sm:$0xff]
    %v206 = vld [vmem:[%s3 + $0x130] sm:$0xff]
    %v207 = vld [vmem:[%s3 + $0x138] sm:$0xff]
    %v208 = vld [vmem:[%s3 + $0x140] sm:$0xff]
    %v209 = vld [vmem:[%s3 + $0x148] sm:$0xff]
    %v210 = vld [vmem:[%s3 + $0x150] sm:$0xff]
    %v211 = vld [vmem:[%s3 + $0x158] sm:$0xff]
    %v212 = vld [vmem:[%s3 + $0x160] sm:$0xff]
    %v213 = vld [vmem:[%s3 + $0x168] sm:$0xff]
    %v214 = vld [vmem:[%s3 + $0x170] sm:$0xff]
    %v215 = vld [vmem:[%s3 + $0x178] sm:$0xff]
    %v216 = vld [vmem:[%s4] sm:$0x3f]
    %v217 = vld [vmem:[%s0] sm:$0xff]
    %s218 = smul.u32 0, 8
    %s219 = ssub.s32 0, 0
    %s220 = smul.u32 %s219, 8
    %v221 = vld [vmem:[#allocation2] sm:$0xff]
    %v222 = vld [vmem:[#allocation2 + $0x8] sm:$0xff]
    %s223 = sadd.s32 %s220, 7
    %v224 = vpack.c.bf16 %v222, %v221
    %v226 = vlaneseq
    %v227 = vshrl.u32 %v226, 7
    %v228 = vsub.s32 0, %v227
    %v229 = vrot.slane %v216, %v228
    %v230 = vlaneseq
    %v231 = vshrl.u32 %v230, 7
    %v232 = vsub.s32 1, %v231
    %v233 = vrot.slane %v216, %v232
    %v234 = vlaneseq
    %v235 = vshrl.u32 %v234, 7
    %v236 = vsub.s32 2, %v235
    %v237 = vrot.slane %v216, %v236
    %v238 = vlaneseq
    %v239 = vshrl.u32 %v238, 7
    %v240 = vsub.s32 3, %v239
    %v241 = vrot.slane %v216, %v240
    %v242 = vlaneseq
    %v243 = vshrl.u32 %v242, 7
    %v244 = vsub.s32 4, %v243
    %v245 = vrot.slane %v216, %v244
    %v246 = vlaneseq
    %v247 = vshrl.u32 %v246, 7
    %v248 = vsub.s32 5, %v247
    %v249 = vrot.slane %v216, %v248
    %v304 = vunpack.c.l.b16 %v168
    %v305 = vunpack.c.h.b16 %v168
    %v306 = vunpack.c.l.b16 %v169
    %v307 = vunpack.c.h.b16 %v169
    %v308 = vunpack.c.l.b16 %v170
    %v309 = vunpack.c.h.b16 %v170
    %v310 = vunpack.c.l.b16 %v171
    %v311 = vunpack.c.h.b16 %v171
    %v312 = vunpack.c.l.b16 %v172
    %v313 = vunpack.c.h.b16 %v172
    %v314 = vunpack.c.l.b16 %v173
    %v315 = vunpack.c.h.b16 %v173
    %v316 = vunpack.c.l.b16 %v174
    %v317 = vunpack.c.h.b16 %v174
    %v318 = vunpack.c.l.b16 %v175
    %v319 = vunpack.c.h.b16 %v175
    %v320 = vunpack.c.l.b16 %v176
    %v321 = vunpack.c.h.b16 %v176
    %v322 = vunpack.c.l.b16 %v177
    %v323 = vunpack.c.h.b16 %v177
    %v324 = vunpack.c.l.b16 %v178
    %v325 = vunpack.c.h.b16 %v178
    %v326 = vunpack.c.l.b16 %v179
    %v327 = vunpack.c.h.b16 %v179
    %v328 = vunpack.c.l.b16 %v180
    %v329 = vunpack.c.h.b16 %v180
    %v330 = vunpack.c.l.b16 %v181
    %v331 = vunpack.c.h.b16 %v181
    %v332 = vunpack.c.l.b16 %v182
    %v333 = vunpack.c.h.b16 %v182
    %v334 = vunpack.c.l.b16 %v183
    %v335 = vunpack.c.h.b16 %v183
    %v336 = vunpack.c.l.b16 %v184
    %v337 = vunpack.c.h.b16 %v184
    %v338 = vunpack.c.l.b16 %v185
    %v339 = vunpack.c.h.b16 %v185
    %v340 = vunpack.c.l.b16 %v186
    %v341 = vunpack.c.h.b16 %v186
    %v342 = vunpack.c.l.b16 %v187
    %v343 = vunpack.c.h.b16 %v187
    %v344 = vunpack.c.l.b16 %v188
    %v345 = vunpack.c.h.b16 %v188
    %v346 = vunpack.c.l.b16 %v189
    %v347 = vunpack.c.h.b16 %v189
    %v348 = vunpack.c.l.b16 %v190
    %v349 = vunpack.c.h.b16 %v190
    %v350 = vunpack.c.l.b16 %v191
    %v351 = vunpack.c.h.b16 %v191
    %v352 = vunpack.c.l.b16 %v192
    %v353 = vunpack.c.h.b16 %v192
    %v354 = vunpack.c.l.b16 %v193
    %v355 = vunpack.c.h.b16 %v193
    %v356 = vunpack.c.l.b16 %v194
    %v357 = vunpack.c.h.b16 %v194
    %v358 = vunpack.c.l.b16 %v195
    %v359 = vunpack.c.h.b16 %v195
    %v360 = vunpack.c.l.b16 %v196
    %v361 = vunpack.c.h.b16 %v196
    %v362 = vunpack.c.l.b16 %v197
    %v363 = vunpack.c.h.b16 %v197
    %v364 = vunpack.c.l.b16 %v198
    %v365 = vunpack.c.h.b16 %v198
    %v366 = vunpack.c.l.b16 %v199
    %v367 = vunpack.c.h.b16 %v199
    %v368 = vunpack.c.l.b16 %v200
    %v369 = vunpack.c.h.b16 %v200
    %v370 = vunpack.c.l.b16 %v201
    %v371 = vunpack.c.h.b16 %v201
    %v372 = vunpack.c.l.b16 %v202
    %v373 = vunpack.c.h.b16 %v202
    %v374 = vunpack.c.l.b16 %v203
    %v375 = vunpack.c.h.b16 %v203
    %v376 = vunpack.c.l.b16 %v204
    %v377 = vunpack.c.h.b16 %v204
    %v378 = vunpack.c.l.b16 %v205
    %v379 = vunpack.c.h.b16 %v205
    %v380 = vunpack.c.l.b16 %v206
    %v381 = vunpack.c.h.b16 %v206
    %v382 = vunpack.c.l.b16 %v207
    %v383 = vunpack.c.h.b16 %v207
    %v384 = vunpack.c.l.b16 %v208
    %v385 = vunpack.c.h.b16 %v208
    %v386 = vunpack.c.l.b16 %v209
    %v387 = vunpack.c.h.b16 %v209
    %v388 = vunpack.c.l.b16 %v210
    %v389 = vunpack.c.h.b16 %v210
    %v390 = vunpack.c.l.b16 %v211
    %v391 = vunpack.c.h.b16 %v211
    %v392 = vunpack.c.l.b16 %v212
    %v393 = vunpack.c.h.b16 %v212
    %v394 = vunpack.c.l.b16 %v213
    %v395 = vunpack.c.h.b16 %v213
    %v396 = vunpack.c.l.b16 %v214
    %v397 = vunpack.c.h.b16 %v214
    %v398 = vunpack.c.l.b16 %v215
    %v399 = vunpack.c.h.b16 %v215
    %v400 = vpack.c.b16 %v310, %v304
    %v401 = vpack.c.b16 %v311, %v305
    %v402 = vpack.c.b16 %v312, %v306
    %v403 = vpack.c.b16 %v313, %v307
    %v404 = vpack.c.b16 %v314, %v308
    %v405 = vpack.c.b16 %v315, %v309
    %v406 = vpack.c.b16 %v322, %v316
    %v407 = vpack.c.b16 %v323, %v317
    %v408 = vpack.c.b16 %v324, %v318
    %v409 = vpack.c.b16 %v325, %v319
    %v410 = vpack.c.b16 %v326, %v320
    %v411 = vpack.c.b16 %v327, %v321
    %v412 = vpack.c.b16 %v334, %v328
    %v413 = vpack.c.b16 %v335, %v329
    %v414 = vpack.c.b16 %v336, %v330
    %v415 = vpack.c.b16 %v337, %v331
    %v416 = vpack.c.b16 %v338, %v332
    %v417 = vpack.c.b16 %v339, %v333
    %v418 = vpack.c.b16 %v346, %v340
    %v419 = vpack.c.b16 %v347, %v341
    %v420 = vpack.c.b16 %v348, %v342
    %v421 = vpack.c.b16 %v349, %v343
    %v422 = vpack.c.b16 %v350, %v344
    %v423 = vpack.c.b16 %v351, %v345
    %v424 = vpack.c.b16 %v358, %v352
    %v425 = vpack.c.b16 %v359, %v353
    %v426 = vpack.c.b16 %v360, %v354
    %v427 = vpack.c.b16 %v361, %v355
    %v428 = vpack.c.b16 %v362, %v356
    %v429 = vpack.c.b16 %v363, %v357
    %v430 = vpack.c.b16 %v370, %v364
    %v431 = vpack.c.b16 %v371, %v365
    %v432 = vpack.c.b16 %v372, %v366
    %v433 = vpack.c.b16 %v373, %v367
    %v434 = vpack.c.b16 %v374, %v368
    %v435 = vpack.c.b16 %v375, %v369
    %v436 = vpack.c.b16 %v382, %v376
    %v437 = vpack.c.b16 %v383, %v377
    %v438 = vpack.c.b16 %v384, %v378
    %v439 = vpack.c.b16 %v385, %v379
    %v440 = vpack.c.b16 %v386, %v380
    %v441 = vpack.c.b16 %v387, %v381
    %v442 = vpack.c.b16 %v394, %v388
    %v443 = vpack.c.b16 %v395, %v389
    %v444 = vpack.c.b16 %v396, %v390
    %v445 = vpack.c.b16 %v397, %v391
    %v446 = vpack.c.b16 %v398, %v392
    %v447 = vpack.c.b16 %v399, %v393
    %496 = vmatprep.subr.bf16.mxu0 %v401
    %497 = vmatpush1.bf16.msra.mxu0 %v400
    %498 = vmatprep.subr.bf16.mxu0 %v407
    %499 = vmatpush1.bf16.msra.mxu0 %v406
    %500 = vmatprep.subr.bf16.mxu0 %v413
    %501 = vmatpush1.bf16.msra.mxu0 %v412
    %502 = vmatprep.subr.bf16.mxu0 %v419
    %503 = vmatpush1.bf16.msra.mxu0 %v418
    %504 = vmatprep.subr.bf16.mxu0 %v425
    %505 = vmatpush1.bf16.msra.mxu0 %v424
    %506 = vmatprep.subr.bf16.mxu0 %v431
    %507 = vmatpush1.bf16.msra.mxu0 %v430
    %508 = vmatprep.subr.bf16.mxu0 %v437
    %509 = vmatpush1.bf16.msra.mxu0 %v436
    %510 = vmatprep.subr.bf16.mxu0 %v443
    %511 = vmatpush1.bf16.msra.mxu0 %v442
    %512 = vmatprep.subr.bf16.mxu0 0
    %513 = vmatpush1.bf16.msra.mxu0 0
    %514 = vmatprep.subr.bf16.mxu0 0
    %515 = vmatpush1.bf16.msra.mxu0 0
    %516 = vmatprep.subr.bf16.mxu0 0
    %517 = vmatpush1.bf16.msra.mxu0 0
    %518 = vmatprep.subr.bf16.mxu0 0
    %519 = vmatpush1.bf16.msra.mxu0 0
    %520 = vmatprep.subr.bf16.mxu0 0
    %521 = vmatpush1.bf16.msra.mxu0 0
    %522 = vmatprep.subr.bf16.mxu0 0
    %523 = vmatpush1.bf16.msra.mxu0 0
    %524 = vmatprep.subr.bf16.mxu0 0
    %525 = vmatpush1.bf16.msra.mxu0 0
    %526 = vmatprep.subr.bf16.mxu0 0
    %527 = vmatpush1.bf16.msra.mxu0 0
    %528 = vmatprep.mubr.bf16.mxu0 0
    %529 = vmatmul.mubr.bf16.gmra.mrb[0].mxu0 %v224
    %v530 = vpop.f32.mrb[0].mxu0
    %v531 = vadd.f32 %v229, %v530
    %v532 = vpop.f32.mrb[0].mxu0
    %v533 = vadd.f32 %v233, %v532
    %v534 = vpop.f32.mrb[0].mxu0
    %v535 = vpop.f32.mrb[0].mxu0
    %536 = vdwg.mxu0
    %537 = vmatprep.subr.bf16.mxu0 %v403
    %538 = vmatpush1.bf16.msra.mxu0 %v402
    %539 = vmatprep.subr.bf16.mxu0 %v409
    %540 = vmatpush1.bf16.msra.mxu0 %v408
    %541 = vmatprep.subr.bf16.mxu0 %v415
    %542 = vmatpush1.bf16.msra.mxu0 %v414
    %543 = vmatprep.subr.bf16.mxu0 %v421
    %544 = vmatpush1.bf16.msra.mxu0 %v420
    %545 = vmatprep.subr.bf16.mxu0 %v427
    %546 = vmatpush1.bf16.msra.mxu0 %v426
    %547 = vmatprep.subr.bf16.mxu0 %v433
    %548 = vmatpush1.bf16.msra.mxu0 %v432
    %549 = vmatprep.subr.bf16.mxu0 %v439
    %550 = vmatpush1.bf16.msra.mxu0 %v438
    %551 = vmatprep.subr.bf16.mxu0 %v445
    %552 = vmatpush1.bf16.msra.mxu0 %v444
    %553 = vmatprep.subr.bf16.mxu0 0
    %554 = vmatpush1.bf16.msra.mxu0 0
    %555 = vmatprep.subr.bf16.mxu0 0
    %556 = vmatpush1.bf16.msra.mxu0 0
    %557 = vmatprep.subr.bf16.mxu0 0
    %558 = vmatpush1.bf16.msra.mxu0 0
    %559 = vmatprep.subr.bf16.mxu0 0
    %560 = vmatpush1.bf16.msra.mxu0 0
    %561 = vmatprep.subr.bf16.mxu0 0
    %562 = vmatpush1.bf16.msra.mxu0 0
    %563 = vmatprep.subr.bf16.mxu0 0
    %564 = vmatpush1.bf16.msra.mxu0 0
    %565 = vmatprep.subr.bf16.mxu0 0
    %566 = vmatpush1.bf16.msra.mxu0 0
    %567 = vmatprep.subr.bf16.mxu0 0
    %568 = vmatpush1.bf16.msra.mxu0 0
    %569 = vmatprep.mubr.bf16.mxu0 0
    %570 = vmatmul.mubr.bf16.gmra.mrb[0].mxu0 %v224
    %v571 = vpop.f32.mrb[0].mxu0
    %v572 = vadd.f32 %v237, %v571
    %v573 = vpop.f32.mrb[0].mxu0
    %v574 = vpop.f32.mrb[0].mxu0
    %v575 = vpop.f32.mrb[0].mxu0
    %v576 = vadd.f32 %v241, %v575
    %577 = vdwg.mxu0
    %578 = vmatprep.subr.bf16.mxu0 %v405
    %579 = vmatpush1.bf16.msra.mxu0 %v404
    %580 = vmatprep.subr.bf16.mxu0 %v411
    %581 = vmatpush1.bf16.msra.mxu0 %v410
    %582 = vmatprep.subr.bf16.mxu0 %v417
    %583 = vmatpush1.bf16.msra.mxu0 %v416
    %584 = vmatprep.subr.bf16.mxu0 %v423
    %585 = vmatpush1.bf16.msra.mxu0 %v422
    %586 = vmatprep.subr.bf16.mxu0 %v429
    %587 = vmatpush1.bf16.msra.mxu0 %v428
    %588 = vmatprep.subr.bf16.mxu0 %v435
    %589 = vmatpush1.bf16.msra.mxu0 %v434
    %590 = vmatprep.subr.bf16.mxu0 %v441
    %591 = vmatpush1.bf16.msra.mxu0 %v440
    %592 = vmatprep.subr.bf16.mxu0 %v447
    %593 = vmatpush1.bf16.msra.mxu0 %v446
    %594 = vmatprep.subr.bf16.mxu0 0
    %595 = vmatpush1.bf16.msra.mxu0 0
    %596 = vmatprep.subr.bf16.mxu0 0
    %597 = vmatpush1.bf16.msra.mxu0 0
    %598 = vmatprep.subr.bf16.mxu0 0
    %599 = vmatpush1.bf16.msra.mxu0 0
    %600 = vmatprep.subr.bf16.mxu0 0
    %601 = vmatpush1.bf16.msra.mxu0 0
    %602 = vmatprep.subr.bf16.mxu0 0
    %603 = vmatpush1.bf16.msra.mxu0 0
    %604 = vmatprep.subr.bf16.mxu0 0
    %605 = vmatpush1.bf16.msra.mxu0 0
    %606 = vmatprep.subr.bf16.mxu0 0
    %607 = vmatpush1.bf16.msra.mxu0 0
    %608 = vmatprep.subr.bf16.mxu0 0
    %609 = vmatpush1.bf16.msra.mxu0 0
    %610 = vmatprep.mubr.bf16.mxu0 0
    %611 = vmatmul.mubr.bf16.gmra.mrb[0].mxu0 %v224
    %v612 = vpop.f32.mrb[0].mxu0
    %v613 = vpop.f32.mrb[0].mxu0
    %v614 = vpop.f32.mrb[0].mxu0
    %v615 = vadd.f32 %v245, %v614
    %v616 = vpop.f32.mrb[0].mxu0
    %v617 = vadd.f32 %v249, %v616
    %618 = vdwg.mxu0
    %v619 = vld [vmem:[#allocation3] sm:$0xff]
    %v620 = vld [vmem:[#allocation3 + $0x8] sm:$0xf]
    %v621 = vunpack.c.l.bf16 %v619
    %v622 = vunpack.c.h.bf16 %v619
    %v623 = vunpack.c.l.bf16 %v620
    %v624 = vadd.f32 %v621, %v531
    %v625 = vxor.u32 %v624, 2147483648
    %v626 = vmul.f32 %v625, 1.442695
    %v627 = vpow.pop %v626
    %v628 = vadd.f32 %v627, 1.0
    %v629 = vrcp.pop %v628
    %v630 = vmul.f32 1.0, %v629
    %v631 = vadd.f32 %v622, %v533
    %v632 = vxor.u32 %v631, 2147483648
    %v633 = vmul.f32 %v632, 1.442695
    %v634 = vpow.pop %v633
    %v635 = vadd.f32 %v634, 1.0
    %v636 = vrcp.pop %v635
    %v637 = vmul.f32 1.0, %v636
    %v638 = vmul.f32 %v630, %v572
    %v639 = vadd.f32 %v623, %v638
    %v640 = vtanh.pop %v639
    %v641 = vstv %s218
    %vm642 = vcmp.gt.s32.totalorder %v217, %v641
    %v643 = vsel %vm642, 1, 0
    %644 = vset.pattern.permute.xlu0 0
    %645 = vperm.xlu0 %644, %v643
    %v646 = vpop.permute.xlu0 %645
    %vm647 = vcmp.eq.s32.totalorder %v646, 1
    %v648 = vsel %vm647, %v637, 1.0
    %v649 = vsub.f32 %v221, %v640
    %v650 = vmul.f32 %v648, %v649
    %v651 = vadd.f32 %v640, %v650
    %v652 = vsel %vm647, %v651, 0.0
    %s653 = scalar_lea.vmem [#allocation4], 84
    %v654 = vld [vmem:[%s653] sm:$0xff]
    %v655 = vld [vmem:[%s653 + $0x8] sm:$0xf]
    %v656 = vunpack.c.l.bf16 %v654
    %v657 = vunpack.c.h.bf16 %v654
    %v658 = vunpack.c.l.bf16 %v655
    %v659 = vadd.f32 %v656, %v576
    %v660 = vxor.u32 %v659, 2147483648
    %v661 = vmul.f32 %v660, 1.442695
    %v662 = vpow.pop %v661
    %v663 = vadd.f32 %v662, 1.0
    %v664 = vrcp.pop %v663
    %v665 = vmul.f32 1.0, %v664
    %v666 = vadd.f32 %v657, %v615
    %v667 = vxor.u32 %v666, 2147483648
    %v668 = vmul.f32 %v667, 1.442695
    %v669 = vpow.pop %v668
    %v670 = vadd.f32 %v669, 1.0
    %v671 = vrcp.pop %v670
    %v672 = vmul.f32 1.0, %v671
    %v673 = vmul.f32 %v665, %v617
    %v674 = vadd.f32 %v658, %v673
    %v675 = vtanh.pop %v674
    %v676 = vstv %s223
    %vm677 = vcmp.gt.s32.totalorder %v217, %v676
    %v678 = vsel %vm677, 1, 0
    %679 = vset.pattern.permute.xlu0 0
    %680 = vperm.xlu0 %679, %v678
    %v681 = vpop.permute.xlu0 %680
    %vm682 = vcmp.eq.s32.totalorder %v681, 1
    %v683 = vsel %vm682, %v672, 1.0
    %v684 = vsub.f32 %v222, %v675
    %v685 = vmul.f32 %v683, %v684
    %v686 = vadd.f32 %v675, %v685
    %v687 = vsel %vm682, %v686, 0.0
    %688 = vst [vmem:[%s5] sm:$0xff] %v652
    %s689 = scalar_lea.vmem %s158, 56
    %690 = vst [vmem:[%s689] sm:$0xff] %v687
    %s691 = sadd.s32 %s218, 1
    %s692 = sadd.s32 %s220, 6
    %v693 = vpack.c.bf16 %v686, %v651
    %694 = vmatprep.subr.bf16.mxu0 %v401
    %695 = vmatpush1.bf16.msra.mxu0 %v400
    %696 = vmatprep.subr.bf16.mxu0 %v407
    %697 = vmatpush1.bf16.msra.mxu0 %v406
    %698 = vmatprep.subr.bf16.mxu0 %v413
    %699 = vmatpush1.bf16.msra.mxu0 %v412
    %700 = vmatprep.subr.bf16.mxu0 %v419
    %701 = vmatpush1.bf16.msra.mxu0 %v418
    %702 = vmatprep.subr.bf16.mxu0 %v425
    %703 = vmatpush1.bf16.msra.mxu0 %v424
    %704 = vmatprep.subr.bf16.mxu0 %v431
    %705 = vmatpush1.bf16.msra.mxu0 %v430
    %706 = vmatprep.subr.bf16.mxu0 %v437
    %707 = vmatpush1.bf16.msra.mxu0 %v436
    %708 = vmatprep.subr.bf16.mxu0 %v443
    %709 = vmatpush1.bf16.msra.mxu0 %v442
    %710 = vmatprep.subr.bf16.mxu0 0
    %711 = vmatpush1.bf16.msra.mxu0 0
    %712 = vmatprep.subr.bf16.mxu0 0
    %713 = vmatpush1.bf16.msra.mxu0 0
    %714 = vmatprep.subr.bf16.mxu0 0
    %715 = vmatpush1.bf16.msra.mxu0 0
    %716 = vmatprep.subr.bf16.mxu0 0
    %717 = vmatpush1.bf16.msra.mxu0 0
    %718 = vmatprep.subr.bf16.mxu0 0
    %719 = vmatpush1.bf16.msra.mxu0 0
    %720 = vmatprep.subr.bf16.mxu0 0
    %721 = vmatpush1.bf16.msra.mxu0 0
    %722 = vmatprep.subr.bf16.mxu0 0
    %723 = vmatpush1.bf16.msra.mxu0 0
    %724 = vmatprep.subr.bf16.mxu0 0
    %725 = vmatpush1.bf16.msra.mxu0 0
    %726 = vmatprep.mubr.bf16.mxu0 0
    %727 = vmatmul.mubr.bf16.gmra.mrb[0].mxu0 %v693
    %v728 = vpop.f32.mrb[0].mxu0
    %v729 = vadd.f32 %v229, %v728
    %v730 = vpop.f32.mrb[0].mxu0
    %v731 = vadd.f32 %v233, %v730
    %v732 = vpop.f32.mrb[0].mxu0
    %v733 = vpop.f32.mrb[0].mxu0
    %734 = vdwg.mxu0
    %735 = vmatprep.subr.bf16.mxu0 %v403
    %736 = vmatpush1.bf16.msra.mxu0 %v402
    %737 = vmatprep.subr.bf16.mxu0 %v409
    %738 = vmatpush1.bf16.msra.mxu0 %v408
    %739 = vmatprep.subr.bf16.mxu0 %v415
    %740 = vmatpush1.bf16.msra.mxu0 %v414
    %741 = vmatprep.subr.bf16.mxu0 %v421
    %742 = vmatpush1.bf16.msra.mxu0 %v420
    %743 = vmatprep.subr.bf16.mxu0 %v427
    %744 = vmatpush1.bf16.msra.mxu0 %v426
    %745 = vmatprep.subr.bf16.mxu0 %v433
    %746 = vmatpush1.bf16.msra.mxu0 %v432
    %747 = vmatprep.subr.bf16.mxu0 %v439
    %748 = vmatpush1.bf16.msra.mxu0 %v438
    %749 = vmatprep.subr.bf16.mxu0 %v445
    %750 = vmatpush1.bf16.msra.mxu0 %v444
    %751 = vmatprep.subr.bf16.mxu0 0
    %752 = vmatpush1.bf16.msra.mxu0 0
    %753 = vmatprep.subr.bf16.mxu0 0
    %754 = vmatpush1.bf16.msra.mxu0 0
    %755 = vmatprep.subr.bf16.mxu0 0
    %756 = vmatpush1.bf16.msra.mxu0 0
    %757 = vmatprep.subr.bf16.mxu0 0
    %758 = vmatpush1.bf16.msra.mxu0 0
    %759 = vmatprep.subr.bf16.mxu0 0
    %760 = vmatpush1.bf16.msra.mxu0 0
    %761 = vmatprep.subr.bf16.mxu0 0
    %762 = vmatpush1.bf16.msra.mxu0 0
    %763 = vmatprep.subr.bf16.mxu0 0
    %764 = vmatpush1.bf16.msra.mxu0 0
    %765 = vmatprep.subr.bf16.mxu0 0
    %766 = vmatpush1.bf16.msra.mxu0 0
    %767 = vmatprep.mubr.bf16.mxu0 0
    %768 = vmatmul.mubr.bf16.gmra.mrb[0].mxu0 %v693
    %v769 = vpop.f32.mrb[0].mxu0
    %v770 = vadd.f32 %v237, %v769
    %v771 = vpop.f32.mrb[0].mxu0
    %v772 = vpop.f32.mrb[0].mxu0
    %v773 = vpop.f32.mrb[0].mxu0
    %v774 = vadd.f32 %v241, %v773
    %775 = vdwg.mxu0
    %776 = vmatprep.subr.bf16.mxu0 %v405
    %777 = vmatpush1.bf16.msra.mxu0 %v404
    %778 = vmatprep.subr.bf16.mxu0 %v411
    %779 = vmatpush1.bf16.msra.mxu0 %v410
    %780 = vmatprep.subr.bf16.mxu0 %v417
    %781 = vmatpush1.bf16.msra.mxu0 %v416
    %782 = vmatprep.subr.bf16.mxu0 %v423
    %783 = vmatpush1.bf16.msra.mxu0 %v422
    %784 = vmatprep.subr.bf16.mxu0 %v429
    %785 = vmatpush1.bf16.msra.mxu0 %v428
    %786 = vmatprep.subr.bf16.mxu0 %v435
    %787 = vmatpush1.bf16.msra.mxu0 %v434
    %788 = vmatprep.subr.bf16.mxu0 %v441
    %789 = vmatpush1.bf16.msra.mxu0 %v440
    %790 = vmatprep.subr.bf16.mxu0 %v447
    %791 = vmatpush1.bf16.msra.mxu0 %v446
    %792 = vmatprep.subr.bf16.mxu0 0
    %793 = vmatpush1.bf16.msra.mxu0 0
    %794 = vmatprep.subr.bf16.mxu0 0
    %795 = vmatpush1.bf16.msra.mxu0 0
    %796 = vmatprep.subr.bf16.mxu0 0
    %797 = vmatpush1.bf16.msra.mxu0 0
    %798 = vmatprep.subr.bf16.mxu0 0
    %799 = vmatpush1.bf16.msra.mxu0 0
    %800 = vmatprep.subr.bf16.mxu0 0
    %801 = vmatpush1.bf16.msra.mxu0 0
    %802 = vmatprep.subr.bf16.mxu0 0
    %803 = vmatpush1.bf16.msra.mxu0 0
    %804 = vmatprep.subr.bf16.mxu0 0
    %805 = vmatpush1.bf16.msra.mxu0 0
    %806 = vmatprep.subr.bf16.mxu0 0
    %807 = vmatpush1.bf16.msra.mxu0 0
    %808 = vmatprep.mubr.bf16.mxu0 0
    %809 = vmatmul.mubr.bf16.gmra.mrb[0].mxu0 %v693
    %v810 = vpop.f32.mrb[0].mxu0
    %v811 = vpop.f32.mrb[0].mxu0
    %v812 = vpop.f32.mrb[0].mxu0
    %v813 = vadd.f32 %v245, %v812
    %v814 = vpop.f32.mrb[0].mxu0
    %v815 = vadd.f32 %v249, %v814
    %816 = vdwg.mxu0
    %s817 = scalar_lea.vmem [#allocation3], 12
    %v818 = vld [vmem:[%s817] sm:$0xff]
    %v819 = vld [vmem:[%s817 + $0x8] sm:$0xf]
    %v820 = vunpack.c.l.bf16 %v818
    %v821 = vunpack.c.h.bf16 %v818
    %v822 = vunpack.c.l.bf16 %v819
    %v823 = vadd.f32 %v820, %v729
    %v824 = vxor.u32 %v823, 2147483648
    %v825 = vmul.f32 %v824, 1.442695
    %v826 = vpow.pop %v825
    %v827 = vadd.f32 %v826, 1.0
    %v828 = vrcp.pop %v827
    %v829 = vmul.f32 1.0, %v828
    %v830 = vadd.f32 %v821, %v731
    %v831 = vxor.u32 %v830, 2147483648
    %v832 = vmul.f32 %v831, 1.442695
    %v833 = vpow.pop %v832
    %v834 = vadd.f32 %v833, 1.0
    %v835 = vrcp.pop %v834
    %v836 = vmul.f32 1.0, %v835
    %v837 = vmul.f32 %v829, %v770
    %v838 = vadd.f32 %v822, %v837
    %v839 = vtanh.pop %v838
    %v840 = vstv %s691
    %vm841 = vcmp.gt.s32.totalorder %v217, %v840
    %v842 = vsel %vm841, 1, 0
    %843 = vset.pattern.permute.xlu0 0
    %844 = vperm.xlu0 %843, %v842
    %v845 = vpop.permute.xlu0 %844
    %vm846 = vcmp.eq.s32.totalorder %v845, 1
    %v847 = vsel %vm846, %v836, 1.0
    %v848 = vsub.f32 %v651, %v839
    %v849 = vmul.f32 %v847, %v848
    %v850 = vadd.f32 %v839, %v849
    %v851 = vsel %vm846, %v850, 0.0
    %s852 = scalar_lea.vmem [#allocation4], 72
    %v853 = vld [vmem:[%s852] sm:$0xff]
    %v854 = vld [vmem:[%s852 + $0x8] sm:$0xf]
    %v855 = vunpack.c.l.bf16 %v853
    %v856 = vunpack.c.h.bf16 %v853
    %v857 = vunpack.c.l.bf16 %v854
    %v858 = vadd.f32 %v855, %v774
    %v859 = vxor.u32 %v858, 2147483648
    %v860 = vmul.f32 %v859, 1.442695
    %v861 = vpow.pop %v860
    %v862 = vadd.f32 %v861, 1.0
    %v863 = vrcp.pop %v862
    %v864 = vmul.f32 1.0, %v863
    %v865 = vadd.f32 %v856, %v813
    %v866 = vxor.u32 %v865, 2147483648
    %v867 = vmul.f32 %v866, 1.442695
    %v868 = vpow.pop %v867
    %v869 = vadd.f32 %v868, 1.0
    %v870 = vrcp.pop %v869
    %v871 = vmul.f32 1.0, %v870
    %v872 = vmul.f32 %v864, %v815
    %v873 = vadd.f32 %v857, %v872
    %v874 = vtanh.pop %v873
    %v875 = vstv %s692
    %vm876 = vcmp.gt.s32.totalorder %v217, %v875
    %v877 = vsel %vm876, 1, 0
    %878 = vset.pattern.permute.xlu0 0
    %879 = vperm.xlu0 %878, %v877
    %v880 = vpop.permute.xlu0 %879
    %vm881 = vcmp.eq.s32.totalorder %v880, 1
    %v882 = vsel %vm881, %v871, 1.0
    %v883 = vsub.f32 %v686, %v874
    %v884 = vmul.f32 %v882, %v883
    %v885 = vadd.f32 %v874, %v884
    %v886 = vsel %vm881, %v885, 0.0
    %s887 = scalar_lea.vmem %s5, 8
    %888 = vst [vmem:[%s887] sm:$0xff] %v851
    %s889 = scalar_lea.vmem %s158, 48
    %890 = vst [vmem:[%s889] sm:$0xff] %v886
    %s891 = sadd.s32 %s218, 2
    %s892 = sadd.s32 %s220, 5
    %v893 = vpack.c.bf16 %v885, %v850
    %894 = vmatprep.subr.bf16.mxu0 %v401
    %895 = vmatpush1.bf16.msra.mxu0 %v400
    %896 = vmatprep.subr.bf16.mxu0 %v407
    %897 = vmatpush1.bf16.msra.mxu0 %v406
    %898 = vmatprep.subr.bf16.mxu0 %v413
    %899 = vmatpush1.bf16.msra.mxu0 %v412
    %900 = vmatprep.subr.bf16.mxu0 %v419
    %901 = vmatpush1.bf16.msra.mxu0 %v418
    %902 = vmatprep.subr.bf16.mxu0 %v425
    %903 = vmatpush1.bf16.msra.mxu0 %v424
    %904 = vmatprep.subr.bf16.mxu0 %v431
    %905 = vmatpush1.bf16.msra.mxu0 %v430
    %906 = vmatprep.subr.bf16.mxu0 %v437
    %907 = vmatpush1.bf16.msra.mxu0 %v436
    %908 = vmatprep.subr.bf16.mxu0 %v443
    %909 = vmatpush1.bf16.msra.mxu0 %v442
    %910 = vmatprep.subr.bf16.mxu0 0
    %911 = vmatpush1.bf16.msra.mxu0 0
    %912 = vmatprep.subr.bf16.mxu0 0
    %913 = vmatpush1.bf16.msra.mxu0 0
    %914 = vmatprep.subr.bf16.mxu0 0
    %915 = vmatpush1.bf16.msra.mxu0 0
    %916 = vmatprep.subr.bf16.mxu0 0
    %917 = vmatpush1.bf16.msra.mxu0 0
    %918 = vmatprep.subr.bf16.mxu0 0
    %919 = vmatpush1.bf16.msra.mxu0 0
    %920 = vmatprep.subr.bf16.mxu0 0
    %921 = vmatpush1.bf16.msra.mxu0 0
    %922 = vmatprep.subr.bf16.mxu0 0
    %923 = vmatpush1.bf16.msra.mxu0 0
    %924 = vmatprep.subr.bf16.mxu0 0
    %925 = vmatpush1.bf16.msra.mxu0 0
    %926 = vmatprep.mubr.bf16.mxu0 0
    %927 = vmatmul.mubr.bf16.gmra.mrb[0].mxu0 %v893
    %v928 = vpop.f32.mrb[0].mxu0
    %v929 = vadd.f32 %v229, %v928
    %v930 = vpop.f32.mrb[0].mxu0
    %v931 = vadd.f32 %v233, %v930
    %v932 = vpop.f32.mrb[0].mxu0
    %v933 = vpop.f32.mrb[0].mxu0
    %934 = vdwg.mxu0
    %935 = vmatprep.subr.bf16.mxu0 %v403
    %936 = vmatpush1.bf16.msra.mxu0 %v402
    %937 = vmatprep.subr.bf16.mxu0 %v409
    %938 = vmatpush1.bf16.msra.mxu0 %v408
    %939 = vmatprep.subr.bf16.mxu0 %v415
    %940 = vmatpush1.bf16.msra.mxu0 %v414
    %941 = vmatprep.subr.bf16.mxu0 %v421
    %942 = vmatpush1.bf16.msra.mxu0 %v420
    %943 = vmatprep.subr.bf16.mxu0 %v427
    %944 = vmatpush1.bf16.msra.mxu0 %v426
    %945 = vmatprep.subr.bf16.mxu0 %v433
    %946 = vmatpush1.bf16.msra.mxu0 %v432
    %947 = vmatprep.subr.bf16.mxu0 %v439
    %948 = vmatpush1.bf16.msra.mxu0 %v438
    %949 = vmatprep.subr.bf16.mxu0 %v445
    %950 = vmatpush1.bf16.msra.mxu0 %v444
    %951 = vmatprep.subr.bf16.mxu0 0
    %952 = vmatpush1.bf16.msra.mxu0 0
    %953 = vmatprep.subr.bf16.mxu0 0
    %954 = vmatpush1.bf16.msra.mxu0 0
    %955 = vmatprep.subr.bf16.mxu0 0
    %956 = vmatpush1.bf16.msra.mxu0 0
    %957 = vmatprep.subr.bf16.mxu0 0
    %958 = vmatpush1.bf16.msra.mxu0 0
    %959 = vmatprep.subr.bf16.mxu0 0
    %960 = vmatpush1.bf16.msra.mxu0 0
    %961 = vmatprep.subr.bf16.mxu0 0
    %962 = vmatpush1.bf16.msra.mxu0 0
    %963 = vmatprep.subr.bf16.mxu0 0
    %964 = vmatpush1.bf16.msra.mxu0 0
    %965 = vmatprep.subr.bf16.mxu0 0
    %966 = vmatpush1.bf16.msra.mxu0 0
    %967 = vmatprep.mubr.bf16.mxu0 0
    %968 = vmatmul.mubr.bf16.gmra.mrb[0].mxu0 %v893
    %v969 = vpop.f32.mrb[0].mxu0
    %v970 = vadd.f32 %v237, %v969
    %v971 = vpop.f32.mrb[0].mxu0
    %v972 = vpop.f32.mrb[0].mxu0
    %v973 = vpop.f32.mrb[0].mxu0
    %v974 = vadd.f32 %v241, %v973
    %975 = vdwg.mxu0
    %976 = vmatprep.subr.bf16.mxu0 %v405
    %977 = vmatpush1.bf16.msra.mxu0 %v404
    %978 = vmatprep.subr.bf16.mxu0 %v411
    %979 = vmatpush1.bf16.msra.mxu0 %v410
    %980 = vmatprep.subr.bf16.mxu0 %v417
    %981 = vmatpush1.bf16.msra.mxu0 %v416
    %982 = vmatprep.subr.bf16.mxu0 %v423
    %983 = vmatpush1.bf16.msra.mxu0 %v422
    %984 = vmatprep.subr.bf16.mxu0 %v429
    %985 = vmatpush1.bf16.msra.mxu0 %v428
    %986 = vmatprep.subr.bf16.mxu0 %v435
    %987 = vmatpush1.bf16.msra.mxu0 %v434
    %988 = vmatprep.subr.bf16.mxu0 %v441
    %989 = vmatpush1.bf16.msra.mxu0 %v440
    %990 = vmatprep.subr.bf16.mxu0 %v447
    %991 = vmatpush1.bf16.msra.mxu0 %v446
    %992 = vmatprep.subr.bf16.mxu0 0
    %993 = vmatpush1.bf16.msra.mxu0 0
    %994 = vmatprep.subr.bf16.mxu0 0
    %995 = vmatpush1.bf16.msra.mxu0 0
    %996 = vmatprep.subr.bf16.mxu0 0
    %997 = vmatpush1.bf16.msra.mxu0 0
    %998 = vmatprep.subr.bf16.mxu0 0
    %999 = vmatpush1.bf16.msra.mxu0 0
    %1000 = vmatprep.subr.bf16.mxu0 0
    %1001 = vmatpush1.bf16.msra.mxu0 0
    %1002 = vmatprep.subr.bf16.mxu0 0
    %1003 = vmatpush1.bf16.msra.mxu0 0
    %1004 = vmatprep.subr.bf16.mxu0 0
    %1005 = vmatpush1.bf16.msra.mxu0 0
    %1006 = vmatprep.subr.bf16.mxu0 0
    %1007 = vmatpush1.bf16.msra.mxu0 0
    %1008 = vmatprep.mubr.bf16.mxu0 0
    %1009 = vmatmul.mubr.bf16.gmra.mrb[0].mxu0 %v893
    %v1010 = vpop.f32.mrb[0].mxu0
    %v1011 = vpop.f32.mrb[0].mxu0
    %v1012 = vpop.f32.mrb[0].mxu0
    %v1013 = vadd.f32 %v245, %v1012
    %v1014 = vpop.f32.mrb[0].mxu0
    %v1015 = vadd.f32 %v249, %v1014
    %1016 = vdwg.mxu0
    %s1017 = scalar_lea.vmem [#allocation3], 24
    %v1018 = vld [vmem:[%s1017] sm:$0xff]
    %v1019 = vld [vmem:[%s1017 + $0x8] sm:$0xf]
    %v1020 = vunpack.c.l.bf16 %v1018
    %v1021 = vunpack.c.h.bf16 %v1018
    %v1022 = vunpack.c.l.bf16 %v1019
    %v1023 = vadd.f32 %v1020, %v929
    %v1024 = vxor.u32 %v1023, 2147483648
    %v1025 = vmul.f32 %v1024, 1.442695
    %v1026 = vpow.pop %v1025
    %v1027 = vadd.f32 %v1026, 1.0
    %v1028 = vrcp.pop %v1027
    %v1029 = vmul.f32 1.0, %v1028
    %v1030 = vadd.f32 %v1021, %v931
    %v1031 = vxor.u32 %v1030, 2147483648
    %v1032 = vmul.f32 %v1031, 1.442695
    %v1033 = vpow.pop %v1032
    %v1034 = vadd.f32 %v1033, 1.0
    %v1035 = vrcp.pop %v1034
    %v1036 = vmul.f32 1.0, %v1035
    %v1037 = vmul.f32 %v1029, %v970
    %v1038 = vadd.f32 %v1022, %v1037
    %v1039 = vtanh.pop %v1038
    %v1040 = vstv %s891
    %vm1041 = vcmp.gt.s32.totalorder %v217, %v1040
    %v1042 = vsel %vm1041, 1, 0
    %1043 = vset.pattern.permute.xlu0 0
    %1044 = vperm.xlu0 %1043, %v1042
    %v1045 = vpop.permute.xlu0 %1044
    %vm1046 = vcmp.eq.s32.totalorder %v1045, 1
    %v1047 = vsel %vm1046, %v1036, 1.0
    %v1048 = vsub.f32 %v850, %v1039
    %v1049 = vmul.f32 %v1047, %v1048
    %v1050 = vadd.f32 %v1039, %v1049
    %v1051 = vsel %vm1046, %v1050, 0.0
    %s1052 = scalar_lea.vmem [#allocation4], 60
    %v1053 = vld [vmem:[%s1052] sm:$0xff]
    %v1054 = vld [vmem:[%s1052 + $0x8] sm:$0xf]
    %v1055 = vunpack.c.l.bf16 %v1053
    %v1056 = vunpack.c.h.bf16 %v1053
    %v1057 = vunpack.c.l.bf16 %v1054
    %v1058 = vadd.f32 %v1055, %v974
    %v1059 = vxor.u32 %v1058, 2147483648
    %v1060 = vmul.f32 %v1059, 1.442695
    %v1061 = vpow.pop %v1060
    %v1062 = vadd.f32 %v1061, 1.0
    %v1063 = vrcp.pop %v1062
    %v1064 = vmul.f32 1.0, %v1063
    %v1065 = vadd.f32 %v1056, %v1013
    %v1066 = vxor.u32 %v1065, 2147483648
    %v1067 = vmul.f32 %v1066, 1.442695
    %v1068 = vpow.pop %v1067
    %v1069 = vadd.f32 %v1068, 1.0
    %v1070 = vrcp.pop %v1069
    %v1071 = vmul.f32 1.0, %v1070
    %v1072 = vmul.f32 %v1064, %v1015
    %v1073 = vadd.f32 %v1057, %v1072
    %v1074 = vtanh.pop %v1073
    %v1075 = vstv %s892
    %vm1076 = vcmp.gt.s32.totalorder %v217, %v1075
    %v1077 = vsel %vm1076, 1, 0
    %1078 = vset.pattern.permute.xlu0 0
    %1079 = vperm.xlu0 %1078, %v1077
    %v1080 = vpop.permute.xlu0 %1079
    %vm1081 = vcmp.eq.s32.totalorder %v1080, 1
    %v1082 = vsel %vm1081, %v1071, 1.0
    %v1083 = vsub.f32 %v885, %v1074
    %v1084 = vmul.f32 %v1082, %v1083
    %v1085 = vadd.f32 %v1074, %v1084
    %v1086 = vsel %vm1081, %v1085, 0.0
    %s1087 = scalar_lea.vmem %s5, 16
    %1088 = vst [vmem:[%s1087] sm:$0xff] %v1051
    %s1089 = scalar_lea.vmem %s158, 40
    %1090 = vst [vmem:[%s1089] sm:$0xff] %v1086
    %s1091 = sadd.s32 %s218, 3
    %s1092 = sadd.s32 %s220, 4
    %v1093 = vpack.c.bf16 %v1085, %v1050
    %1094 = vmatprep.subr.bf16.mxu0 %v401
    %1095 = vmatpush1.bf16.msra.mxu0 %v400
    %1096 = vmatprep.subr.bf16.mxu0 %v407
    %1097 = vmatpush1.bf16.msra.mxu0 %v406
    %1098 = vmatprep.subr.bf16.mxu0 %v413
    %1099 = vmatpush1.bf16.msra.mxu0 %v412
    %1100 = vmatprep.subr.bf16.mxu0 %v419
    %1101 = vmatpush1.bf16.msra.mxu0 %v418
    %1102 = vmatprep.subr.bf16.mxu0 %v425
    %1103 = vmatpush1.bf16.msra.mxu0 %v424
    %1104 = vmatprep.subr.bf16.mxu0 %v431
    %1105 = vmatpush1.bf16.msra.mxu0 %v430
    %1106 = vmatprep.subr.bf16.mxu0 %v437
    %1107 = vmatpush1.bf16.msra.mxu0 %v436
    %1108 = vmatprep.subr.bf16.mxu0 %v443
    %1109 = vmatpush1.bf16.msra.mxu0 %v442
    %1110 = vmatprep.subr.bf16.mxu0 0
    %1111 = vmatpush1.bf16.msra.mxu0 0
    %1112 = vmatprep.subr.bf16.mxu0 0
    %1113 = vmatpush1.bf16.msra.mxu0 0
    %1114 = vmatprep.subr.bf16.mxu0 0
    %1115 = vmatpush1.bf16.msra.mxu0 0
    %1116 = vmatprep.subr.bf16.mxu0 0
    %1117 = vmatpush1.bf16.msra.mxu0 0
    %1118 = vmatprep.subr.bf16.mxu0 0
    %1119 = vmatpush1.bf16.msra.mxu0 0
    %1120 = vmatprep.subr.bf16.mxu0 0
    %1121 = vmatpush1.bf16.msra.mxu0 0
    %1122 = vmatprep.subr.bf16.mxu0 0
    %1123 = vmatpush1.bf16.msra.mxu0 0
    %1124 = vmatprep.subr.bf16.mxu0 0
    %1125 = vmatpush1.bf16.msra.mxu0 0
    %1126 = vmatprep.mubr.bf16.mxu0 0
    %1127 = vmatmul.mubr.bf16.gmra.mrb[0].mxu0 %v1093
    %v1128 = vpop.f32.mrb[0].mxu0
    %v1129 = vadd.f32 %v229, %v1128
    %v1130 = vpop.f32.mrb[0].mxu0
    %v1131 = vadd.f32 %v233, %v1130
    %v1132 = vpop.f32.mrb[0].mxu0
    %v1133 = vpop.f32.mrb[0].mxu0
    %1134 = vdwg.mxu0
    %1135 = vmatprep.subr.bf16.mxu0 %v403
    %1136 = vmatpush1.bf16.msra.mxu0 %v402
    %1137 = vmatprep.subr.bf16.mxu0 %v409
    %1138 = vmatpush1.bf16.msra.mxu0 %v408
    %1139 = vmatprep.subr.bf16.mxu0 %v415
    %1140 = vmatpush1.bf16.msra.mxu0 %v414
    %1141 = vmatprep.subr.bf16.mxu0 %v421
    %1142 = vmatpush1.bf16.msra.mxu0 %v420
    %1143 = vmatprep.subr.bf16.mxu0 %v427
    %1144 = vmatpush1.bf16.msra.mxu0 %v426
    %1145 = vmatprep.subr.bf16.mxu0 %v433
    %1146 = vmatpush1.bf16.msra.mxu0 %v432
    %1147 = vmatprep.subr.bf16.mxu0 %v439
    %1148 = vmatpush1.bf16.msra.mxu0 %v438
    %1149 = vmatprep.subr.bf16.mxu0 %v445
    %1150 = vmatpush1.bf16.msra.mxu0 %v444
    %1151 = vmatprep.subr.bf16.mxu0 0
    %1152 = vmatpush1.bf16.msra.mxu0 0
    %1153 = vmatprep.subr.bf16.mxu0 0
    %1154 = vmatpush1.bf16.msra.mxu0 0
    %1155 = vmatprep.subr.bf16.mxu0 0
    %1156 = vmatpush1.bf16.msra.mxu0 0
    %1157 = vmatprep.subr.bf16.mxu0 0
    %1158 = vmatpush1.bf16.msra.mxu0 0
    %1159 = vmatprep.subr.bf16.mxu0 0
    %1160 = vmatpush1.bf16.msra.mxu0 0
    %1161 = vmatprep.subr.bf16.mxu0 0
    %1162 = vmatpush1.bf16.msra.mxu0 0
    %1163 = vmatprep.subr.bf16.mxu0 0
    %1164 = vmatpush1.bf16.msra.mxu0 0
    %1165 = vmatprep.subr.bf16.mxu0 0
    %1166 = vmatpush1.bf16.msra.mxu0 0
    %1167 = vmatprep.mubr.bf16.mxu0 0
    %1168 = vmatmul.mubr.bf16.gmra.mrb[0].mxu0 %v1093
    %v1169 = vpop.f32.mrb[0].mxu0
    %v1170 = vadd.f32 %v237, %v1169
    %v1171 = vpop.f32.mrb[0].mxu0
    %v1172 = vpop.f32.mrb[0].mxu0
    %v1173 = vpop.f32.mrb[0].mxu0
    %v1174 = vadd.f32 %v241, %v1173
    %1175 = vdwg.mxu0
    %1176 = vmatprep.subr.bf16.mxu0 %v405
    %1177 = vmatpush1.bf16.msra.mxu0 %v404
    %1178 = vmatprep.subr.bf16.mxu0 %v411
    %1179 = vmatpush1.bf16.msra.mxu0 %v410
    %1180 = vmatprep.subr.bf16.mxu0 %v417
    %1181 = vmatpush1.bf16.msra.mxu0 %v416
    %1182 = vmatprep.subr.bf16.mxu0 %v423
    %1183 = vmatpush1.bf16.msra.mxu0 %v422
    %1184 = vmatprep.subr.bf16.mxu0 %v429
    %1185 = vmatpush1.bf16.msra.mxu0 %v428
    %1186 = vmatprep.subr.bf16.mxu0 %v435
    %1187 = vmatpush1.bf16.msra.mxu0 %v434
    %1188 = vmatprep.subr.bf16.mxu0 %v441
    %1189 = vmatpush1.bf16.msra.mxu0 %v440
    %1190 = vmatprep.subr.bf16.mxu0 %v447
    %1191 = vmatpush1.bf16.msra.mxu0 %v446
    %1192 = vmatprep.subr.bf16.mxu0 0
    %1193 = vmatpush1.bf16.msra.mxu0 0
    %1194 = vmatprep.subr.bf16.mxu0 0
    %1195 = vmatpush1.bf16.msra.mxu0 0
    %1196 = vmatprep.subr.bf16.mxu0 0
    %1197 = vmatpush1.bf16.msra.mxu0 0
    %1198 = vmatprep.subr.bf16.mxu0 0
    %1199 = vmatpush1.bf16.msra.mxu0 0
    %1200 = vmatprep.subr.bf16.mxu0 0
    %1201 = vmatpush1.bf16.msra.mxu0 0
    %1202 = vmatprep.subr.bf16.mxu0 0
    %1203 = vmatpush1.bf16.msra.mxu0 0
    %1204 = vmatprep.subr.bf16.mxu0 0
    %1205 = vmatpush1.bf16.msra.mxu0 0
    %1206 = vmatprep.subr.bf16.mxu0 0
    %1207 = vmatpush1.bf16.msra.mxu0 0
    %1208 = vmatprep.mubr.bf16.mxu0 0
    %1209 = vmatmul.mubr.bf16.gmra.mrb[0].mxu0 %v1093
    %v1210 = vpop.f32.mrb[0].mxu0
    %v1211 = vpop.f32.mrb[0].mxu0
    %v1212 = vpop.f32.mrb[0].mxu0
    %v1213 = vadd.f32 %v245, %v1212
    %v1214 = vpop.f32.mrb[0].mxu0
    %v1215 = vadd.f32 %v249, %v1214
    %1216 = vdwg.mxu0
    %s1217 = scalar_lea.vmem [#allocation3], 36
    %v1218 = vld [vmem:[%s1217] sm:$0xff]
    %v1219 = vld [vmem:[%s1217 + $0x8] sm:$0xf]
    %v1220 = vunpack.c.l.bf16 %v1218
    %v1221 = vunpack.c.h.bf16 %v1218
    %v1222 = vunpack.c.l.bf16 %v1219
    %v1223 = vadd.f32 %v1220, %v1129
    %v1224 = vxor.u32 %v1223, 2147483648
    %v1225 = vmul.f32 %v1224, 1.442695
    %v1226 = vpow.pop %v1225
    %v1227 = vadd.f32 %v1226, 1.0
    %v1228 = vrcp.pop %v1227
    %v1229 = vmul.f32 1.0, %v1228
    %v1230 = vadd.f32 %v1221, %v1131
    %v1231 = vxor.u32 %v1230, 2147483648
    %v1232 = vmul.f32 %v1231, 1.442695
    %v1233 = vpow.pop %v1232
    %v1234 = vadd.f32 %v1233, 1.0
    %v1235 = vrcp.pop %v1234
    %v1236 = vmul.f32 1.0, %v1235
    %v1237 = vmul.f32 %v1229, %v1170
    %v1238 = vadd.f32 %v1222, %v1237
    %v1239 = vtanh.pop %v1238
    %v1240 = vstv %s1091
    %vm1241 = vcmp.gt.s32.totalorder %v217, %v1240
    %v1242 = vsel %vm1241, 1, 0
    %1243 = vset.pattern.permute.xlu0 0
    %1244 = vperm.xlu0 %1243, %v1242
    %v1245 = vpop.permute.xlu0 %1244
    %vm1246 = vcmp.eq.s32.totalorder %v1245, 1
    %v1247 = vsel %vm1246, %v1236, 1.0
    %v1248 = vsub.f32 %v1050, %v1239
    %v1249 = vmul.f32 %v1247, %v1248
    %v1250 = vadd.f32 %v1239, %v1249
    %v1251 = vsel %vm1246, %v1250, 0.0
    %s1252 = scalar_lea.vmem [#allocation4], 48
    %v1253 = vld [vmem:[%s1252] sm:$0xff]
    %v1254 = vld [vmem:[%s1252 + $0x8] sm:$0xf]
    %v1255 = vunpack.c.l.bf16 %v1253
    %v1256 = vunpack.c.h.bf16 %v1253
    %v1257 = vunpack.c.l.bf16 %v1254
    %v1258 = vadd.f32 %v1255, %v1174
    %v1259 = vxor.u32 %v1258, 2147483648
    %v1260 = vmul.f32 %v1259, 1.442695
    %v1261 = vpow.pop %v1260
    %v1262 = vadd.f32 %v1261, 1.0
    %v1263 = vrcp.pop %v1262
    %v1264 = vmul.f32 1.0, %v1263
    %v1265 = vadd.f32 %v1256, %v1213
    %v1266 = vxor.u32 %v1265, 2147483648
    %v1267 = vmul.f32 %v1266, 1.442695
    %v1268 = vpow.pop %v1267
    %v1269 = vadd.f32 %v1268, 1.0
    %v1270 = vrcp.pop %v1269
    %v1271 = vmul.f32 1.0, %v1270
    %v1272 = vmul.f32 %v1264, %v1215
    %v1273 = vadd.f32 %v1257, %v1272
    %v1274 = vtanh.pop %v1273
    %v1275 = vstv %s1092
    %vm1276 = vcmp.gt.s32.totalorder %v217, %v1275
    %v1277 = vsel %vm1276, 1, 0
    %1278 = vset.pattern.permute.xlu0 0
    %1279 = vperm.xlu0 %1278, %v1277
    %v1280 = vpop.permute.xlu0 %1279
    %vm1281 = vcmp.eq.s32.totalorder %v1280, 1
    %v1282 = vsel %vm1281, %v1271, 1.0
    %v1283 = vsub.f32 %v1085, %v1274
    %v1284 = vmul.f32 %v1282, %v1283
    %v1285 = vadd.f32 %v1274, %v1284
    %v1286 = vsel %vm1281, %v1285, 0.0
    %s1287 = scalar_lea.vmem %s5, 24
    %1288 = vst [vmem:[%s1287] sm:$0xff] %v1251
    %s1289 = scalar_lea.vmem %s158, 32
    %1290 = vst [vmem:[%s1289] sm:$0xff] %v1286
    %s1291 = sadd.s32 %s218, 4
    %s1292 = sadd.s32 %s220, 3
    %v1293 = vpack.c.bf16 %v1285, %v1250
    %1294 = vmatprep.subr.bf16.mxu0 %v401
    %1295 = vmatpush1.bf16.msra.mxu0 %v400
    %1296 = vmatprep.subr.bf16.mxu0 %v407
    %1297 = vmatpush1.bf16.msra.mxu0 %v406
    %1298 = vmatprep.subr.bf16.mxu0 %v413
    %1299 = vmatpush1.bf16.msra.mxu0 %v412
    %1300 = vmatprep.subr.bf16.mxu0 %v419
    %1301 = vmatpush1.bf16.msra.mxu0 %v418
    %1302 = vmatprep.subr.bf16.mxu0 %v425
    %1303 = vmatpush1.bf16.msra.mxu0 %v424
    %1304 = vmatprep.subr.bf16.mxu0 %v431
    %1305 = vmatpush1.bf16.msra.mxu0 %v430
    %1306 = vmatprep.subr.bf16.mxu0 %v437
    %1307 = vmatpush1.bf16.msra.mxu0 %v436
    %1308 = vmatprep.subr.bf16.mxu0 %v443
    %1309 = vmatpush1.bf16.msra.mxu0 %v442
    %1310 = vmatprep.subr.bf16.mxu0 0
    %1311 = vmatpush1.bf16.msra.mxu0 0
    %1312 = vmatprep.subr.bf16.mxu0 0
    %1313 = vmatpush1.bf16.msra.mxu0 0
    %1314 = vmatprep.subr.bf16.mxu0 0
    %1315 = vmatpush1.bf16.msra.mxu0 0
    %1316 = vmatprep.subr.bf16.mxu0 0
    %1317 = vmatpush1.bf16.msra.mxu0 0
    %1318 = vmatprep.subr.bf16.mxu0 0
    %1319 = vmatpush1.bf16.msra.mxu0 0
    %1320 = vmatprep.subr.bf16.mxu0 0
    %1321 = vmatpush1.bf16.msra.mxu0 0
    %1322 = vmatprep.subr.bf16.mxu0 0
    %1323 = vmatpush1.bf16.msra.mxu0 0
    %1324 = vmatprep.subr.bf16.mxu0 0
    %1325 = vmatpush1.bf16.msra.mxu0 0
    %1326 = vmatprep.mubr.bf16.mxu0 0
    %1327 = vmatmul.mubr.bf16.gmra.mrb[0].mxu0 %v1293
    %v1328 = vpop.f32.mrb[0].mxu0
    %v1329 = vadd.f32 %v229, %v1328
    %v1330 = vpop.f32.mrb[0].mxu0
    %v1331 = vadd.f32 %v233, %v1330
    %v1332 = vpop.f32.mrb[0].mxu0
    %v1333 = vpop.f32.mrb[0].mxu0
    %1334 = vdwg.mxu0
    %1335 = vmatprep.subr.bf16.mxu0 %v403
    %1336 = vmatpush1.bf16.msra.mxu0 %v402
    %1337 = vmatprep.subr.bf16.mxu0 %v409
    %1338 = vmatpush1.bf16.msra.mxu0 %v408
    %1339 = vmatprep.subr.bf16.mxu0 %v415
    %1340 = vmatpush1.bf16.msra.mxu0 %v414
    %1341 = vmatprep.subr.bf16.mxu0 %v421
    %1342 = vmatpush1.bf16.msra.mxu0 %v420
    %1343 = vmatprep.subr.bf16.mxu0 %v427
    %1344 = vmatpush1.bf16.msra.mxu0 %v426
    %1345 = vmatprep.subr.bf16.mxu0 %v433
    %1346 = vmatpush1.bf16.msra.mxu0 %v432
    %1347 = vmatprep.subr.bf16.mxu0 %v439
    %1348 = vmatpush1.bf16.msra.mxu0 %v438
    %1349 = vmatprep.subr.bf16.mxu0 %v445
    %1350 = vmatpush1.bf16.msra.mxu0 %v444
    %1351 = vmatprep.subr.bf16.mxu0 0
    %1352 = vmatpush1.bf16.msra.mxu0 0
    %1353 = vmatprep.subr.bf16.mxu0 0
    %1354 = vmatpush1.bf16.msra.mxu0 0
    %1355 = vmatprep.subr.bf16.mxu0 0
    %1356 = vmatpush1.bf16.msra.mxu0 0
    %1357 = vmatprep.subr.bf16.mxu0 0
    %1358 = vmatpush1.bf16.msra.mxu0 0
    %1359 = vmatprep.subr.bf16.mxu0 0
    %1360 = vmatpush1.bf16.msra.mxu0 0
    %1361 = vmatprep.subr.bf16.mxu0 0
    %1362 = vmatpush1.bf16.msra.mxu0 0
    %1363 = vmatprep.subr.bf16.mxu0 0
    %1364 = vmatpush1.bf16.msra.mxu0 0
    %1365 = vmatprep.subr.bf16.mxu0 0
    %1366 = vmatpush1.bf16.msra.mxu0 0
    %1367 = vmatprep.mubr.bf16.mxu0 0
    %1368 = vmatmul.mubr.bf16.gmra.mrb[0].mxu0 %v1293
    %v1369 = vpop.f32.mrb[0].mxu0
    %v1370 = vadd.f32 %v237, %v1369
    %v1371 = vpop.f32.mrb[0].mxu0
    %v1372 = vpop.f32.mrb[0].mxu0
    %v1373 = vpop.f32.mrb[0].mxu0
    %v1374 = vadd.f32 %v241, %v1373
    %1375 = vdwg.mxu0
    %1376 = vmatprep.subr.bf16.mxu0 %v405
    %1377 = vmatpush1.bf16.msra.mxu0 %v404
    %1378 = vmatprep.subr.bf16.mxu0 %v411
    %1379 = vmatpush1.bf16.msra.mxu0 %v410
    %1380 = vmatprep.subr.bf16.mxu0 %v417
    %1381 = vmatpush1.bf16.msra.mxu0 %v416
    %1382 = vmatprep.subr.bf16.mxu0 %v423
    %1383 = vmatpush1.bf16.msra.mxu0 %v422
    %1384 = vmatprep.subr.bf16.mxu0 %v429
    %1385 = vmatpush1.bf16.msra.mxu0 %v428
    %1386 = vmatprep.subr.bf16.mxu0 %v435
    %1387 = vmatpush1.bf16.msra.mxu0 %v434
    %1388 = vmatprep.subr.bf16.mxu0 %v441
    %1389 = vmatpush1.bf16.msra.mxu0 %v440
    %1390 = vmatprep.subr.bf16.mxu0 %v447
    %1391 = vmatpush1.bf16.msra.mxu0 %v446
    %1392 = vmatprep.subr.bf16.mxu0 0
    %1393 = vmatpush1.bf16.msra.mxu0 0
    %1394 = vmatprep.subr.bf16.mxu0 0
    %1395 = vmatpush1.bf16.msra.mxu0 0
    %1396 = vmatprep.subr.bf16.mxu0 0
    %1397 = vmatpush1.bf16.msra.mxu0 0
    %1398 = vmatprep.subr.bf16.mxu0 0
    %1399 = vmatpush1.bf16.msra.mxu0 0
    %1400 = vmatprep.subr.bf16.mxu0 0
    %1401 = vmatpush1.bf16.msra.mxu0 0
    %1402 = vmatprep.subr.bf16.mxu0 0
    %1403 = vmatpush1.bf16.msra.mxu0 0
    %1404 = vmatprep.subr.bf16.mxu0 0
    %1405 = vmatpush1.bf16.msra.mxu0 0
    %1406 = vmatprep.subr.bf16.mxu0 0
    %1407 = vmatpush1.bf16.msra.mxu0 0
    %1408 = vmatprep.mubr.bf16.mxu0 0
    %1409 = vmatmul.mubr.bf16.gmra.mrb[0].mxu0 %v1293
    %v1410 = vpop.f32.mrb[0].mxu0
    %v1411 = vpop.f32.mrb[0].mxu0
    %v1412 = vpop.f32.mrb[0].mxu0
    %v1413 = vadd.f32 %v245, %v1412
    %v1414 = vpop.f32.mrb[0].mxu0
    %v1415 = vadd.f32 %v249, %v1414
    %1416 = vdwg.mxu0
    %s1417 = scalar_lea.vmem [#allocation3], 48
    %v1418 = vld [vmem:[%s1417] sm:$0xff]
    %v1419 = vld [vmem:[%s1417 + $0x8] sm:$0xf]
    %v1420 = vunpack.c.l.bf16 %v1418
    %v1421 = vunpack.c.h.bf16 %v1418
    %v1422 = vunpack.c.l.bf16 %v1419
    %v1423 = vadd.f32 %v1420, %v1329
    %v1424 = vxor.u32 %v1423, 2147483648
    %v1425 = vmul.f32 %v1424, 1.442695
    %v1426 = vpow.pop %v1425
    %v1427 = vadd.f32 %v1426, 1.0
    %v1428 = vrcp.pop %v1427
    %v1429 = vmul.f32 1.0, %v1428
    %v1430 = vadd.f32 %v1421, %v1331
    %v1431 = vxor.u32 %v1430, 2147483648
    %v1432 = vmul.f32 %v1431, 1.442695
    %v1433 = vpow.pop %v1432
    %v1434 = vadd.f32 %v1433, 1.0
    %v1435 = vrcp.pop %v1434
    %v1436 = vmul.f32 1.0, %v1435
    %v1437 = vmul.f32 %v1429, %v1370
    %v1438 = vadd.f32 %v1422, %v1437
    %v1439 = vtanh.pop %v1438
    %v1440 = vstv %s1291
    %vm1441 = vcmp.gt.s32.totalorder %v217, %v1440
    %v1442 = vsel %vm1441, 1, 0
    %1443 = vset.pattern.permute.xlu0 0
    %1444 = vperm.xlu0 %1443, %v1442
    %v1445 = vpop.permute.xlu0 %1444
    %vm1446 = vcmp.eq.s32.totalorder %v1445, 1
    %v1447 = vsel %vm1446, %v1436, 1.0
    %v1448 = vsub.f32 %v1250, %v1439
    %v1449 = vmul.f32 %v1447, %v1448
    %v1450 = vadd.f32 %v1439, %v1449
    %v1451 = vsel %vm1446, %v1450, 0.0
    %s1452 = scalar_lea.vmem [#allocation4], 36
    %v1453 = vld [vmem:[%s1452] sm:$0xff]
    %v1454 = vld [vmem:[%s1452 + $0x8] sm:$0xf]
    %v1455 = vunpack.c.l.bf16 %v1453
    %v1456 = vunpack.c.h.bf16 %v1453
    %v1457 = vunpack.c.l.bf16 %v1454
    %v1458 = vadd.f32 %v1455, %v1374
    %v1459 = vxor.u32 %v1458, 2147483648
    %v1460 = vmul.f32 %v1459, 1.442695
    %v1461 = vpow.pop %v1460
    %v1462 = vadd.f32 %v1461, 1.0
    %v1463 = vrcp.pop %v1462
    %v1464 = vmul.f32 1.0, %v1463
    %v1465 = vadd.f32 %v1456, %v1413
    %v1466 = vxor.u32 %v1465, 2147483648
    %v1467 = vmul.f32 %v1466, 1.442695
    %v1468 = vpow.pop %v1467
    %v1469 = vadd.f32 %v1468, 1.0
    %v1470 = vrcp.pop %v1469
    %v1471 = vmul.f32 1.0, %v1470
    %v1472 = vmul.f32 %v1464, %v1415
    %v1473 = vadd.f32 %v1457, %v1472
    %v1474 = vtanh.pop %v1473
    %v1475 = vstv %s1292
    %vm1476 = vcmp.gt.s32.totalorder %v217, %v1475
    %v1477 = vsel %vm1476, 1, 0
    %1478 = vset.pattern.permute.xlu0 0
    %1479 = vperm.xlu0 %1478, %v1477
    %v1480 = vpop.permute.xlu0 %1479
    %vm1481 = vcmp.eq.s32.totalorder %v1480, 1
    %v1482 = vsel %vm1481, %v1471, 1.0
    %v1483 = vsub.f32 %v1285, %v1474
    %v1484 = vmul.f32 %v1482, %v1483
    %v1485 = vadd.f32 %v1474, %v1484
    %v1486 = vsel %vm1481, %v1485, 0.0
    %s1487 = scalar_lea.vmem %s5, 32
    %1488 = vst [vmem:[%s1487] sm:$0xff] %v1451
    %s1489 = scalar_lea.vmem %s158, 24
    %1490 = vst [vmem:[%s1489] sm:$0xff] %v1486
    %s1491 = sadd.s32 %s218, 5
    %s1492 = sadd.s32 %s220, 2
    %v1493 = vpack.c.bf16 %v1485, %v1450
    %1494 = vmatprep.subr.bf16.mxu0 %v401
    %1495 = vmatpush1.bf16.msra.mxu0 %v400
    %1496 = vmatprep.subr.bf16.mxu0 %v407
    %1497 = vmatpush1.bf16.msra.mxu0 %v406
    %1498 = vmatprep.subr.bf16.mxu0 %v413
    %1499 = vmatpush1.bf16.msra.mxu0 %v412
    %1500 = vmatprep.subr.bf16.mxu0 %v419
    %1501 = vmatpush1.bf16.msra.mxu0 %v418
    %1502 = vmatprep.subr.bf16.mxu0 %v425
    %1503 = vmatpush1.bf16.msra.mxu0 %v424
    %1504 = vmatprep.subr.bf16.mxu0 %v431
    %1505 = vmatpush1.bf16.msra.mxu0 %v430
    %1506 = vmatprep.subr.bf16.mxu0 %v437
    %1507 = vmatpush1.bf16.msra.mxu0 %v436
    %1508 = vmatprep.subr.bf16.mxu0 %v443
    %1509 = vmatpush1.bf16.msra.mxu0 %v442
    %1510 = vmatprep.subr.bf16.mxu0 0
    %1511 = vmatpush1.bf16.msra.mxu0 0
    %1512 = vmatprep.subr.bf16.mxu0 0
    %1513 = vmatpush1.bf16.msra.mxu0 0
    %1514 = vmatprep.subr.bf16.mxu0 0
    %1515 = vmatpush1.bf16.msra.mxu0 0
    %1516 = vmatprep.subr.bf16.mxu0 0
    %1517 = vmatpush1.bf16.msra.mxu0 0
    %1518 = vmatprep.subr.bf16.mxu0 0
    %1519 = vmatpush1.bf16.msra.mxu0 0
    %1520 = vmatprep.subr.bf16.mxu0 0
    %1521 = vmatpush1.bf16.msra.mxu0 0
    %1522 = vmatprep.subr.bf16.mxu0 0
    %1523 = vmatpush1.bf16.msra.mxu0 0
    %1524 = vmatprep.subr.bf16.mxu0 0
    %1525 = vmatpush1.bf16.msra.mxu0 0
    %1526 = vmatprep.mubr.bf16.mxu0 0
    %1527 = vmatmul.mubr.bf16.gmra.mrb[0].mxu0 %v1493
    %v1528 = vpop.f32.mrb[0].mxu0
    %v1529 = vadd.f32 %v229, %v1528
    %v1530 = vpop.f32.mrb[0].mxu0
    %v1531 = vadd.f32 %v233, %v1530
    %v1532 = vpop.f32.mrb[0].mxu0
    %v1533 = vpop.f32.mrb[0].mxu0
    %1534 = vdwg.mxu0
    %1535 = vmatprep.subr.bf16.mxu0 %v403
    %1536 = vmatpush1.bf16.msra.mxu0 %v402
    %1537 = vmatprep.subr.bf16.mxu0 %v409
    %1538 = vmatpush1.bf16.msra.mxu0 %v408
    %1539 = vmatprep.subr.bf16.mxu0 %v415
    %1540 = vmatpush1.bf16.msra.mxu0 %v414
    %1541 = vmatprep.subr.bf16.mxu0 %v421
    %1542 = vmatpush1.bf16.msra.mxu0 %v420
    %1543 = vmatprep.subr.bf16.mxu0 %v427
    %1544 = vmatpush1.bf16.msra.mxu0 %v426
    %1545 = vmatprep.subr.bf16.mxu0 %v433
    %1546 = vmatpush1.bf16.msra.mxu0 %v432
    %1547 = vmatprep.subr.bf16.mxu0 %v439
    %1548 = vmatpush1.bf16.msra.mxu0 %v438
    %1549 = vmatprep.subr.bf16.mxu0 %v445
    %1550 = vmatpush1.bf16.msra.mxu0 %v444
    %1551 = vmatprep.subr.bf16.mxu0 0
    %1552 = vmatpush1.bf16.msra.mxu0 0
    %1553 = vmatprep.subr.bf16.mxu0 0
    %1554 = vmatpush1.bf16.msra.mxu0 0
    %1555 = vmatprep.subr.bf16.mxu0 0
    %1556 = vmatpush1.bf16.msra.mxu0 0
    %1557 = vmatprep.subr.bf16.mxu0 0
    %1558 = vmatpush1.bf16.msra.mxu0 0
    %1559 = vmatprep.subr.bf16.mxu0 0
    %1560 = vmatpush1.bf16.msra.mxu0 0
    %1561 = vmatprep.subr.bf16.mxu0 0
    %1562 = vmatpush1.bf16.msra.mxu0 0
    %1563 = vmatprep.subr.bf16.mxu0 0
    %1564 = vmatpush1.bf16.msra.mxu0 0
    %1565 = vmatprep.subr.bf16.mxu0 0
    %1566 = vmatpush1.bf16.msra.mxu0 0
    %1567 = vmatprep.mubr.bf16.mxu0 0
    %1568 = vmatmul.mubr.bf16.gmra.mrb[0].mxu0 %v1493
    %v1569 = vpop.f32.mrb[0].mxu0
    %v1570 = vadd.f32 %v237, %v1569
    %v1571 = vpop.f32.mrb[0].mxu0
    %v1572 = vpop.f32.mrb[0].mxu0
    %v1573 = vpop.f32.mrb[0].mxu0
    %v1574 = vadd.f32 %v241, %v1573
    %1575 = vdwg.mxu0
    %1576 = vmatprep.subr.bf16.mxu0 %v405
    %1577 = vmatpush1.bf16.msra.mxu0 %v404
    %1578 = vmatprep.subr.bf16.mxu0 %v411
    %1579 = vmatpush1.bf16.msra.mxu0 %v410
    %1580 = vmatprep.subr.bf16.mxu0 %v417
    %1581 = vmatpush1.bf16.msra.mxu0 %v416
    %1582 = vmatprep.subr.bf16.mxu0 %v423
    %1583 = vmatpush1.bf16.msra.mxu0 %v422
    %1584 = vmatprep.subr.bf16.mxu0 %v429
    %1585 = vmatpush1.bf16.msra.mxu0 %v428
    %1586 = vmatprep.subr.bf16.mxu0 %v435
    %1587 = vmatpush1.bf16.msra.mxu0 %v434
    %1588 = vmatprep.subr.bf16.mxu0 %v441
    %1589 = vmatpush1.bf16.msra.mxu0 %v440
    %1590 = vmatprep.subr.bf16.mxu0 %v447
    %1591 = vmatpush1.bf16.msra.mxu0 %v446
    %1592 = vmatprep.subr.bf16.mxu0 0
    %1593 = vmatpush1.bf16.msra.mxu0 0
    %1594 = vmatprep.subr.bf16.mxu0 0
    %1595 = vmatpush1.bf16.msra.mxu0 0
    %1596 = vmatprep.subr.bf16.mxu0 0
    %1597 = vmatpush1.bf16.msra.mxu0 0
    %1598 = vmatprep.subr.bf16.mxu0 0
    %1599 = vmatpush1.bf16.msra.mxu0 0
    %1600 = vmatprep.subr.bf16.mxu0 0
    %1601 = vmatpush1.bf16.msra.mxu0 0
    %1602 = vmatprep.subr.bf16.mxu0 0
    %1603 = vmatpush1.bf16.msra.mxu0 0
    %1604 = vmatprep.subr.bf16.mxu0 0
    %1605 = vmatpush1.bf16.msra.mxu0 0
    %1606 = vmatprep.subr.bf16.mxu0 0
    %1607 = vmatpush1.bf16.msra.mxu0 0
    %1608 = vmatprep.mubr.bf16.mxu0 0
    %1609 = vmatmul.mubr.bf16.gmra.mrb[0].mxu0 %v1493
    %v1610 = vpop.f32.mrb[0].mxu0
    %v1611 = vpop.f32.mrb[0].mxu0
    %v1612 = vpop.f32.mrb[0].mxu0
    %v1613 = vadd.f32 %v245, %v1612
    %v1614 = vpop.f32.mrb[0].mxu0
    %v1615 = vadd.f32 %v249, %v1614
    %1616 = vdwg.mxu0
    %s1617 = scalar_lea.vmem [#allocation3], 60
    %v1618 = vld [vmem:[%s1617] sm:$0xff]
    %v1619 = vld [vmem:[%s1617 + $0x8] sm:$0xf]
    %v1620 = vunpack.c.l.bf16 %v1618
    %v1621 = vunpack.c.h.bf16 %v1618
    %v1622 = vunpack.c.l.bf16 %v1619
    %v1623 = vadd.f32 %v1620, %v1529
    %v1624 = vxor.u32 %v1623, 2147483648
    %v1625 = vmul.f32 %v1624, 1.442695
    %v1626 = vpow.pop %v1625
    %v1627 = vadd.f32 %v1626, 1.0
    %v1628 = vrcp.pop %v1627
    %v1629 = vmul.f32 1.0, %v1628
    %v1630 = vadd.f32 %v1621, %v1531
    %v1631 = vxor.u32 %v1630, 2147483648
    %v1632 = vmul.f32 %v1631, 1.442695
    %v1633 = vpow.pop %v1632
    %v1634 = vadd.f32 %v1633, 1.0
    %v1635 = vrcp.pop %v1634
    %v1636 = vmul.f32 1.0, %v1635
    %v1637 = vmul.f32 %v1629, %v1570
    %v1638 = vadd.f32 %v1622, %v1637
    %v1639 = vtanh.pop %v1638
    %v1640 = vstv %s1491
    %vm1641 = vcmp.gt.s32.totalorder %v217, %v1640
    %v1642 = vsel %vm1641, 1, 0
    %1643 = vset.pattern.permute.xlu0 0
    %1644 = vperm.xlu0 %1643, %v1642
    %v1645 = vpop.permute.xlu0 %1644
    %vm1646 = vcmp.eq.s32.totalorder %v1645, 1
    %v1647 = vsel %vm1646, %v1636, 1.0
    %v1648 = vsub.f32 %v1450, %v1639
    %v1649 = vmul.f32 %v1647, %v1648
    %v1650 = vadd.f32 %v1639, %v1649
    %v1651 = vsel %vm1646, %v1650, 0.0
    %s1652 = scalar_lea.vmem [#allocation4], 24
    %v1653 = vld [vmem:[%s1652] sm:$0xff]
    %v1654 = vld [vmem:[%s1652 + $0x8] sm:$0xf]
    %v1655 = vunpack.c.l.bf16 %v1653
    %v1656 = vunpack.c.h.bf16 %v1653
    %v1657 = vunpack.c.l.bf16 %v1654
    %v1658 = vadd.f32 %v1655, %v1574
    %v1659 = vxor.u32 %v1658, 2147483648
    %v1660 = vmul.f32 %v1659, 1.442695
    %v1661 = vpow.pop %v1660
    %v1662 = vadd.f32 %v1661, 1.0
    %v1663 = vrcp.pop %v1662
    %v1664 = vmul.f32 1.0, %v1663
    %v1665 = vadd.f32 %v1656, %v1613
    %v1666 = vxor.u32 %v1665, 2147483648
    %v1667 = vmul.f32 %v1666, 1.442695
    %v1668 = vpow.pop %v1667
    %v1669 = vadd.f32 %v1668, 1.0
    %v1670 = vrcp.pop %v1669
    %v1671 = vmul.f32 1.0, %v1670
    %v1672 = vmul.f32 %v1664, %v1615
    %v1673 = vadd.f32 %v1657, %v1672
    %v1674 = vtanh.pop %v1673
    %v1675 = vstv %s1492
    %vm1676 = vcmp.gt.s32.totalorder %v217, %v1675
    %v1677 = vsel %vm1676, 1, 0
    %1678 = vset.pattern.permute.xlu0 0
    %1679 = vperm.xlu0 %1678, %v1677
    %v1680 = vpop.permute.xlu0 %1679
    %vm1681 = vcmp.eq.s32.totalorder %v1680, 1
    %v1682 = vsel %vm1681, %v1671, 1.0
    %v1683 = vsub.f32 %v1485, %v1674
    %v1684 = vmul.f32 %v1682, %v1683
    %v1685 = vadd.f32 %v1674, %v1684
    %v1686 = vsel %vm1681, %v1685, 0.0
    %s1687 = scalar_lea.vmem %s5, 40
    %1688 = vst [vmem:[%s1687] sm:$0xff] %v1651
    %s1689 = scalar_lea.vmem %s158, 16
    %1690 = vst [vmem:[%s1689] sm:$0xff] %v1686
    %s1691 = sadd.s32 %s218, 6
    %s1692 = sadd.s32 %s220, 1
    %v1693 = vpack.c.bf16 %v1685, %v1650
    %1694 = vmatprep.subr.bf16.mxu0 %v401
    %1695 = vmatpush1.bf16.msra.mxu0 %v400
    %1696 = vmatprep.subr.bf16.mxu0 %v407
    %1697 = vmatpush1.bf16.msra.mxu0 %v406
    %1698 = vmatprep.subr.bf16.mxu0 %v413
    %1699 = vmatpush1.bf16.msra.mxu0 %v412
    %1700 = vmatprep.subr.bf16.mxu0 %v419
    %1701 = vmatpush1.bf16.msra.mxu0 %v418
    %1702 = vmatprep.subr.bf16.mxu0 %v425
    %1703 = vmatpush1.bf16.msra.mxu0 %v424
    %1704 = vmatprep.subr.bf16.mxu0 %v431
    %1705 = vmatpush1.bf16.msra.mxu0 %v430
    %1706 = vmatprep.subr.bf16.mxu0 %v437
    %1707 = vmatpush1.bf16.msra.mxu0 %v436
    %1708 = vmatprep.subr.bf16.mxu0 %v443
    %1709 = vmatpush1.bf16.msra.mxu0 %v442
    %1710 = vmatprep.subr.bf16.mxu0 0
    %1711 = vmatpush1.bf16.msra.mxu0 0
    %1712 = vmatprep.subr.bf16.mxu0 0
    %1713 = vmatpush1.bf16.msra.mxu0 0
    %1714 = vmatprep.subr.bf16.mxu0 0
    %1715 = vmatpush1.bf16.msra.mxu0 0
    %1716 = vmatprep.subr.bf16.mxu0 0
    %1717 = vmatpush1.bf16.msra.mxu0 0
    %1718 = vmatprep.subr.bf16.mxu0 0
    %1719 = vmatpush1.bf16.msra.mxu0 0
    %1720 = vmatprep.subr.bf16.mxu0 0
    %1721 = vmatpush1.bf16.msra.mxu0 0
    %1722 = vmatprep.subr.bf16.mxu0 0
    %1723 = vmatpush1.bf16.msra.mxu0 0
    %1724 = vmatprep.subr.bf16.mxu0 0
    %1725 = vmatpush1.bf16.msra.mxu0 0
    %1726 = vmatprep.mubr.bf16.mxu0 0
    %1727 = vmatmul.mubr.bf16.gmra.mrb[0].mxu0 %v1693
    %v1728 = vpop.f32.mrb[0].mxu0
    %v1729 = vadd.f32 %v229, %v1728
    %v1730 = vpop.f32.mrb[0].mxu0
    %v1731 = vadd.f32 %v233, %v1730
    %v1732 = vpop.f32.mrb[0].mxu0
    %v1733 = vpop.f32.mrb[0].mxu0
    %1734 = vdwg.mxu0
    %1735 = vmatprep.subr.bf16.mxu0 %v403
    %1736 = vmatpush1.bf16.msra.mxu0 %v402
    %1737 = vmatprep.subr.bf16.mxu0 %v409
    %1738 = vmatpush1.bf16.msra.mxu0 %v408
    %1739 = vmatprep.subr.bf16.mxu0 %v415
    %1740 = vmatpush1.bf16.msra.mxu0 %v414
    %1741 = vmatprep.subr.bf16.mxu0 %v421
    %1742 = vmatpush1.bf16.msra.mxu0 %v420
    %1743 = vmatprep.subr.bf16.mxu0 %v427
    %1744 = vmatpush1.bf16.msra.mxu0 %v426
    %1745 = vmatprep.subr.bf16.mxu0 %v433
    %1746 = vmatpush1.bf16.msra.mxu0 %v432
    %1747 = vmatprep.subr.bf16.mxu0 %v439
    %1748 = vmatpush1.bf16.msra.mxu0 %v438
    %1749 = vmatprep.subr.bf16.mxu0 %v445
    %1750 = vmatpush1.bf16.msra.mxu0 %v444
    %1751 = vmatprep.subr.bf16.mxu0 0
    %1752 = vmatpush1.bf16.msra.mxu0 0
    %1753 = vmatprep.subr.bf16.mxu0 0
    %1754 = vmatpush1.bf16.msra.mxu0 0
    %1755 = vmatprep.subr.bf16.mxu0 0
    %1756 = vmatpush1.bf16.msra.mxu0 0
    %1757 = vmatprep.subr.bf16.mxu0 0
    %1758 = vmatpush1.bf16.msra.mxu0 0
    %1759 = vmatprep.subr.bf16.mxu0 0
    %1760 = vmatpush1.bf16.msra.mxu0 0
    %1761 = vmatprep.subr.bf16.mxu0 0
    %1762 = vmatpush1.bf16.msra.mxu0 0
    %1763 = vmatprep.subr.bf16.mxu0 0
    %1764 = vmatpush1.bf16.msra.mxu0 0
    %1765 = vmatprep.subr.bf16.mxu0 0
    %1766 = vmatpush1.bf16.msra.mxu0 0
    %1767 = vmatprep.mubr.bf16.mxu0 0
    %1768 = vmatmul.mubr.bf16.gmra.mrb[0].mxu0 %v1693
    %v1769 = vpop.f32.mrb[0].mxu0
    %v1770 = vadd.f32 %v237, %v1769
    %v1771 = vpop.f32.mrb[0].mxu0
    %v1772 = vpop.f32.mrb[0].mxu0
    %v1773 = vpop.f32.mrb[0].mxu0
    %v1774 = vadd.f32 %v241, %v1773
    %1775 = vdwg.mxu0
    %1776 = vmatprep.subr.bf16.mxu0 %v405
    %1777 = vmatpush1.bf16.msra.mxu0 %v404
    %1778 = vmatprep.subr.bf16.mxu0 %v411
    %1779 = vmatpush1.bf16.msra.mxu0 %v410
    %1780 = vmatprep.subr.bf16.mxu0 %v417
    %1781 = vmatpush1.bf16.msra.mxu0 %v416
    %1782 = vmatprep.subr.bf16.mxu0 %v423
    %1783 = vmatpush1.bf16.msra.mxu0 %v422
    %1784 = vmatprep.subr.bf16.mxu0 %v429
    %1785 = vmatpush1.bf16.msra.mxu0 %v428
    %1786 = vmatprep.subr.bf16.mxu0 %v435
    %1787 = vmatpush1.bf16.msra.mxu0 %v434
    %1788 = vmatprep.subr.bf16.mxu0 %v441
    %1789 = vmatpush1.bf16.msra.mxu0 %v440
    %1790 = vmatprep.subr.bf16.mxu0 %v447
    %1791 = vmatpush1.bf16.msra.mxu0 %v446
    %1792 = vmatprep.subr.bf16.mxu0 0
    %1793 = vmatpush1.bf16.msra.mxu0 0
    %1794 = vmatprep.subr.bf16.mxu0 0
    %1795 = vmatpush1.bf16.msra.mxu0 0
    %1796 = vmatprep.subr.bf16.mxu0 0
    %1797 = vmatpush1.bf16.msra.mxu0 0
    %1798 = vmatprep.subr.bf16.mxu0 0
    %1799 = vmatpush1.bf16.msra.mxu0 0
    %1800 = vmatprep.subr.bf16.mxu0 0
    %1801 = vmatpush1.bf16.msra.mxu0 0
    %1802 = vmatprep.subr.bf16.mxu0 0
    %1803 = vmatpush1.bf16.msra.mxu0 0
    %1804 = vmatprep.subr.bf16.mxu0 0
    %1805 = vmatpush1.bf16.msra.mxu0 0
    %1806 = vmatprep.subr.bf16.mxu0 0
    %1807 = vmatpush1.bf16.msra.mxu0 0
    %1808 = vmatprep.mubr.bf16.mxu0 0
    %1809 = vmatmul.mubr.bf16.gmra.mrb[0].mxu0 %v1693
    %v1810 = vpop.f32.mrb[0].mxu0
    %v1811 = vpop.f32.mrb[0].mxu0
    %v1812 = vpop.f32.mrb[0].mxu0
    %v1813 = vadd.f32 %v245, %v1812
    %v1814 = vpop.f32.mrb[0].mxu0
    %v1815 = vadd.f32 %v249, %v1814
    %1816 = vdwg.mxu0
    %s1817 = scalar_lea.vmem [#allocation3], 72
    %v1818 = vld [vmem:[%s1817] sm:$0xff]
    %v1819 = vld [vmem:[%s1817 + $0x8] sm:$0xf]
    %v1820 = vunpack.c.l.bf16 %v1818
    %v1821 = vunpack.c.h.bf16 %v1818
    %v1822 = vunpack.c.l.bf16 %v1819
    %v1823 = vadd.f32 %v1820, %v1729
    %v1824 = vxor.u32 %v1823, 2147483648
    %v1825 = vmul.f32 %v1824, 1.442695
    %v1826 = vpow.pop %v1825
    %v1827 = vadd.f32 %v1826, 1.0
    %v1828 = vrcp.pop %v1827
    %v1829 = vmul.f32 1.0, %v1828
    %v1830 = vadd.f32 %v1821, %v1731
    %v1831 = vxor.u32 %v1830, 2147483648
    %v1832 = vmul.f32 %v1831, 1.442695
    %v1833 = vpow.pop %v1832
    %v1834 = vadd.f32 %v1833, 1.0
    %v1835 = vrcp.pop %v1834
    %v1836 = vmul.f32 1.0, %v1835
    %v1837 = vmul.f32 %v1829, %v1770
    %v1838 = vadd.f32 %v1822, %v1837
    %v1839 = vtanh.pop %v1838
    %v1840 = vstv %s1691
    %vm1841 = vcmp.gt.s32.totalorder %v217, %v1840
    %v1842 = vsel %vm1841, 1, 0
    %1843 = vset.pattern.permute.xlu0 0
    %1844 = vperm.xlu0 %1843, %v1842
    %v1845 = vpop.permute.xlu0 %1844
    %vm1846 = vcmp.eq.s32.totalorder %v1845, 1
    %v1847 = vsel %vm1846, %v1836, 1.0
    %v1848 = vsub.f32 %v1650, %v1839
    %v1849 = vmul.f32 %v1847, %v1848
    %v1850 = vadd.f32 %v1839, %v1849
    %v1851 = vsel %vm1846, %v1850, 0.0
    %s1852 = scalar_lea.vmem [#allocation4], 12
    %v1853 = vld [vmem:[%s1852] sm:$0xff]
    %v1854 = vld [vmem:[%s1852 + $0x8] sm:$0xf]
    %v1855 = vunpack.c.l.bf16 %v1853
    %v1856 = vunpack.c.h.bf16 %v1853
    %v1857 = vunpack.c.l.bf16 %v1854
    %v1858 = vadd.f32 %v1855, %v1774
    %v1859 = vxor.u32 %v1858, 2147483648
    %v1860 = vmul.f32 %v1859, 1.442695
    %v1861 = vpow.pop %v1860
    %v1862 = vadd.f32 %v1861, 1.0
    %v1863 = vrcp.pop %v1862
    %v1864 = vmul.f32 1.0, %v1863
    %v1865 = vadd.f32 %v1856, %v1813
    %v1866 = vxor.u32 %v1865, 2147483648
    %v1867 = vmul.f32 %v1866, 1.442695
    %v1868 = vpow.pop %v1867
    %v1869 = vadd.f32 %v1868, 1.0
    %v1870 = vrcp.pop %v1869
    %v1871 = vmul.f32 1.0, %v1870
    %v1872 = vmul.f32 %v1864, %v1815
    %v1873 = vadd.f32 %v1857, %v1872
    %v1874 = vtanh.pop %v1873
    %v1875 = vstv %s1692
    %vm1876 = vcmp.gt.s32.totalorder %v217, %v1875
    %v1877 = vsel %vm1876, 1, 0
    %1878 = vset.pattern.permute.xlu0 0
    %1879 = vperm.xlu0 %1878, %v1877
    %v1880 = vpop.permute.xlu0 %1879
    %vm1881 = vcmp.eq.s32.totalorder %v1880, 1
    %v1882 = vsel %vm1881, %v1871, 1.0
    %v1883 = vsub.f32 %v1685, %v1874
    %v1884 = vmul.f32 %v1882, %v1883
    %v1885 = vadd.f32 %v1874, %v1884
    %v1886 = vsel %vm1881, %v1885, 0.0
    %s1887 = scalar_lea.vmem %s5, 48
    %1888 = vst [vmem:[%s1887] sm:$0xff] %v1851
    %s1889 = scalar_lea.vmem %s158, 8
    %1890 = vst [vmem:[%s1889] sm:$0xff] %v1886
    %s1891 = sadd.s32 %s218, 7
    %v1892 = vpack.c.bf16 %v1885, %v1850
    %1893 = vmatprep.subr.bf16.mxu0 %v401
    %1894 = vmatpush1.bf16.msra.mxu0 %v400
    %1895 = vmatprep.subr.bf16.mxu0 %v407
    %1896 = vmatpush1.bf16.msra.mxu0 %v406
    %1897 = vmatprep.subr.bf16.mxu0 %v413
    %1898 = vmatpush1.bf16.msra.mxu0 %v412
    %1899 = vmatprep.subr.bf16.mxu0 %v419
    %1900 = vmatpush1.bf16.msra.mxu0 %v418
    %1901 = vmatprep.subr.bf16.mxu0 %v425
    %1902 = vmatpush1.bf16.msra.mxu0 %v424
    %1903 = vmatprep.subr.bf16.mxu0 %v431
    %1904 = vmatpush1.bf16.msra.mxu0 %v430
    %1905 = vmatprep.subr.bf16.mxu0 %v437
    %1906 = vmatpush1.bf16.msra.mxu0 %v436
    %1907 = vmatprep.subr.bf16.mxu0 %v443
    %1908 = vmatpush1.bf16.msra.mxu0 %v442
    %1909 = vmatprep.subr.bf16.mxu0 0
    %1910 = vmatpush1.bf16.msra.mxu0 0
    %1911 = vmatprep.subr.bf16.mxu0 0
    %1912 = vmatpush1.bf16.msra.mxu0 0
    %1913 = vmatprep.subr.bf16.mxu0 0
    %1914 = vmatpush1.bf16.msra.mxu0 0
    %1915 = vmatprep.subr.bf16.mxu0 0
    %1916 = vmatpush1.bf16.msra.mxu0 0
    %1917 = vmatprep.subr.bf16.mxu0 0
    %1918 = vmatpush1.bf16.msra.mxu0 0
    %1919 = vmatprep.subr.bf16.mxu0 0
    %1920 = vmatpush1.bf16.msra.mxu0 0
    %1921 = vmatprep.subr.bf16.mxu0 0
    %1922 = vmatpush1.bf16.msra.mxu0 0
    %1923 = vmatprep.subr.bf16.mxu0 0
    %1924 = vmatpush1.bf16.msra.mxu0 0
    %1925 = vmatprep.mubr.bf16.mxu0 0
    %1926 = vmatmul.mubr.bf16.gmra.mrb[0].mxu0 %v1892
    %v1927 = vpop.f32.mrb[0].mxu0
    %v1928 = vadd.f32 %v229, %v1927
    %v1929 = vpop.f32.mrb[0].mxu0
    %v1930 = vadd.f32 %v233, %v1929
    %v1931 = vpop.f32.mrb[0].mxu0
    %v1932 = vpop.f32.mrb[0].mxu0
    %1933 = vdwg.mxu0
    %1934 = vmatprep.subr.bf16.mxu0 %v403
    %1935 = vmatpush1.bf16.msra.mxu0 %v402
    %1936 = vmatprep.subr.bf16.mxu0 %v409
    %1937 = vmatpush1.bf16.msra.mxu0 %v408
    %1938 = vmatprep.subr.bf16.mxu0 %v415
    %1939 = vmatpush1.bf16.msra.mxu0 %v414
    %1940 = vmatprep.subr.bf16.mxu0 %v421
    %1941 = vmatpush1.bf16.msra.mxu0 %v420
    %1942 = vmatprep.subr.bf16.mxu0 %v427
    %1943 = vmatpush1.bf16.msra.mxu0 %v426
    %1944 = vmatprep.subr.bf16.mxu0 %v433
    %1945 = vmatpush1.bf16.msra.mxu0 %v432
    %1946 = vmatprep.subr.bf16.mxu0 %v439
    %1947 = vmatpush1.bf16.msra.mxu0 %v438
    %1948 = vmatprep.subr.bf16.mxu0 %v445
    %1949 = vmatpush1.bf16.msra.mxu0 %v444
    %1950 = vmatprep.subr.bf16.mxu0 0
    %1951 = vmatpush1.bf16.msra.mxu0 0
    %1952 = vmatprep.subr.bf16.mxu0 0
    %1953 = vmatpush1.bf16.msra.mxu0 0
    %1954 = vmatprep.subr.bf16.mxu0 0
    %1955 = vmatpush1.bf16.msra.mxu0 0
    %1956 = vmatprep.subr.bf16.mxu0 0
    %1957 = vmatpush1.bf16.msra.mxu0 0
    %1958 = vmatprep.subr.bf16.mxu0 0
    %1959 = vmatpush1.bf16.msra.mxu0 0
    %1960 = vmatprep.subr.bf16.mxu0 0
    %1961 = vmatpush1.bf16.msra.mxu0 0
    %1962 = vmatprep.subr.bf16.mxu0 0
    %1963 = vmatpush1.bf16.msra.mxu0 0
    %1964 = vmatprep.subr.bf16.mxu0 0
    %1965 = vmatpush1.bf16.msra.mxu0 0
    %1966 = vmatprep.mubr.bf16.mxu0 0
    %1967 = vmatmul.mubr.bf16.gmra.mrb[0].mxu0 %v1892
    %v1968 = vpop.f32.mrb[0].mxu0
    %v1969 = vadd.f32 %v237, %v1968
    %v1970 = vpop.f32.mrb[0].mxu0
    %v1971 = vpop.f32.mrb[0].mxu0
    %v1972 = vpop.f32.mrb[0].mxu0
    %v1973 = vadd.f32 %v241, %v1972
    %1974 = vdwg.mxu0
    %1975 = vmatprep.subr.bf16.mxu0 %v405
    %1976 = vmatpush1.bf16.msra.mxu0 %v404
    %1977 = vmatprep.subr.bf16.mxu0 %v411
    %1978 = vmatpush1.bf16.msra.mxu0 %v410
    %1979 = vmatprep.subr.bf16.mxu0 %v417
    %1980 = vmatpush1.bf16.msra.mxu0 %v416
    %1981 = vmatprep.subr.bf16.mxu0 %v423
    %1982 = vmatpush1.bf16.msra.mxu0 %v422
    %1983 = vmatprep.subr.bf16.mxu0 %v429
    %1984 = vmatpush1.bf16.msra.mxu0 %v428
    %1985 = vmatprep.subr.bf16.mxu0 %v435
    %1986 = vmatpush1.bf16.msra.mxu0 %v434
    %1987 = vmatprep.subr.bf16.mxu0 %v441
    %1988 = vmatpush1.bf16.msra.mxu0 %v440
    %1989 = vmatprep.subr.bf16.mxu0 %v447
    %1990 = vmatpush1.bf16.msra.mxu0 %v446
    %1991 = vmatprep.subr.bf16.mxu0 0
    %1992 = vmatpush1.bf16.msra.mxu0 0
    %1993 = vmatprep.subr.bf16.mxu0 0
    %1994 = vmatpush1.bf16.msra.mxu0 0
    %1995 = vmatprep.subr.bf16.mxu0 0
    %1996 = vmatpush1.bf16.msra.mxu0 0
    %1997 = vmatprep.subr.bf16.mxu0 0
    %1998 = vmatpush1.bf16.msra.mxu0 0
    %1999 = vmatprep.subr.bf16.mxu0 0
    %2000 = vmatpush1.bf16.msra.mxu0 0
    %2001 = vmatprep.subr.bf16.mxu0 0
    %2002 = vmatpush1.bf16.msra.mxu0 0
    %2003 = vmatprep.subr.bf16.mxu0 0
    %2004 = vmatpush1.bf16.msra.mxu0 0
    %2005 = vmatprep.subr.bf16.mxu0 0
    %2006 = vmatpush1.bf16.msra.mxu0 0
    %2007 = vmatprep.mubr.bf16.mxu0 0
    %2008 = vmatmul.mubr.bf16.gmra.mrb[0].mxu0 %v1892
    %v2009 = vpop.f32.mrb[0].mxu0
    %v2010 = vpop.f32.mrb[0].mxu0
    %v2011 = vpop.f32.mrb[0].mxu0
    %v2012 = vadd.f32 %v245, %v2011
    %v2013 = vpop.f32.mrb[0].mxu0
    %v2014 = vadd.f32 %v249, %v2013
    %2015 = vdwg.mxu0
    %s2016 = scalar_lea.vmem [#allocation3], 84
    %v2017 = vld [vmem:[%s2016] sm:$0xff]
    %v2018 = vld [vmem:[%s2016 + $0x8] sm:$0xf]
    %v2019 = vunpack.c.l.bf16 %v2017
    %v2020 = vunpack.c.h.bf16 %v2017
    %v2021 = vunpack.c.l.bf16 %v2018
    %v2022 = vadd.f32 %v2019, %v1928
    %v2023 = vxor.u32 %v2022, 2147483648
    %v2024 = vmul.f32 %v2023, 1.442695
    %v2025 = vpow.pop %v2024
    %v2026 = vadd.f32 %v2025, 1.0
    %v2027 = vrcp.pop %v2026
    %v2028 = vmul.f32 1.0, %v2027
    %v2029 = vadd.f32 %v2020, %v1930
    %v2030 = vxor.u32 %v2029, 2147483648
    %v2031 = vmul.f32 %v2030, 1.442695
    %v2032 = vpow.pop %v2031
    %v2033 = vadd.f32 %v2032, 1.0
    %v2034 = vrcp.pop %v2033
    %v2035 = vmul.f32 1.0, %v2034
    %v2036 = vmul.f32 %v2028, %v1969
    %v2037 = vadd.f32 %v2021, %v2036
    %v2038 = vtanh.pop %v2037
    %v2039 = vstv %s1891
    %vm2040 = vcmp.gt.s32.totalorder %v217, %v2039
    %v2041 = vsel %vm2040, 1, 0
    %2042 = vset.pattern.permute.xlu0 0
    %2043 = vperm.xlu0 %2042, %v2041
    %v2044 = vpop.permute.xlu0 %2043
    %vm2045 = vcmp.eq.s32.totalorder %v2044, 1
    %v2046 = vsel %vm2045, %v2035, 1.0
    %v2047 = vsub.f32 %v1850, %v2038
    %v2048 = vmul.f32 %v2046, %v2047
    %v2049 = vadd.f32 %v2038, %v2048
    %v2050 = vsel %vm2045, %v2049, 0.0
    %v2051 = vld [vmem:[#allocation4] sm:$0xff]
    %v2052 = vld [vmem:[#allocation4 + $0x8] sm:$0xf]
    %v2053 = vunpack.c.l.bf16 %v2051
    %v2054 = vunpack.c.h.bf16 %v2051
    %v2055 = vunpack.c.l.bf16 %v2052
    %v2056 = vadd.f32 %v2053, %v1973
    %v2057 = vxor.u32 %v2056, 2147483648
    %v2058 = vmul.f32 %v2057, 1.442695
    %v2059 = vpow.pop %v2058
    %v2060 = vadd.f32 %v2059, 1.0
    %v2061 = vrcp.pop %v2060
    %v2062 = vmul.f32 1.0, %v2061
    %v2063 = vadd.f32 %v2054, %v2012
    %v2064 = vxor.u32 %v2063, 2147483648
    %v2065 = vmul.f32 %v2064, 1.442695
    %v2066 = vpow.pop %v2065
    %v2067 = vadd.f32 %v2066, 1.0
    %v2068 = vrcp.pop %v2067
    %v2069 = vmul.f32 1.0, %v2068
    %v2070 = vmul.f32 %v2062, %v2014
    %v2071 = vadd.f32 %v2055, %v2070
    %v2072 = vtanh.pop %v2071
    %v2073 = vstv %s220
    %vm2074 = vcmp.gt.s32.totalorder %v217, %v2073
    %v2075 = vsel %vm2074, 1, 0
    %2076 = vset.pattern.permute.xlu0 0
    %2077 = vperm.xlu0 %2076, %v2075
    %v2078 = vpop.permute.xlu0 %2077
    %vm2079 = vcmp.eq.s32.totalorder %v2078, 1
    %v2080 = vsel %vm2079, %v2069, 1.0
    %v2081 = vsub.f32 %v1885, %v2072
    %v2082 = vmul.f32 %v2080, %v2081
    %v2083 = vadd.f32 %v2072, %v2082
    %v2084 = vsel %vm2079, %v2083, 0.0
    %s2085 = scalar_lea.vmem %s5, 56
    %2086 = vst [vmem:[%s2085] sm:$0xff] %v2050
    %2087 = vst [vmem:[%s158] sm:$0xff] %v2084
    %2088 = vst [vmem:[#allocation2] sm:$0xff] %v2049
    %2089 = vst [vmem:[#allocation2 + $0x8] sm:$0xff] %v2083
    // Predicated region
    $region78: #{encoder_forward.1} parent=1 // pred_check
      %p2090 = pneg %p162
    $region79: #{encoder_forward.1} parent=1 // pred_check_branch
      %2092 = sbr.rel (%p2090) target = $region81
    $region80: #{encoder_forward.1} parent=1 // pred_region
      %2093 = vst [vmem:[%s7] sm:$0xff] %v2049
      %2094 = vst [vmem:[%s7 + $0x8] sm:$0xff] %v2083
    $region81: #{encoder_forward.1} parent=1 // pred_fallthru
      _
    %s2095 = ssub.s32 0, 0
    %s2096 = smul.u32 8, %s2095
    %p2097 = scmp.lt.s32.totalorder %s2096, 7
    %s2098 = scalar_select %p2097, %s2096, 7
    %s2099 = smul.addr %s2098, 8
    %s2100 = scalar_lea.vmem %s6, %s2099
    // Predicated region
    $region82: #{encoder_forward.1} parent=1 // pred_check
      _
    $region83: #{encoder_forward.1} parent=1 // pred_check_branch
      %2102 = sbr.rel (0) target = $region85
    $region84: #{encoder_forward.1} parent=1 // pred_region
      _
    $region85: #{encoder_forward.1} parent=1 // pred_fallthru
      _
    // Predicated region
    $region86: #{encoder_forward.1} parent=1 // pred_check
      _
    $region87: #{encoder_forward.1} parent=1 // pred_check_branch
      %2104 = sbr.rel (0) target = $region89
    $region88: #{encoder_forward.1} parent=1 // pred_region
      %s2105 = ssub.s32 0, 0
      %s2106 = smul.u32 8, %s2105
    $region89: #{encoder_forward.1} parent=1 // pred_fallthru
      _
    // Predicated region
    $region90: #{encoder_forward.1} parent=1 // pred_check
      _
    $region91: #{encoder_forward.1} parent=1 // pred_check_branch
      %2108 = sbr.rel (0) target = $region93
    $region92: #{encoder_forward.1} parent=1 // pred_region
      _
    $region93: #{encoder_forward.1} parent=1 // pred_fallthru
      _
    // Predicated region
    $region94: #{encoder_forward.1} parent=1 // pred_check
      _
    $region95: #{encoder_forward.1} parent=1 // pred_check_branch
      %2110 = sbr.rel (0) target = $region97
    $region96: #{encoder_forward.1} parent=1 // pred_region
      _
    $region97: #{encoder_forward.1} parent=1 // pred_fallthru
      _
    // Predicated region
    $region98: #{encoder_forward.1} parent=1 // pred_check
      _
    $region99: #{encoder_forward.1} parent=1 // pred_check_branch
      %2112 = sbr.rel (0) target = $region101
    $region100: #{encoder_forward.1} parent=1 // pred_region
      %s2113 = ssub.s32 0, 0
      %s2114 = smul.u32 8, %s2113
      %p2115 = scmp.lt.s32.totalorder %s2114, 7
      %s2116 = scalar_select %p2115, %s2114, 7
      %s2117 = smul.addr %s2116, 8
      %s2118 = scalar_lea.vmem %s6, %s2117
    $region101: #{encoder_forward.1} parent=1 // pred_fallthru
      _
    // Predicated region
    $region102: #{encoder_forward.1} parent=1 // pred_check
      _
    $region103: #{encoder_forward.1} parent=1 // pred_check_branch
      %2120 = sbr.rel (0) target = $region105
    $region104: #{encoder_forward.1} parent=1 // pred_region
      _
    $region105: #{encoder_forward.1} parent=1 // pred_fallthru
      _

</llo_original>
